<compile_context>
chip_gen: v7x
topology: tpu7x:2x2x1
jax: 0.10.0
libtpu: 0.0.40
codegen_flags: <defaults>
</compile_context>

<pallas_src>
import functools

import numpy as np
import jax
import jax.numpy as jnp
from jax.experimental import pallas as pl
from jax.experimental.pallas import tpu as pltpu


# ----------------------------- fused Pallas kernel ---------------------------

def _make_fused_kernel(num_layers):
    """Fused BiLSTM + GCN + aspect-pool kernel (single invocation, no grid).

    Inputs : embs [B,L,D], adj [B,L,L], mask [B,L,1], lens [B,1],
             wih [D,8H] (fwd|bwd, gate order i,f,g,o), whh [2H,8H] block-diag,
             bg [1,8H], then (W_l [.,hid], b_l [1,hid]) per GCN layer.
    Outputs: pred [B,L,hid], pooled [B,1,hid].
    Scratch: hf/hb [L,B,H] per-direction LSTM outputs (VMEM).
    """
    def kernel(embs_ref, adj_ref, mask_ref, len_ref,
               wih_ref, whh_ref, bg_ref, *rest):
        gcn_refs = rest[:2 * num_layers]
        pred_ref, pooled_ref, hf_ref, hb_ref = rest[2 * num_layers:]

        B, L, D = embs_ref.shape
        H8 = wih_ref.shape[1]
        H4 = H8 // 2
        H = H4 // 4

        # ------------------------------ BiLSTM -------------------------------
        # Input projection hoisted out of the recurrence: one big matmul for
        # both directions, bias folded in once.
        x2 = embs_ref[...].reshape(B * L, D)
        xg = jnp.dot(x2, wih_ref[...],
                     preferred_element_type=jnp.float32) + bg_ref[...]
        xg = xg.reshape(B, L, H8)

        whh = whh_ref[...]                  # [2H, 8H] block-diagonal (fwd|bwd)
        lens = len_ref[...]                 # [B, 1] true lengths (float)

        h_f = jnp.zeros((B, H), jnp.float32)
        c_f = jnp.zeros((B, H), jnp.float32)
        h_b = jnp.zeros((B, H), jnp.float32)
        c_b = jnp.zeros((B, H), jnp.float32)

        def cell(gates, c):
            # PyTorch gate order: i, f, g, o (small 32-lane slices; only inside
            # the short unrolled recurrence).
            i = jax.nn.sigmoid(gates[:, 0 * H:1 * H])
            f = jax.nn.sigmoid(gates[:, 1 * H:2 * H])
            g = jnp.tanh(gates[:, 2 * H:3 * H])
            o = jax.nn.sigmoid(gates[:, 3 * H:4 * H])
            c_new = f * c + i * g
            return o * jnp.tanh(c_new), c_new

        for s in range(L):                  # static unroll; L is small & static
            tb = L - 1 - s                  # backward direction reads time reversed
            rec = jnp.dot(jnp.concatenate([h_f, h_b], axis=1), whh,
                          preferred_element_type=jnp.float32)          # [B, 8H]
            hf_new, cf_new = cell(xg[:, s, 0:H4] + rec[:, 0:H4], c_f)
            hb_new, cb_new = cell(xg[:, tb, H4:H8] + rec[:, H4:H8], c_b)
            # pack_padded_sequence semantics: only valid positions update the
            # state; outputs at padded positions are zero.
            vf = (lens > float(s)).astype(jnp.float32)                  # [B, 1]
            vb = (lens > float(tb)).astype(jnp.float32)
            h_f = vf * hf_new + (1.0 - vf) * h_f
            c_f = vf * cf_new + (1.0 - vf) * c_f
            h_b = vb * hb_new + (1.0 - vb) * h_b
            c_b = vb * cb_new + (1.0 - vb) * c_b
            hf_ref[s] = h_f * vf            # per-step store (no append/concat)
            hb_ref[tb] = h_b * vb

        # ------------------- GCN layers + aspect pool (in VMEM) --------------
        rnn = jnp.concatenate([hf_ref[...], hb_ref[...]], axis=-1)      # [L, B, 2H]
        adj = adj_ref[...]
        mask = mask_ref[...]
        for b in range(B):                  # static unroll over the tiny batch
            x_b = rnn[:, b, :]                                          # [L, 2H]
            adj_b = adj[b]                                              # [L, L]
            # adj row-sum reciprocal: computed once (EUP) and reused per layer.
            inv_denom = pl.reciprocal(
                jnp.sum(adj_b, axis=1, keepdims=True) + 1.0, approx=True)  # [L,1]
            for l in range(num_layers):
                w = gcn_refs[2 * l][...]
                bias = gcn_refs[2 * l + 1][...]
                xw = jnp.dot(x_b, w, preferred_element_type=jnp.float32)   # [L,hid]
                axw = jnp.dot(adj_b, xw,
                              preferred_element_type=jnp.float32) + bias
                x_b = jnp.maximum(axw * inv_denom, 0.0)
                # gcn_drop: identity in eval
            pred_ref[b] = x_b
            # aspect pooling fused as epilogue (guarded against empty mask)
            m_b = mask[b]                                                # [L, 1]
            n_b = jnp.maximum(jnp.sum(m_b, axis=0, keepdims=True), 1.0)  # [1, 1]
            pooled_ref[b] = jnp.sum(x_b * m_b, axis=0, keepdims=True) / n_b

    return kernel


# --------------------------------- wrapper -----------------------------------

@functools.partial(jax.jit, static_argnames=("num_layers",))
def gcn_forward(params, adj, words, pos, post, aspmask, seq_len, num_layers):
    # TODO(synk): embedding lookups are data-dependent gathers; done in XLA here.
    embs = jnp.concatenate(
        [params["tok_emb"][words], params["pos_emb"][pos], params["post_emb"][post]],
        axis=-1).astype(jnp.float32)                                     # [B, L, D]
    # in_drop / rnn_drop: identity in eval
    B, L, _ = embs.shape
    H = params["whh_f"].shape[0]
    H4 = 4 * H
    hid = params[f"W{num_layers - 1}"].shape[1]

    # Fuse fwd/bwd gate weights: one [D, 8H] input projection and a
    # block-diagonal [2H, 8H] recurrent matrix (256-wide MXU on v6e/v7x).
    wih_fused = jnp.concatenate([params["wih_f"], params["wih_b"]], axis=1)
    bg_fused = jnp.concatenate([params["b_f"], params["b_b"]], axis=1)
    z = jnp.zeros((H, H4), jnp.float32)
    whh_fused = jnp.concatenate(
        [jnp.concatenate([params["whh_f"], z], axis=1),
         jnp.concatenate([z, params["whh_b"]], axis=1)], axis=0)          # [2H, 8H]

    gcn_wb = []
    for l in range(num_layers):
        gcn_wb += [params[f"W{l}"], params[f"b{l}"]]

    mask3 = aspmask.astype(jnp.float32).reshape(B, L, 1)
    lens = seq_len.astype(jnp.float32).reshape(B, 1)

    pred, pooled3 = pl.pallas_call(
        _make_fused_kernel(num_layers),
        out_shape=(jax.ShapeDtypeStruct((B, L, hid), jnp.float32),
                   jax.ShapeDtypeStruct((B, 1, hid), jnp.float32)),
        scratch_shapes=[pltpu.VMEM((L, B, H), jnp.float32),
                        pltpu.VMEM((L, B, H), jnp.float32)],
    )(embs, adj, mask3, lens, wih_fused, whh_fused, bg_fused, *gcn_wb)
    return {"pred": pred, "pooled": pooled3[:, 0, :]}


# ------------------------ host-side adjacency (glue) -------------------------

def heads_to_adj(dephead, seq_len, maxlen, directed=False, self_loop=True):
    """Equivalent of head_to_tree + tree_to_adj (host-side numpy glue)."""
    # TODO(synk): dependency-tree construction is inherently host-side/irregular.
    B = dephead.shape[0]
    adj = np.zeros((B, maxlen, maxlen), dtype=np.float32)
    for b in range(B):
        n = int(seq_len[b])
        for i in range(n):
            h = int(dephead[b, i])
            if h > 0:
                adj[b, h - 1, i] = 1.0
                if not directed:
                    adj[b, i, h - 1] = 1.0
        if self_loop:
            for i in range(n):
                adj[b, i, i] = 1.0
    return adj


# ----------------------------------- main ------------------------------------

if __name__ == "__main__":
    # small config
    B, L = 2, 8
    tok_size, pos_size, post_size = 50, 10, 20
    tok_dim, pos_dim, post_dim = 32, 16, 16
    rnn_hidden = 32
    hidden_dim = 32
    num_layers = 2
    in_dim = tok_dim + pos_dim + post_dim          # 64
    gcn_in = 2 * rnn_hidden                        # bidirectional -> 64

    key = jax.random.PRNGKey(0)
    ks = jax.random.split(key, 16)

    def nrm(k, shape, s=0.1):
        return (s * jax.random.normal(k, shape)).astype(jnp.float32)

    params = {
        # embeddings (padding_idx=0 -> zero row)
        "tok_emb": nrm(ks[0], (tok_size, tok_dim)).at[0].set(0.0),
        "pos_emb": nrm(ks[1], (pos_size, pos_dim)).at[0].set(0.0),
        "post_emb": nrm(ks[2], (post_size, post_dim)).at[0].set(0.0),
        # BiLSTM (single layer); bias = b_ih + b_hh folded into one [1, 4H]
        "wih_f": nrm(ks[3], (in_dim, 4 * rnn_hidden)),
        "whh_f": nrm(ks[4], (rnn_hidden, 4 * rnn_hidden)),
        "b_f": nrm(ks[5], (1, 4 * rnn_hidden)),
        "wih_b": nrm(ks[6], (in_dim, 4 * rnn_hidden)),
        "whh_b": nrm(ks[7], (rnn_hidden, 4 * rnn_hidden)),
        "b_b": nrm(ks[8], (1, 4 * rnn_hidden)),
        # GCN layer MLPs (single Linear each; trailing ReLU is absorbed by the
        # outer relu(x / denom) since denom > 0)
        "W0": nrm(ks[9], (gcn_in, hidden_dim)),
        "b0": nrm(ks[10], (1, hidden_dim)),
        "W1": nrm(ks[11], (hidden_dim, hidden_dim)),
        "b1": nrm(ks[12], (1, hidden_dim)),
    }

    # deterministic inputs
    seq_len = np.array([8, 6], dtype=np.int32)
    rng = np.random.RandomState(0)
    words = rng.randint(1, tok_size, size=(B, L)).astype(np.int32)
    pos = rng.randint(1, pos_size, size=(B, L)).astype(np.int32)
    post = rng.randint(1, post_size, size=(B, L)).astype(np.int32)
    dephead = np.zeros((B, L), dtype=np.int32)
    for b in range(B):
        n = int(seq_len[b])
        dephead[b, 0] = 0                     # root
        for i in range(1, n):
            dephead[b, i] = i                 # head of token i is token i-1 (1-indexed)
        words[b, n:] = 0
        pos[b, n:] = 0
        post[b, n:] = 0
    aspmask = np.zeros((B, L), dtype=np.float32)
    aspmask[0, 2:4] = 1.0
    aspmask[1, 1] = 1.0

    adj = jnp.asarray(heads_to_adj(dephead, seq_len, L, directed=False, self_loop=True))
    words_j = jnp.asarray(words)
    pos_j = jnp.asarray(pos)
    post_j = jnp.asarray(post)
    aspmask_j = jnp.asarray(aspmask)
    seq_len_j = jnp.asarray(seq_len)

    out = gcn_forward(params, adj, words_j, pos_j, post_j, aspmask_j, seq_len_j,
                      num_layers)
    out = jax.block_until_ready(out)
    pred, pooled = out["pred"], out["pooled"]
    assert pred.shape == (B, L, hidden_dim)
    assert pooled.shape == (B, hidden_dim)
    assert bool(jnp.all(jnp.isfinite(pred)))
    assert bool(jnp.all(jnp.isfinite(pooled)))
    print("KERNEL_OK")
</pallas_src>

<mosaic_0001>
module attributes {stable_mosaic.version = 11 : i64} {
  func.func @kernel(%arg0: memref<2x8x64xf32, #tpu.memory_space<vmem>>, %arg1: memref<2x8x8xf32, #tpu.memory_space<vmem>>, %arg2: memref<2x8x1xf32, #tpu.memory_space<vmem>>, %arg3: memref<2x1xf32, #tpu.memory_space<vmem>>, %arg4: memref<64x256xf32, #tpu.memory_space<vmem>>, %arg5: memref<64x256xf32, #tpu.memory_space<vmem>>, %arg6: memref<1x256xf32, #tpu.memory_space<vmem>>, %arg7: memref<64x32xf32, #tpu.memory_space<vmem>>, %arg8: memref<1x32xf32, #tpu.memory_space<vmem>>, %arg9: memref<32x32xf32, #tpu.memory_space<vmem>>, %arg10: memref<1x32xf32, #tpu.memory_space<vmem>>, %arg11: memref<2x8x32xf32, #tpu.memory_space<vmem>>, %arg12: memref<2x1x32xf32, #tpu.memory_space<vmem>>, %arg13: memref<8x2x32xf32, #tpu.memory_space<vmem>>, %arg14: memref<8x2x32xf32, #tpu.memory_space<vmem>>) attributes {dimension_semantics = [], scalar_prefetch = 0 : i64, scratch_operands = 2 : i64, tpu.core_type = #tpu.core_type<tc>} {
    %c0 = arith.constant 0 : index
    %c0_0 = arith.constant 0 : index
    %c0_1 = arith.constant 0 : index
    %0 = vector.load %arg0[%c0, %c0_0, %c0_1] : memref<2x8x64xf32, #tpu.memory_space<vmem>>, vector<2x8x64xf32>
    %1 = vector.shape_cast %0 : vector<2x8x64xf32> to vector<16x64xf32>
    %c0_2 = arith.constant 0 : index
    %c0_3 = arith.constant 0 : index
    %2 = vector.load %arg4[%c0_2, %c0_3] : memref<64x256xf32, #tpu.memory_space<vmem>>, vector<64x256xf32>
    %cst = arith.constant dense<0.000000e+00> : vector<16x256xf32>
    %3 = tpu.matmul %1, %2, %cst {dimension_numbers = #tpu.dot_dimension_numbers<[1], [0], [0], [1], [0, 0, 1, 1], [], []>} : vector<16x64xf32>, vector<64x256xf32>, vector<16x256xf32> -> vector<16x256xf32>
    %c0_4 = arith.constant 0 : index
    %c0_5 = arith.constant 0 : index
    %4 = vector.load %arg6[%c0_4, %c0_5] : memref<1x256xf32, #tpu.memory_space<vmem>>, vector<1x256xf32>
    %5 = vector.broadcast %4 : vector<1x256xf32> to vector<16x256xf32>
    %6 = arith.addf %3, %5 : vector<16x256xf32>
    %7 = vector.shape_cast %6 : vector<16x256xf32> to vector<2x8x256xf32>
    %c0_6 = arith.constant 0 : index
    %c0_7 = arith.constant 0 : index
    %8 = vector.load %arg5[%c0_6, %c0_7] : memref<64x256xf32, #tpu.memory_space<vmem>>, vector<64x256xf32>
    %c0_8 = arith.constant 0 : index
    %c0_9 = arith.constant 0 : index
    %9 = vector.load %arg3[%c0_8, %c0_9] : memref<2x1xf32, #tpu.memory_space<vmem>>, vector<2x1xf32>
    %cst_10 = arith.constant 0.000000e+00 : f32
    %10 = vector.broadcast %cst_10 : f32 to vector<2x32xf32>
    %cst_11 = arith.constant 0.000000e+00 : f32
    %11 = vector.broadcast %cst_11 : f32 to vector<2x32xf32>
    %cst_12 = arith.constant 0.000000e+00 : f32
    %12 = vector.broadcast %cst_12 : f32 to vector<2x32xf32>
    %cst_13 = arith.constant 0.000000e+00 : f32
    %13 = vector.broadcast %cst_13 : f32 to vector<2x32xf32>
    %14 = tpu.concatenate %10, %12 in 1 : vector<2x32xf32>, vector<2x32xf32> -> vector<2x64xf32>
    %cst_14 = arith.constant dense<0.000000e+00> : vector<2x256xf32>
    %15 = tpu.matmul %14, %8, %cst_14 {dimension_numbers = #tpu.dot_dimension_numbers<[1], [0], [0], [1], [0, 0, 1, 1], [], []>} : vector<2x64xf32>, vector<64x256xf32>, vector<2x256xf32> -> vector<2x256xf32>
    %16 = vector.extract_strided_slice %7 {offsets = [0, 0, 0], sizes = [2, 1, 128], strides = [1, 1, 1]} : vector<2x8x256xf32> to vector<2x1x128xf32>
    %17 = vector.shape_cast %16 : vector<2x1x128xf32> to vector<2x128xf32>
    %18 = vector.extract_strided_slice %15 {offsets = [0, 0], sizes = [2, 128], strides = [1, 1]} : vector<2x256xf32> to vector<2x128xf32>
    %19 = arith.addf %17, %18 : vector<2x128xf32>
    %20 = vector.extract_strided_slice %19 {offsets = [0, 0], sizes = [2, 32], strides = [1, 1]} : vector<2x128xf32> to vector<2x32xf32>
    %21 = arith.negf %20 : vector<2x32xf32>
    %22 = math.exp %21 : vector<2x32xf32>
    %cst_15 = arith.constant 1.000000e+00 : f32
    %23 = vector.broadcast %cst_15 : f32 to vector<2x32xf32>
    %24 = arith.addf %23, %22 : vector<2x32xf32>
    %25 = arith.divf %23, %24 : vector<2x32xf32>
    %26 = vector.extract_strided_slice %19 {offsets = [0, 32], sizes = [2, 32], strides = [1, 1]} : vector<2x128xf32> to vector<2x32xf32>
    %27 = arith.negf %26 : vector<2x32xf32>
    %28 = math.exp %27 : vector<2x32xf32>
    %cst_16 = arith.constant 1.000000e+00 : f32
    %29 = vector.broadcast %cst_16 : f32 to vector<2x32xf32>
    %30 = arith.addf %29, %28 : vector<2x32xf32>
    %31 = arith.divf %29, %30 : vector<2x32xf32>
    %32 = vector.extract_strided_slice %19 {offsets = [0, 64], sizes = [2, 32], strides = [1, 1]} : vector<2x128xf32> to vector<2x32xf32>
    %33 = math.tanh %32 : vector<2x32xf32>
    %34 = vector.extract_strided_slice %19 {offsets = [0, 96], sizes = [2, 32], strides = [1, 1]} : vector<2x128xf32> to vector<2x32xf32>
    %35 = arith.negf %34 : vector<2x32xf32>
    %36 = math.exp %35 : vector<2x32xf32>
    %cst_17 = arith.constant 1.000000e+00 : f32
    %37 = vector.broadcast %cst_17 : f32 to vector<2x32xf32>
    %38 = arith.addf %37, %36 : vector<2x32xf32>
    %39 = arith.divf %37, %38 : vector<2x32xf32>
    %40 = arith.mulf %31, %11 : vector<2x32xf32>
    %41 = arith.mulf %25, %33 : vector<2x32xf32>
    %42 = arith.addf %40, %41 : vector<2x32xf32>
    %43 = math.tanh %42 : vector<2x32xf32>
    %44 = arith.mulf %39, %43 : vector<2x32xf32>
    %45 = vector.extract_strided_slice %7 {offsets = [0, 7, 128], sizes = [2, 1, 128], strides = [1, 1, 1]} : vector<2x8x256xf32> to vector<2x1x128xf32>
    %46 = vector.shape_cast %45 : vector<2x1x128xf32> to vector<2x128xf32>
    %47 = vector.extract_strided_slice %15 {offsets = [0, 128], sizes = [2, 128], strides = [1, 1]} : vector<2x256xf32> to vector<2x128xf32>
    %48 = arith.addf %46, %47 : vector<2x128xf32>
    %49 = vector.extract_strided_slice %48 {offsets = [0, 0], sizes = [2, 32], strides = [1, 1]} : vector<2x128xf32> to vector<2x32xf32>
    %50 = arith.negf %49 : vector<2x32xf32>
    %51 = math.exp %50 : vector<2x32xf32>
    %cst_18 = arith.constant 1.000000e+00 : f32
    %52 = vector.broadcast %cst_18 : f32 to vector<2x32xf32>
    %53 = arith.addf %52, %51 : vector<2x32xf32>
    %54 = arith.divf %52, %53 : vector<2x32xf32>
    %55 = vector.extract_strided_slice %48 {offsets = [0, 32], sizes = [2, 32], strides = [1, 1]} : vector<2x128xf32> to vector<2x32xf32>
    %56 = arith.negf %55 : vector<2x32xf32>
    %57 = math.exp %56 : vector<2x32xf32>
    %cst_19 = arith.constant 1.000000e+00 : f32
    %58 = vector.broadcast %cst_19 : f32 to vector<2x32xf32>
    %59 = arith.addf %58, %57 : vector<2x32xf32>
    %60 = arith.divf %58, %59 : vector<2x32xf32>
    %61 = vector.extract_strided_slice %48 {offsets = [0, 64], sizes = [2, 32], strides = [1, 1]} : vector<2x128xf32> to vector<2x32xf32>
    %62 = math.tanh %61 : vector<2x32xf32>
    %63 = vector.extract_strided_slice %48 {offsets = [0, 96], sizes = [2, 32], strides = [1, 1]} : vector<2x128xf32> to vector<2x32xf32>
    %64 = arith.negf %63 : vector<2x32xf32>
    %65 = math.exp %64 : vector<2x32xf32>
    %cst_20 = arith.constant 1.000000e+00 : f32
    %66 = vector.broadcast %cst_20 : f32 to vector<2x32xf32>
    %67 = arith.addf %66, %65 : vector<2x32xf32>
    %68 = arith.divf %66, %67 : vector<2x32xf32>
    %69 = arith.mulf %60, %13 : vector<2x32xf32>
    %70 = arith.mulf %54, %62 : vector<2x32xf32>
    %71 = arith.addf %69, %70 : vector<2x32xf32>
    %72 = math.tanh %71 : vector<2x32xf32>
    %73 = arith.mulf %68, %72 : vector<2x32xf32>
    %cst_21 = arith.constant 0.000000e+00 : f32
    %74 = vector.broadcast %cst_21 : f32 to vector<2x1xf32>
    %75 = arith.cmpf ogt, %9, %74 : vector<2x1xf32>
    %76 = arith.extui %75 : vector<2x1xi1> to vector<2x1xi32>
    %77 = arith.sitofp %76 : vector<2x1xi32> to vector<2x1xf32>
    %cst_22 = arith.constant 7.000000e+00 : f32
    %78 = vector.broadcast %cst_22 : f32 to vector<2x1xf32>
    %79 = arith.cmpf ogt, %9, %78 : vector<2x1xf32>
    %80 = arith.extui %79 : vector<2x1xi1> to vector<2x1xi32>
    %81 = arith.sitofp %80 : vector<2x1xi32> to vector<2x1xf32>
    %82 = vector.broadcast %77 : vector<2x1xf32> to vector<2x32xf32>
    %83 = arith.mulf %82, %44 : vector<2x32xf32>
    %cst_23 = arith.constant 1.000000e+00 : f32
    %84 = vector.broadcast %cst_23 : f32 to vector<2x1xf32>
    %85 = arith.subf %84, %77 : vector<2x1xf32>
    %86 = vector.broadcast %85 : vector<2x1xf32> to vector<2x32xf32>
    %87 = arith.mulf %86, %10 : vector<2x32xf32>
    %88 = arith.addf %83, %87 : vector<2x32xf32>
    %89 = vector.broadcast %77 : vector<2x1xf32> to vector<2x32xf32>
    %90 = arith.mulf %89, %42 : vector<2x32xf32>
    %cst_24 = arith.constant 1.000000e+00 : f32
    %91 = vector.broadcast %cst_24 : f32 to vector<2x1xf32>
    %92 = arith.subf %91, %77 : vector<2x1xf32>
    %93 = vector.broadcast %92 : vector<2x1xf32> to vector<2x32xf32>
    %94 = arith.mulf %93, %11 : vector<2x32xf32>
    %95 = arith.addf %90, %94 : vector<2x32xf32>
    %96 = vector.broadcast %81 : vector<2x1xf32> to vector<2x32xf32>
    %97 = arith.mulf %96, %73 : vector<2x32xf32>
    %cst_25 = arith.constant 1.000000e+00 : f32
    %98 = vector.broadcast %cst_25 : f32 to vector<2x1xf32>
    %99 = arith.subf %98, %81 : vector<2x1xf32>
    %100 = vector.broadcast %99 : vector<2x1xf32> to vector<2x32xf32>
    %101 = arith.mulf %100, %12 : vector<2x32xf32>
    %102 = arith.addf %97, %101 : vector<2x32xf32>
    %103 = vector.broadcast %81 : vector<2x1xf32> to vector<2x32xf32>
    %104 = arith.mulf %103, %71 : vector<2x32xf32>
    %cst_26 = arith.constant 1.000000e+00 : f32
    %105 = vector.broadcast %cst_26 : f32 to vector<2x1xf32>
    %106 = arith.subf %105, %81 : vector<2x1xf32>
    %107 = vector.broadcast %106 : vector<2x1xf32> to vector<2x32xf32>
    %108 = arith.mulf %107, %13 : vector<2x32xf32>
    %109 = arith.addf %104, %108 : vector<2x32xf32>
    %110 = vector.broadcast %77 : vector<2x1xf32> to vector<2x32xf32>
    %111 = arith.mulf %88, %110 : vector<2x32xf32>
    %c0_27 = arith.constant 0 : index
    %c0_28 = arith.constant 0 : index
    %c0_29 = arith.constant 0 : index
    %112 = vector.load %arg13[%c0_27, %c0_28, %c0_29] : memref<8x2x32xf32, #tpu.memory_space<vmem>>, vector<1x2x32xf32>
    %113 = vector.shape_cast %112 : vector<1x2x32xf32> to vector<2x32xf32>
    %114 = vector.shape_cast %111 : vector<2x32xf32> to vector<1x2x32xf32>
    tpu.vector_store %arg13[%c0_27, %c0_28, %c0_29], %114 {strides = array<i32>} : memref<8x2x32xf32, #tpu.memory_space<vmem>>, vector<1x2x32xf32>,
    %115 = vector.broadcast %81 : vector<2x1xf32> to vector<2x32xf32>
    %116 = arith.mulf %102, %115 : vector<2x32xf32>
    %c7 = arith.constant 7 : index
    %c0_30 = arith.constant 0 : index
    %c0_31 = arith.constant 0 : index
    %117 = vector.load %arg14[%c7, %c0_30, %c0_31] : memref<8x2x32xf32, #tpu.memory_space<vmem>>, vector<1x2x32xf32>
    %118 = vector.shape_cast %117 : vector<1x2x32xf32> to vector<2x32xf32>
    %119 = vector.shape_cast %116 : vector<2x32xf32> to vector<1x2x32xf32>
    tpu.vector_store %arg14[%c7, %c0_30, %c0_31], %119 {strides = array<i32>} : memref<8x2x32xf32, #tpu.memory_space<vmem>>, vector<1x2x32xf32>,
    %120 = tpu.concatenate %88, %102 in 1 : vector<2x32xf32>, vector<2x32xf32> -> vector<2x64xf32>
    %cst_32 = arith.constant dense<0.000000e+00> : vector<2x256xf32>
    %121 = tpu.matmul %120, %8, %cst_32 {dimension_numbers = #tpu.dot_dimension_numbers<[1], [0], [0], [1], [0, 0, 1, 1], [], []>} : vector<2x64xf32>, vector<64x256xf32>, vector<2x256xf32> -> vector<2x256xf32>
    %122 = vector.extract_strided_slice %7 {offsets = [0, 1, 0], sizes = [2, 1, 128], strides = [1, 1, 1]} : vector<2x8x256xf32> to vector<2x1x128xf32>
    %123 = vector.shape_cast %122 : vector<2x1x128xf32> to vector<2x128xf32>
    %124 = vector.extract_strided_slice %121 {offsets = [0, 0], sizes = [2, 128], strides = [1, 1]} : vector<2x256xf32> to vector<2x128xf32>
    %125 = arith.addf %123, %124 : vector<2x128xf32>
    %126 = vector.extract_strided_slice %125 {offsets = [0, 0], sizes = [2, 32], strides = [1, 1]} : vector<2x128xf32> to vector<2x32xf32>
    %127 = arith.negf %126 : vector<2x32xf32>
    %128 = math.exp %127 : vector<2x32xf32>
    %cst_33 = arith.constant 1.000000e+00 : f32
    %129 = vector.broadcast %cst_33 : f32 to vector<2x32xf32>
    %130 = arith.addf %129, %128 : vector<2x32xf32>
    %131 = arith.divf %129, %130 : vector<2x32xf32>
    %132 = vector.extract_strided_slice %125 {offsets = [0, 32], sizes = [2, 32], strides = [1, 1]} : vector<2x128xf32> to vector<2x32xf32>
    %133 = arith.negf %132 : vector<2x32xf32>
    %134 = math.exp %133 : vector<2x32xf32>
    %cst_34 = arith.constant 1.000000e+00 : f32
    %135 = vector.broadcast %cst_34 : f32 to vector<2x32xf32>
    %136 = arith.addf %135, %134 : vector<2x32xf32>
    %137 = arith.divf %135, %136 : vector<2x32xf32>
    %138 = vector.extract_strided_slice %125 {offsets = [0, 64], sizes = [2, 32], strides = [1, 1]} : vector<2x128xf32> to vector<2x32xf32>
    %139 = math.tanh %138 : vector<2x32xf32>
    %140 = vector.extract_strided_slice %125 {offsets = [0, 96], sizes = [2, 32], strides = [1, 1]} : vector<2x128xf32> to vector<2x32xf32>
    %141 = arith.negf %140 : vector<2x32xf32>
    %142 = math.exp %141 : vector<2x32xf32>
    %cst_35 = arith.constant 1.000000e+00 : f32
    %143 = vector.broadcast %cst_35 : f32 to vector<2x32xf32>
    %144 = arith.addf %143, %142 : vector<2x32xf32>
    %145 = arith.divf %143, %144 : vector<2x32xf32>
    %146 = arith.mulf %137, %95 : vector<2x32xf32>
    %147 = arith.mulf %131, %139 : vector<2x32xf32>
    %148 = arith.addf %146, %147 : vector<2x32xf32>
    %149 = math.tanh %148 : vector<2x32xf32>
    %150 = arith.mulf %145, %149 : vector<2x32xf32>
    %151 = vector.extract_strided_slice %7 {offsets = [0, 6, 128], sizes = [2, 1, 128], strides = [1, 1, 1]} : vector<2x8x256xf32> to vector<2x1x128xf32>
    %152 = vector.shape_cast %151 : vector<2x1x128xf32> to vector<2x128xf32>
    %153 = vector.extract_strided_slice %121 {offsets = [0, 128], sizes = [2, 128], strides = [1, 1]} : vector<2x256xf32> to vector<2x128xf32>
    %154 = arith.addf %152, %153 : vector<2x128xf32>
    %155 = vector.extract_strided_slice %154 {offsets = [0, 0], sizes = [2, 32], strides = [1, 1]} : vector<2x128xf32> to vector<2x32xf32>
    %156 = arith.negf %155 : vector<2x32xf32>
    %157 = math.exp %156 : vector<2x32xf32>
    %cst_36 = arith.constant 1.000000e+00 : f32
    %158 = vector.broadcast %cst_36 : f32 to vector<2x32xf32>
    %159 = arith.addf %158, %157 : vector<2x32xf32>
    %160 = arith.divf %158, %159 : vector<2x32xf32>
    %161 = vector.extract_strided_slice %154 {offsets = [0, 32], sizes = [2, 32], strides = [1, 1]} : vector<2x128xf32> to vector<2x32xf32>
    %162 = arith.negf %161 : vector<2x32xf32>
    %163 = math.exp %162 : vector<2x32xf32>
    %cst_37 = arith.constant 1.000000e+00 : f32
    %164 = vector.broadcast %cst_37 : f32 to vector<2x32xf32>
    %165 = arith.addf %164, %163 : vector<2x32xf32>
    %166 = arith.divf %164, %165 : vector<2x32xf32>
    %167 = vector.extract_strided_slice %154 {offsets = [0, 64], sizes = [2, 32], strides = [1, 1]} : vector<2x128xf32> to vector<2x32xf32>
    %168 = math.tanh %167 : vector<2x32xf32>
    %169 = vector.extract_strided_slice %154 {offsets = [0, 96], sizes = [2, 32], strides = [1, 1]} : vector<2x128xf32> to vector<2x32xf32>
    %170 = arith.negf %169 : vector<2x32xf32>
    %171 = math.exp %170 : vector<2x32xf32>
    %cst_38 = arith.constant 1.000000e+00 : f32
    %172 = vector.broadcast %cst_38 : f32 to vector<2x32xf32>
    %173 = arith.addf %172, %171 : vector<2x32xf32>
    %174 = arith.divf %172, %173 : vector<2x32xf32>
    %175 = arith.mulf %166, %109 : vector<2x32xf32>
    %176 = arith.mulf %160, %168 : vector<2x32xf32>
    %177 = arith.addf %175, %176 : vector<2x32xf32>
    %178 = math.tanh %177 : vector<2x32xf32>
    %179 = arith.mulf %174, %178 : vector<2x32xf32>
    %cst_39 = arith.constant 1.000000e+00 : f32
    %180 = vector.broadcast %cst_39 : f32 to vector<2x1xf32>
    %181 = arith.cmpf ogt, %9, %180 : vector<2x1xf32>
    %182 = arith.extui %181 : vector<2x1xi1> to vector<2x1xi32>
    %183 = arith.sitofp %182 : vector<2x1xi32> to vector<2x1xf32>
    %cst_40 = arith.constant 6.000000e+00 : f32
    %184 = vector.broadcast %cst_40 : f32 to vector<2x1xf32>
    %185 = arith.cmpf ogt, %9, %184 : vector<2x1xf32>
    %186 = arith.extui %185 : vector<2x1xi1> to vector<2x1xi32>
    %187 = arith.sitofp %186 : vector<2x1xi32> to vector<2x1xf32>
    %188 = vector.broadcast %183 : vector<2x1xf32> to vector<2x32xf32>
    %189 = arith.mulf %188, %150 : vector<2x32xf32>
    %cst_41 = arith.constant 1.000000e+00 : f32
    %190 = vector.broadcast %cst_41 : f32 to vector<2x1xf32>
    %191 = arith.subf %190, %183 : vector<2x1xf32>
    %192 = vector.broadcast %191 : vector<2x1xf32> to vector<2x32xf32>
    %193 = arith.mulf %192, %88 : vector<2x32xf32>
    %194 = arith.addf %189, %193 : vector<2x32xf32>
    %195 = vector.broadcast %183 : vector<2x1xf32> to vector<2x32xf32>
    %196 = arith.mulf %195, %148 : vector<2x32xf32>
    %cst_42 = arith.constant 1.000000e+00 : f32
    %197 = vector.broadcast %cst_42 : f32 to vector<2x1xf32>
    %198 = arith.subf %197, %183 : vector<2x1xf32>
    %199 = vector.broadcast %198 : vector<2x1xf32> to vector<2x32xf32>
    %200 = arith.mulf %199, %95 : vector<2x32xf32>
    %201 = arith.addf %196, %200 : vector<2x32xf32>
    %202 = vector.broadcast %187 : vector<2x1xf32> to vector<2x32xf32>
    %203 = arith.mulf %202, %179 : vector<2x32xf32>
    %cst_43 = arith.constant 1.000000e+00 : f32
    %204 = vector.broadcast %cst_43 : f32 to vector<2x1xf32>
    %205 = arith.subf %204, %187 : vector<2x1xf32>
    %206 = vector.broadcast %205 : vector<2x1xf32> to vector<2x32xf32>
    %207 = arith.mulf %206, %102 : vector<2x32xf32>
    %208 = arith.addf %203, %207 : vector<2x32xf32>
    %209 = vector.broadcast %187 : vector<2x1xf32> to vector<2x32xf32>
    %210 = arith.mulf %209, %177 : vector<2x32xf32>
    %cst_44 = arith.constant 1.000000e+00 : f32
    %211 = vector.broadcast %cst_44 : f32 to vector<2x1xf32>
    %212 = arith.subf %211, %187 : vector<2x1xf32>
    %213 = vector.broadcast %212 : vector<2x1xf32> to vector<2x32xf32>
    %214 = arith.mulf %213, %109 : vector<2x32xf32>
    %215 = arith.addf %210, %214 : vector<2x32xf32>
    %216 = vector.broadcast %183 : vector<2x1xf32> to vector<2x32xf32>
    %217 = arith.mulf %194, %216 : vector<2x32xf32>
    %c1 = arith.constant 1 : index
    %c0_45 = arith.constant 0 : index
    %c0_46 = arith.constant 0 : index
    %218 = vector.load %arg13[%c1, %c0_45, %c0_46] : memref<8x2x32xf32, #tpu.memory_space<vmem>>, vector<1x2x32xf32>
    %219 = vector.shape_cast %218 : vector<1x2x32xf32> to vector<2x32xf32>
    %220 = vector.shape_cast %217 : vector<2x32xf32> to vector<1x2x32xf32>
    tpu.vector_store %arg13[%c1, %c0_45, %c0_46], %220 {strides = array<i32>} : memref<8x2x32xf32, #tpu.memory_space<vmem>>, vector<1x2x32xf32>,
    %221 = vector.broadcast %187 : vector<2x1xf32> to vector<2x32xf32>
    %222 = arith.mulf %208, %221 : vector<2x32xf32>
    %c6 = arith.constant 6 : index
    %c0_47 = arith.constant 0 : index
    %c0_48 = arith.constant 0 : index
    %223 = vector.load %arg14[%c6, %c0_47, %c0_48] : memref<8x2x32xf32, #tpu.memory_space<vmem>>, vector<1x2x32xf32>
    %224 = vector.shape_cast %223 : vector<1x2x32xf32> to vector<2x32xf32>
    %225 = vector.shape_cast %222 : vector<2x32xf32> to vector<1x2x32xf32>
    tpu.vector_store %arg14[%c6, %c0_47, %c0_48], %225 {strides = array<i32>} : memref<8x2x32xf32, #tpu.memory_space<vmem>>, vector<1x2x32xf32>,
    %226 = tpu.concatenate %194, %208 in 1 : vector<2x32xf32>, vector<2x32xf32> -> vector<2x64xf32>
    %cst_49 = arith.constant dense<0.000000e+00> : vector<2x256xf32>
    %227 = tpu.matmul %226, %8, %cst_49 {dimension_numbers = #tpu.dot_dimension_numbers<[1], [0], [0], [1], [0, 0, 1, 1], [], []>} : vector<2x64xf32>, vector<64x256xf32>, vector<2x256xf32> -> vector<2x256xf32>
    %228 = vector.extract_strided_slice %7 {offsets = [0, 2, 0], sizes = [2, 1, 128], strides = [1, 1, 1]} : vector<2x8x256xf32> to vector<2x1x128xf32>
    %229 = vector.shape_cast %228 : vector<2x1x128xf32> to vector<2x128xf32>
    %230 = vector.extract_strided_slice %227 {offsets = [0, 0], sizes = [2, 128], strides = [1, 1]} : vector<2x256xf32> to vector<2x128xf32>
    %231 = arith.addf %229, %230 : vector<2x128xf32>
    %232 = vector.extract_strided_slice %231 {offsets = [0, 0], sizes = [2, 32], strides = [1, 1]} : vector<2x128xf32> to vector<2x32xf32>
    %233 = arith.negf %232 : vector<2x32xf32>
    %234 = math.exp %233 : vector<2x32xf32>
    %cst_50 = arith.constant 1.000000e+00 : f32
    %235 = vector.broadcast %cst_50 : f32 to vector<2x32xf32>
    %236 = arith.addf %235, %234 : vector<2x32xf32>
    %237 = arith.divf %235, %236 : vector<2x32xf32>
    %238 = vector.extract_strided_slice %231 {offsets = [0, 32], sizes = [2, 32], strides = [1, 1]} : vector<2x128xf32> to vector<2x32xf32>
    %239 = arith.negf %238 : vector<2x32xf32>
    %240 = math.exp %239 : vector<2x32xf32>
    %cst_51 = arith.constant 1.000000e+00 : f32
    %241 = vector.broadcast %cst_51 : f32 to vector<2x32xf32>
    %242 = arith.addf %241, %240 : vector<2x32xf32>
    %243 = arith.divf %241, %242 : vector<2x32xf32>
    %244 = vector.extract_strided_slice %231 {offsets = [0, 64], sizes = [2, 32], strides = [1, 1]} : vector<2x128xf32> to vector<2x32xf32>
    %245 = math.tanh %244 : vector<2x32xf32>
    %246 = vector.extract_strided_slice %231 {offsets = [0, 96], sizes = [2, 32], strides = [1, 1]} : vector<2x128xf32> to vector<2x32xf32>
    %247 = arith.negf %246 : vector<2x32xf32>
    %248 = math.exp %247 : vector<2x32xf32>
    %cst_52 = arith.constant 1.000000e+00 : f32
    %249 = vector.broadcast %cst_52 : f32 to vector<2x32xf32>
    %250 = arith.addf %249, %248 : vector<2x32xf32>
    %251 = arith.divf %249, %250 : vector<2x32xf32>
    %252 = arith.mulf %243, %201 : vector<2x32xf32>
    %253 = arith.mulf %237, %245 : vector<2x32xf32>
    %254 = arith.addf %252, %253 : vector<2x32xf32>
    %255 = math.tanh %254 : vector<2x32xf32>
    %256 = arith.mulf %251, %255 : vector<2x32xf32>
    %257 = vector.extract_strided_slice %7 {offsets = [0, 5, 128], sizes = [2, 1, 128], strides = [1, 1, 1]} : vector<2x8x256xf32> to vector<2x1x128xf32>
    %258 = vector.shape_cast %257 : vector<2x1x128xf32> to vector<2x128xf32>
    %259 = vector.extract_strided_slice %227 {offsets = [0, 128], sizes = [2, 128], strides = [1, 1]} : vector<2x256xf32> to vector<2x128xf32>
    %260 = arith.addf %258, %259 : vector<2x128xf32>
    %261 = vector.extract_strided_slice %260 {offsets = [0, 0], sizes = [2, 32], strides = [1, 1]} : vector<2x128xf32> to vector<2x32xf32>
    %262 = arith.negf %261 : vector<2x32xf32>
    %263 = math.exp %262 : vector<2x32xf32>
    %cst_53 = arith.constant 1.000000e+00 : f32
    %264 = vector.broadcast %cst_53 : f32 to vector<2x32xf32>
    %265 = arith.addf %264, %263 : vector<2x32xf32>
    %266 = arith.divf %264, %265 : vector<2x32xf32>
    %267 = vector.extract_strided_slice %260 {offsets = [0, 32], sizes = [2, 32], strides = [1, 1]} : vector<2x128xf32> to vector<2x32xf32>
    %268 = arith.negf %267 : vector<2x32xf32>
    %269 = math.exp %268 : vector<2x32xf32>
    %cst_54 = arith.constant 1.000000e+00 : f32
    %270 = vector.broadcast %cst_54 : f32 to vector<2x32xf32>
    %271 = arith.addf %270, %269 : vector<2x32xf32>
    %272 = arith.divf %270, %271 : vector<2x32xf32>
    %273 = vector.extract_strided_slice %260 {offsets = [0, 64], sizes = [2, 32], strides = [1, 1]} : vector<2x128xf32> to vector<2x32xf32>
    %274 = math.tanh %273 : vector<2x32xf32>
    %275 = vector.extract_strided_slice %260 {offsets = [0, 96], sizes = [2, 32], strides = [1, 1]} : vector<2x128xf32> to vector<2x32xf32>
    %276 = arith.negf %275 : vector<2x32xf32>
    %277 = math.exp %276 : vector<2x32xf32>
    %cst_55 = arith.constant 1.000000e+00 : f32
    %278 = vector.broadcast %cst_55 : f32 to vector<2x32xf32>
    %279 = arith.addf %278, %277 : vector<2x32xf32>
    %280 = arith.divf %278, %279 : vector<2x32xf32>
    %281 = arith.mulf %272, %215 : vector<2x32xf32>
    %282 = arith.mulf %266, %274 : vector<2x32xf32>
    %283 = arith.addf %281, %282 : vector<2x32xf32>
    %284 = math.tanh %283 : vector<2x32xf32>
    %285 = arith.mulf %280, %284 : vector<2x32xf32>
    %cst_56 = arith.constant 2.000000e+00 : f32
    %286 = vector.broadcast %cst_56 : f32 to vector<2x1xf32>
    %287 = arith.cmpf ogt, %9, %286 : vector<2x1xf32>
    %288 = arith.extui %287 : vector<2x1xi1> to vector<2x1xi32>
    %289 = arith.sitofp %288 : vector<2x1xi32> to vector<2x1xf32>
    %cst_57 = arith.constant 5.000000e+00 : f32
    %290 = vector.broadcast %cst_57 : f32 to vector<2x1xf32>
    %291 = arith.cmpf ogt, %9, %290 : vector<2x1xf32>
    %292 = arith.extui %291 : vector<2x1xi1> to vector<2x1xi32>
    %293 = arith.sitofp %292 : vector<2x1xi32> to vector<2x1xf32>
    %294 = vector.broadcast %289 : vector<2x1xf32> to vector<2x32xf32>
    %295 = arith.mulf %294, %256 : vector<2x32xf32>
    %cst_58 = arith.constant 1.000000e+00 : f32
    %296 = vector.broadcast %cst_58 : f32 to vector<2x1xf32>
    %297 = arith.subf %296, %289 : vector<2x1xf32>
    %298 = vector.broadcast %297 : vector<2x1xf32> to vector<2x32xf32>
    %299 = arith.mulf %298, %194 : vector<2x32xf32>
    %300 = arith.addf %295, %299 : vector<2x32xf32>
    %301 = vector.broadcast %289 : vector<2x1xf32> to vector<2x32xf32>
    %302 = arith.mulf %301, %254 : vector<2x32xf32>
    %cst_59 = arith.constant 1.000000e+00 : f32
    %303 = vector.broadcast %cst_59 : f32 to vector<2x1xf32>
    %304 = arith.subf %303, %289 : vector<2x1xf32>
    %305 = vector.broadcast %304 : vector<2x1xf32> to vector<2x32xf32>
    %306 = arith.mulf %305, %201 : vector<2x32xf32>
    %307 = arith.addf %302, %306 : vector<2x32xf32>
    %308 = vector.broadcast %293 : vector<2x1xf32> to vector<2x32xf32>
    %309 = arith.mulf %308, %285 : vector<2x32xf32>
    %cst_60 = arith.constant 1.000000e+00 : f32
    %310 = vector.broadcast %cst_60 : f32 to vector<2x1xf32>
    %311 = arith.subf %310, %293 : vector<2x1xf32>
    %312 = vector.broadcast %311 : vector<2x1xf32> to vector<2x32xf32>
    %313 = arith.mulf %312, %208 : vector<2x32xf32>
    %314 = arith.addf %309, %313 : vector<2x32xf32>
    %315 = vector.broadcast %293 : vector<2x1xf32> to vector<2x32xf32>
    %316 = arith.mulf %315, %283 : vector<2x32xf32>
    %cst_61 = arith.constant 1.000000e+00 : f32
    %317 = vector.broadcast %cst_61 : f32 to vector<2x1xf32>
    %318 = arith.subf %317, %293 : vector<2x1xf32>
    %319 = vector.broadcast %318 : vector<2x1xf32> to vector<2x32xf32>
    %320 = arith.mulf %319, %215 : vector<2x32xf32>
    %321 = arith.addf %316, %320 : vector<2x32xf32>
    %322 = vector.broadcast %289 : vector<2x1xf32> to vector<2x32xf32>
    %323 = arith.mulf %300, %322 : vector<2x32xf32>
    %c2 = arith.constant 2 : index
    %c0_62 = arith.constant 0 : index
    %c0_63 = arith.constant 0 : index
    %324 = vector.load %arg13[%c2, %c0_62, %c0_63] : memref<8x2x32xf32, #tpu.memory_space<vmem>>, vector<1x2x32xf32>
    %325 = vector.shape_cast %324 : vector<1x2x32xf32> to vector<2x32xf32>
    %326 = vector.shape_cast %323 : vector<2x32xf32> to vector<1x2x32xf32>
    tpu.vector_store %arg13[%c2, %c0_62, %c0_63], %326 {strides = array<i32>} : memref<8x2x32xf32, #tpu.memory_space<vmem>>, vector<1x2x32xf32>,
    %327 = vector.broadcast %293 : vector<2x1xf32> to vector<2x32xf32>
    %328 = arith.mulf %314, %327 : vector<2x32xf32>
    %c5 = arith.constant 5 : index
    %c0_64 = arith.constant 0 : index
    %c0_65 = arith.constant 0 : index
    %329 = vector.load %arg14[%c5, %c0_64, %c0_65] : memref<8x2x32xf32, #tpu.memory_space<vmem>>, vector<1x2x32xf32>
    %330 = vector.shape_cast %329 : vector<1x2x32xf32> to vector<2x32xf32>
    %331 = vector.shape_cast %328 : vector<2x32xf32> to vector<1x2x32xf32>
    tpu.vector_store %arg14[%c5, %c0_64, %c0_65], %331 {strides = array<i32>} : memref<8x2x32xf32, #tpu.memory_space<vmem>>, vector<1x2x32xf32>,
    %332 = tpu.concatenate %300, %314 in 1 : vector<2x32xf32>, vector<2x32xf32> -> vector<2x64xf32>
    %cst_66 = arith.constant dense<0.000000e+00> : vector<2x256xf32>
    %333 = tpu.matmul %332, %8, %cst_66 {dimension_numbers = #tpu.dot_dimension_numbers<[1], [0], [0], [1], [0, 0, 1, 1], [], []>} : vector<2x64xf32>, vector<64x256xf32>, vector<2x256xf32> -> vector<2x256xf32>
    %334 = vector.extract_strided_slice %7 {offsets = [0, 3, 0], sizes = [2, 1, 128], strides = [1, 1, 1]} : vector<2x8x256xf32> to vector<2x1x128xf32>
    %335 = vector.shape_cast %334 : vector<2x1x128xf32> to vector<2x128xf32>
    %336 = vector.extract_strided_slice %333 {offsets = [0, 0], sizes = [2, 128], strides = [1, 1]} : vector<2x256xf32> to vector<2x128xf32>
    %337 = arith.addf %335, %336 : vector<2x128xf32>
    %338 = vector.extract_strided_slice %337 {offsets = [0, 0], sizes = [2, 32], strides = [1, 1]} : vector<2x128xf32> to vector<2x32xf32>
    %339 = arith.negf %338 : vector<2x32xf32>
    %340 = math.exp %339 : vector<2x32xf32>
    %cst_67 = arith.constant 1.000000e+00 : f32
    %341 = vector.broadcast %cst_67 : f32 to vector<2x32xf32>
    %342 = arith.addf %341, %340 : vector<2x32xf32>
    %343 = arith.divf %341, %342 : vector<2x32xf32>
    %344 = vector.extract_strided_slice %337 {offsets = [0, 32], sizes = [2, 32], strides = [1, 1]} : vector<2x128xf32> to vector<2x32xf32>
    %345 = arith.negf %344 : vector<2x32xf32>
    %346 = math.exp %345 : vector<2x32xf32>
    %cst_68 = arith.constant 1.000000e+00 : f32
    %347 = vector.broadcast %cst_68 : f32 to vector<2x32xf32>
    %348 = arith.addf %347, %346 : vector<2x32xf32>
    %349 = arith.divf %347, %348 : vector<2x32xf32>
    %350 = vector.extract_strided_slice %337 {offsets = [0, 64], sizes = [2, 32], strides = [1, 1]} : vector<2x128xf32> to vector<2x32xf32>
    %351 = math.tanh %350 : vector<2x32xf32>
    %352 = vector.extract_strided_slice %337 {offsets = [0, 96], sizes = [2, 32], strides = [1, 1]} : vector<2x128xf32> to vector<2x32xf32>
    %353 = arith.negf %352 : vector<2x32xf32>
    %354 = math.exp %353 : vector<2x32xf32>
    %cst_69 = arith.constant 1.000000e+00 : f32
    %355 = vector.broadcast %cst_69 : f32 to vector<2x32xf32>
    %356 = arith.addf %355, %354 : vector<2x32xf32>
    %357 = arith.divf %355, %356 : vector<2x32xf32>
    %358 = arith.mulf %349, %307 : vector<2x32xf32>
    %359 = arith.mulf %343, %351 : vector<2x32xf32>
    %360 = arith.addf %358, %359 : vector<2x32xf32>
    %361 = math.tanh %360 : vector<2x32xf32>
    %362 = arith.mulf %357, %361 : vector<2x32xf32>
    %363 = vector.extract_strided_slice %7 {offsets = [0, 4, 128], sizes = [2, 1, 128], strides = [1, 1, 1]} : vector<2x8x256xf32> to vector<2x1x128xf32>
    %364 = vector.shape_cast %363 : vector<2x1x128xf32> to vector<2x128xf32>
    %365 = vector.extract_strided_slice %333 {offsets = [0, 128], sizes = [2, 128], strides = [1, 1]} : vector<2x256xf32> to vector<2x128xf32>
    %366 = arith.addf %364, %365 : vector<2x128xf32>
    %367 = vector.extract_strided_slice %366 {offsets = [0, 0], sizes = [2, 32], strides = [1, 1]} : vector<2x128xf32> to vector<2x32xf32>
    %368 = arith.negf %367 : vector<2x32xf32>
    %369 = math.exp %368 : vector<2x32xf32>
    %cst_70 = arith.constant 1.000000e+00 : f32
    %370 = vector.broadcast %cst_70 : f32 to vector<2x32xf32>
    %371 = arith.addf %370, %369 : vector<2x32xf32>
    %372 = arith.divf %370, %371 : vector<2x32xf32>
    %373 = vector.extract_strided_slice %366 {offsets = [0, 32], sizes = [2, 32], strides = [1, 1]} : vector<2x128xf32> to vector<2x32xf32>
    %374 = arith.negf %373 : vector<2x32xf32>
    %375 = math.exp %374 : vector<2x32xf32>
    %cst_71 = arith.constant 1.000000e+00 : f32
    %376 = vector.broadcast %cst_71 : f32 to vector<2x32xf32>
    %377 = arith.addf %376, %375 : vector<2x32xf32>
    %378 = arith.divf %376, %377 : vector<2x32xf32>
    %379 = vector.extract_strided_slice %366 {offsets = [0, 64], sizes = [2, 32], strides = [1, 1]} : vector<2x128xf32> to vector<2x32xf32>
    %380 = math.tanh %379 : vector<2x32xf32>
    %381 = vector.extract_strided_slice %366 {offsets = [0, 96], sizes = [2, 32], strides = [1, 1]} : vector<2x128xf32> to vector<2x32xf32>
    %382 = arith.negf %381 : vector<2x32xf32>
    %383 = math.exp %382 : vector<2x32xf32>
    %cst_72 = arith.constant 1.000000e+00 : f32
    %384 = vector.broadcast %cst_72 : f32 to vector<2x32xf32>
    %385 = arith.addf %384, %383 : vector<2x32xf32>
    %386 = arith.divf %384, %385 : vector<2x32xf32>
    %387 = arith.mulf %378, %321 : vector<2x32xf32>
    %388 = arith.mulf %372, %380 : vector<2x32xf32>
    %389 = arith.addf %387, %388 : vector<2x32xf32>
    %390 = math.tanh %389 : vector<2x32xf32>
    %391 = arith.mulf %386, %390 : vector<2x32xf32>
    %cst_73 = arith.constant 3.000000e+00 : f32
    %392 = vector.broadcast %cst_73 : f32 to vector<2x1xf32>
    %393 = arith.cmpf ogt, %9, %392 : vector<2x1xf32>
    %394 = arith.extui %393 : vector<2x1xi1> to vector<2x1xi32>
    %395 = arith.sitofp %394 : vector<2x1xi32> to vector<2x1xf32>
    %cst_74 = arith.constant 4.000000e+00 : f32
    %396 = vector.broadcast %cst_74 : f32 to vector<2x1xf32>
    %397 = arith.cmpf ogt, %9, %396 : vector<2x1xf32>
    %398 = arith.extui %397 : vector<2x1xi1> to vector<2x1xi32>
    %399 = arith.sitofp %398 : vector<2x1xi32> to vector<2x1xf32>
    %400 = vector.broadcast %395 : vector<2x1xf32> to vector<2x32xf32>
    %401 = arith.mulf %400, %362 : vector<2x32xf32>
    %cst_75 = arith.constant 1.000000e+00 : f32
    %402 = vector.broadcast %cst_75 : f32 to vector<2x1xf32>
    %403 = arith.subf %402, %395 : vector<2x1xf32>
    %404 = vector.broadcast %403 : vector<2x1xf32> to vector<2x32xf32>
    %405 = arith.mulf %404, %300 : vector<2x32xf32>
    %406 = arith.addf %401, %405 : vector<2x32xf32>
    %407 = vector.broadcast %395 : vector<2x1xf32> to vector<2x32xf32>
    %408 = arith.mulf %407, %360 : vector<2x32xf32>
    %cst_76 = arith.constant 1.000000e+00 : f32
    %409 = vector.broadcast %cst_76 : f32 to vector<2x1xf32>
    %410 = arith.subf %409, %395 : vector<2x1xf32>
    %411 = vector.broadcast %410 : vector<2x1xf32> to vector<2x32xf32>
    %412 = arith.mulf %411, %307 : vector<2x32xf32>
    %413 = arith.addf %408, %412 : vector<2x32xf32>
    %414 = vector.broadcast %399 : vector<2x1xf32> to vector<2x32xf32>
    %415 = arith.mulf %414, %391 : vector<2x32xf32>
    %cst_77 = arith.constant 1.000000e+00 : f32
    %416 = vector.broadcast %cst_77 : f32 to vector<2x1xf32>
    %417 = arith.subf %416, %399 : vector<2x1xf32>
    %418 = vector.broadcast %417 : vector<2x1xf32> to vector<2x32xf32>
    %419 = arith.mulf %418, %314 : vector<2x32xf32>
    %420 = arith.addf %415, %419 : vector<2x32xf32>
    %421 = vector.broadcast %399 : vector<2x1xf32> to vector<2x32xf32>
    %422 = arith.mulf %421, %389 : vector<2x32xf32>
    %cst_78 = arith.constant 1.000000e+00 : f32
    %423 = vector.broadcast %cst_78 : f32 to vector<2x1xf32>
    %424 = arith.subf %423, %399 : vector<2x1xf32>
    %425 = vector.broadcast %424 : vector<2x1xf32> to vector<2x32xf32>
    %426 = arith.mulf %425, %321 : vector<2x32xf32>
    %427 = arith.addf %422, %426 : vector<2x32xf32>
    %428 = vector.broadcast %395 : vector<2x1xf32> to vector<2x32xf32>
    %429 = arith.mulf %406, %428 : vector<2x32xf32>
    %c3 = arith.constant 3 : index
    %c0_79 = arith.constant 0 : index
    %c0_80 = arith.constant 0 : index
    %430 = vector.load %arg13[%c3, %c0_79, %c0_80] : memref<8x2x32xf32, #tpu.memory_space<vmem>>, vector<1x2x32xf32>
    %431 = vector.shape_cast %430 : vector<1x2x32xf32> to vector<2x32xf32>
    %432 = vector.shape_cast %429 : vector<2x32xf32> to vector<1x2x32xf32>
    tpu.vector_store %arg13[%c3, %c0_79, %c0_80], %432 {strides = array<i32>} : memref<8x2x32xf32, #tpu.memory_space<vmem>>, vector<1x2x32xf32>,
    %433 = vector.broadcast %399 : vector<2x1xf32> to vector<2x32xf32>
    %434 = arith.mulf %420, %433 : vector<2x32xf32>
    %c4 = arith.constant 4 : index
    %c0_81 = arith.constant 0 : index
    %c0_82 = arith.constant 0 : index
    %435 = vector.load %arg14[%c4, %c0_81, %c0_82] : memref<8x2x32xf32, #tpu.memory_space<vmem>>, vector<1x2x32xf32>
    %436 = vector.shape_cast %435 : vector<1x2x32xf32> to vector<2x32xf32>
    %437 = vector.shape_cast %434 : vector<2x32xf32> to vector<1x2x32xf32>
    tpu.vector_store %arg14[%c4, %c0_81, %c0_82], %437 {strides = array<i32>} : memref<8x2x32xf32, #tpu.memory_space<vmem>>, vector<1x2x32xf32>,
    %438 = tpu.concatenate %406, %420 in 1 : vector<2x32xf32>, vector<2x32xf32> -> vector<2x64xf32>
    %cst_83 = arith.constant dense<0.000000e+00> : vector<2x256xf32>
    %439 = tpu.matmul %438, %8, %cst_83 {dimension_numbers = #tpu.dot_dimension_numbers<[1], [0], [0], [1], [0, 0, 1, 1], [], []>} : vector<2x64xf32>, vector<64x256xf32>, vector<2x256xf32> -> vector<2x256xf32>
    %440 = vector.extract_strided_slice %7 {offsets = [0, 4, 0], sizes = [2, 1, 128], strides = [1, 1, 1]} : vector<2x8x256xf32> to vector<2x1x128xf32>
    %441 = vector.shape_cast %440 : vector<2x1x128xf32> to vector<2x128xf32>
    %442 = vector.extract_strided_slice %439 {offsets = [0, 0], sizes = [2, 128], strides = [1, 1]} : vector<2x256xf32> to vector<2x128xf32>
    %443 = arith.addf %441, %442 : vector<2x128xf32>
    %444 = vector.extract_strided_slice %443 {offsets = [0, 0], sizes = [2, 32], strides = [1, 1]} : vector<2x128xf32> to vector<2x32xf32>
    %445 = arith.negf %444 : vector<2x32xf32>
    %446 = math.exp %445 : vector<2x32xf32>
    %cst_84 = arith.constant 1.000000e+00 : f32
    %447 = vector.broadcast %cst_84 : f32 to vector<2x32xf32>
    %448 = arith.addf %447, %446 : vector<2x32xf32>
    %449 = arith.divf %447, %448 : vector<2x32xf32>
    %450 = vector.extract_strided_slice %443 {offsets = [0, 32], sizes = [2, 32], strides = [1, 1]} : vector<2x128xf32> to vector<2x32xf32>
    %451 = arith.negf %450 : vector<2x32xf32>
    %452 = math.exp %451 : vector<2x32xf32>
    %cst_85 = arith.constant 1.000000e+00 : f32
    %453 = vector.broadcast %cst_85 : f32 to vector<2x32xf32>
    %454 = arith.addf %453, %452 : vector<2x32xf32>
    %455 = arith.divf %453, %454 : vector<2x32xf32>
    %456 = vector.extract_strided_slice %443 {offsets = [0, 64], sizes = [2, 32], strides = [1, 1]} : vector<2x128xf32> to vector<2x32xf32>
    %457 = math.tanh %456 : vector<2x32xf32>
    %458 = vector.extract_strided_slice %443 {offsets = [0, 96], sizes = [2, 32], strides = [1, 1]} : vector<2x128xf32> to vector<2x32xf32>
    %459 = arith.negf %458 : vector<2x32xf32>
    %460 = math.exp %459 : vector<2x32xf32>
    %cst_86 = arith.constant 1.000000e+00 : f32
    %461 = vector.broadcast %cst_86 : f32 to vector<2x32xf32>
    %462 = arith.addf %461, %460 : vector<2x32xf32>
    %463 = arith.divf %461, %462 : vector<2x32xf32>
    %464 = arith.mulf %455, %413 : vector<2x32xf32>
    %465 = arith.mulf %449, %457 : vector<2x32xf32>
    %466 = arith.addf %464, %465 : vector<2x32xf32>
    %467 = math.tanh %466 : vector<2x32xf32>
    %468 = arith.mulf %463, %467 : vector<2x32xf32>
    %469 = vector.extract_strided_slice %7 {offsets = [0, 3, 128], sizes = [2, 1, 128], strides = [1, 1, 1]} : vector<2x8x256xf32> to vector<2x1x128xf32>
    %470 = vector.shape_cast %469 : vector<2x1x128xf32> to vector<2x128xf32>
    %471 = vector.extract_strided_slice %439 {offsets = [0, 128], sizes = [2, 128], strides = [1, 1]} : vector<2x256xf32> to vector<2x128xf32>
    %472 = arith.addf %470, %471 : vector<2x128xf32>
    %473 = vector.extract_strided_slice %472 {offsets = [0, 0], sizes = [2, 32], strides = [1, 1]} : vector<2x128xf32> to vector<2x32xf32>
    %474 = arith.negf %473 : vector<2x32xf32>
    %475 = math.exp %474 : vector<2x32xf32>
    %cst_87 = arith.constant 1.000000e+00 : f32
    %476 = vector.broadcast %cst_87 : f32 to vector<2x32xf32>
    %477 = arith.addf %476, %475 : vector<2x32xf32>
    %478 = arith.divf %476, %477 : vector<2x32xf32>
    %479 = vector.extract_strided_slice %472 {offsets = [0, 32], sizes = [2, 32], strides = [1, 1]} : vector<2x128xf32> to vector<2x32xf32>
    %480 = arith.negf %479 : vector<2x32xf32>
    %481 = math.exp %480 : vector<2x32xf32>
    %cst_88 = arith.constant 1.000000e+00 : f32
    %482 = vector.broadcast %cst_88 : f32 to vector<2x32xf32>
    %483 = arith.addf %482, %481 : vector<2x32xf32>
    %484 = arith.divf %482, %483 : vector<2x32xf32>
    %485 = vector.extract_strided_slice %472 {offsets = [0, 64], sizes = [2, 32], strides = [1, 1]} : vector<2x128xf32> to vector<2x32xf32>
    %486 = math.tanh %485 : vector<2x32xf32>
    %487 = vector.extract_strided_slice %472 {offsets = [0, 96], sizes = [2, 32], strides = [1, 1]} : vector<2x128xf32> to vector<2x32xf32>
    %488 = arith.negf %487 : vector<2x32xf32>
    %489 = math.exp %488 : vector<2x32xf32>
    %cst_89 = arith.constant 1.000000e+00 : f32
    %490 = vector.broadcast %cst_89 : f32 to vector<2x32xf32>
    %491 = arith.addf %490, %489 : vector<2x32xf32>
    %492 = arith.divf %490, %491 : vector<2x32xf32>
    %493 = arith.mulf %484, %427 : vector<2x32xf32>
    %494 = arith.mulf %478, %486 : vector<2x32xf32>
    %495 = arith.addf %493, %494 : vector<2x32xf32>
    %496 = math.tanh %495 : vector<2x32xf32>
    %497 = arith.mulf %492, %496 : vector<2x32xf32>
    %cst_90 = arith.constant 4.000000e+00 : f32
    %498 = vector.broadcast %cst_90 : f32 to vector<2x1xf32>
    %499 = arith.cmpf ogt, %9, %498 : vector<2x1xf32>
    %500 = arith.extui %499 : vector<2x1xi1> to vector<2x1xi32>
    %501 = arith.sitofp %500 : vector<2x1xi32> to vector<2x1xf32>
    %cst_91 = arith.constant 3.000000e+00 : f32
    %502 = vector.broadcast %cst_91 : f32 to vector<2x1xf32>
    %503 = arith.cmpf ogt, %9, %502 : vector<2x1xf32>
    %504 = arith.extui %503 : vector<2x1xi1> to vector<2x1xi32>
    %505 = arith.sitofp %504 : vector<2x1xi32> to vector<2x1xf32>
    %506 = vector.broadcast %501 : vector<2x1xf32> to vector<2x32xf32>
    %507 = arith.mulf %506, %468 : vector<2x32xf32>
    %cst_92 = arith.constant 1.000000e+00 : f32
    %508 = vector.broadcast %cst_92 : f32 to vector<2x1xf32>
    %509 = arith.subf %508, %501 : vector<2x1xf32>
    %510 = vector.broadcast %509 : vector<2x1xf32> to vector<2x32xf32>
    %511 = arith.mulf %510, %406 : vector<2x32xf32>
    %512 = arith.addf %507, %511 : vector<2x32xf32>
    %513 = vector.broadcast %501 : vector<2x1xf32> to vector<2x32xf32>
    %514 = arith.mulf %513, %466 : vector<2x32xf32>
    %cst_93 = arith.constant 1.000000e+00 : f32
    %515 = vector.broadcast %cst_93 : f32 to vector<2x1xf32>
    %516 = arith.subf %515, %501 : vector<2x1xf32>
    %517 = vector.broadcast %516 : vector<2x1xf32> to vector<2x32xf32>
    %518 = arith.mulf %517, %413 : vector<2x32xf32>
    %519 = arith.addf %514, %518 : vector<2x32xf32>
    %520 = vector.broadcast %505 : vector<2x1xf32> to vector<2x32xf32>
    %521 = arith.mulf %520, %497 : vector<2x32xf32>
    %cst_94 = arith.constant 1.000000e+00 : f32
    %522 = vector.broadcast %cst_94 : f32 to vector<2x1xf32>
    %523 = arith.subf %522, %505 : vector<2x1xf32>
    %524 = vector.broadcast %523 : vector<2x1xf32> to vector<2x32xf32>
    %525 = arith.mulf %524, %420 : vector<2x32xf32>
    %526 = arith.addf %521, %525 : vector<2x32xf32>
    %527 = vector.broadcast %505 : vector<2x1xf32> to vector<2x32xf32>
    %528 = arith.mulf %527, %495 : vector<2x32xf32>
    %cst_95 = arith.constant 1.000000e+00 : f32
    %529 = vector.broadcast %cst_95 : f32 to vector<2x1xf32>
    %530 = arith.subf %529, %505 : vector<2x1xf32>
    %531 = vector.broadcast %530 : vector<2x1xf32> to vector<2x32xf32>
    %532 = arith.mulf %531, %427 : vector<2x32xf32>
    %533 = arith.addf %528, %532 : vector<2x32xf32>
    %534 = vector.broadcast %501 : vector<2x1xf32> to vector<2x32xf32>
    %535 = arith.mulf %512, %534 : vector<2x32xf32>
    %c4_96 = arith.constant 4 : index
    %c0_97 = arith.constant 0 : index
    %c0_98 = arith.constant 0 : index
    %536 = vector.load %arg13[%c4_96, %c0_97, %c0_98] : memref<8x2x32xf32, #tpu.memory_space<vmem>>, vector<1x2x32xf32>
    %537 = vector.shape_cast %536 : vector<1x2x32xf32> to vector<2x32xf32>
    %538 = vector.shape_cast %535 : vector<2x32xf32> to vector<1x2x32xf32>
    tpu.vector_store %arg13[%c4_96, %c0_97, %c0_98], %538 {strides = array<i32>} : memref<8x2x32xf32, #tpu.memory_space<vmem>>, vector<1x2x32xf32>,
    %539 = vector.broadcast %505 : vector<2x1xf32> to vector<2x32xf32>
    %540 = arith.mulf %526, %539 : vector<2x32xf32>
    %c3_99 = arith.constant 3 : index
    %c0_100 = arith.constant 0 : index
    %c0_101 = arith.constant 0 : index
    %541 = vector.load %arg14[%c3_99, %c0_100, %c0_101] : memref<8x2x32xf32, #tpu.memory_space<vmem>>, vector<1x2x32xf32>
    %542 = vector.shape_cast %541 : vector<1x2x32xf32> to vector<2x32xf32>
    %543 = vector.shape_cast %540 : vector<2x32xf32> to vector<1x2x32xf32>
    tpu.vector_store %arg14[%c3_99, %c0_100, %c0_101], %543 {strides = array<i32>} : memref<8x2x32xf32, #tpu.memory_space<vmem>>, vector<1x2x32xf32>,
    %544 = tpu.concatenate %512, %526 in 1 : vector<2x32xf32>, vector<2x32xf32> -> vector<2x64xf32>
    %cst_102 = arith.constant dense<0.000000e+00> : vector<2x256xf32>
    %545 = tpu.matmul %544, %8, %cst_102 {dimension_numbers = #tpu.dot_dimension_numbers<[1], [0], [0], [1], [0, 0, 1, 1], [], []>} : vector<2x64xf32>, vector<64x256xf32>, vector<2x256xf32> -> vector<2x256xf32>
    %546 = vector.extract_strided_slice %7 {offsets = [0, 5, 0], sizes = [2, 1, 128], strides = [1, 1, 1]} : vector<2x8x256xf32> to vector<2x1x128xf32>
    %547 = vector.shape_cast %546 : vector<2x1x128xf32> to vector<2x128xf32>
    %548 = vector.extract_strided_slice %545 {offsets = [0, 0], sizes = [2, 128], strides = [1, 1]} : vector<2x256xf32> to vector<2x128xf32>
    %549 = arith.addf %547, %548 : vector<2x128xf32>
    %550 = vector.extract_strided_slice %549 {offsets = [0, 0], sizes = [2, 32], strides = [1, 1]} : vector<2x128xf32> to vector<2x32xf32>
    %551 = arith.negf %550 : vector<2x32xf32>
    %552 = math.exp %551 : vector<2x32xf32>
    %cst_103 = arith.constant 1.000000e+00 : f32
    %553 = vector.broadcast %cst_103 : f32 to vector<2x32xf32>
    %554 = arith.addf %553, %552 : vector<2x32xf32>
    %555 = arith.divf %553, %554 : vector<2x32xf32>
    %556 = vector.extract_strided_slice %549 {offsets = [0, 32], sizes = [2, 32], strides = [1, 1]} : vector<2x128xf32> to vector<2x32xf32>
    %557 = arith.negf %556 : vector<2x32xf32>
    %558 = math.exp %557 : vector<2x32xf32>
    %cst_104 = arith.constant 1.000000e+00 : f32
    %559 = vector.broadcast %cst_104 : f32 to vector<2x32xf32>
    %560 = arith.addf %559, %558 : vector<2x32xf32>
    %561 = arith.divf %559, %560 : vector<2x32xf32>
    %562 = vector.extract_strided_slice %549 {offsets = [0, 64], sizes = [2, 32], strides = [1, 1]} : vector<2x128xf32> to vector<2x32xf32>
    %563 = math.tanh %562 : vector<2x32xf32>
    %564 = vector.extract_strided_slice %549 {offsets = [0, 96], sizes = [2, 32], strides = [1, 1]} : vector<2x128xf32> to vector<2x32xf32>
    %565 = arith.negf %564 : vector<2x32xf32>
    %566 = math.exp %565 : vector<2x32xf32>
    %cst_105 = arith.constant 1.000000e+00 : f32
    %567 = vector.broadcast %cst_105 : f32 to vector<2x32xf32>
    %568 = arith.addf %567, %566 : vector<2x32xf32>
    %569 = arith.divf %567, %568 : vector<2x32xf32>
    %570 = arith.mulf %561, %519 : vector<2x32xf32>
    %571 = arith.mulf %555, %563 : vector<2x32xf32>
    %572 = arith.addf %570, %571 : vector<2x32xf32>
    %573 = math.tanh %572 : vector<2x32xf32>
    %574 = arith.mulf %569, %573 : vector<2x32xf32>
    %575 = vector.extract_strided_slice %7 {offsets = [0, 2, 128], sizes = [2, 1, 128], strides = [1, 1, 1]} : vector<2x8x256xf32> to vector<2x1x128xf32>
    %576 = vector.shape_cast %575 : vector<2x1x128xf32> to vector<2x128xf32>
    %577 = vector.extract_strided_slice %545 {offsets = [0, 128], sizes = [2, 128], strides = [1, 1]} : vector<2x256xf32> to vector<2x128xf32>
    %578 = arith.addf %576, %577 : vector<2x128xf32>
    %579 = vector.extract_strided_slice %578 {offsets = [0, 0], sizes = [2, 32], strides = [1, 1]} : vector<2x128xf32> to vector<2x32xf32>
    %580 = arith.negf %579 : vector<2x32xf32>
    %581 = math.exp %580 : vector<2x32xf32>
    %cst_106 = arith.constant 1.000000e+00 : f32
    %582 = vector.broadcast %cst_106 : f32 to vector<2x32xf32>
    %583 = arith.addf %582, %581 : vector<2x32xf32>
    %584 = arith.divf %582, %583 : vector<2x32xf32>
    %585 = vector.extract_strided_slice %578 {offsets = [0, 32], sizes = [2, 32], strides = [1, 1]} : vector<2x128xf32> to vector<2x32xf32>
    %586 = arith.negf %585 : vector<2x32xf32>
    %587 = math.exp %586 : vector<2x32xf32>
    %cst_107 = arith.constant 1.000000e+00 : f32
    %588 = vector.broadcast %cst_107 : f32 to vector<2x32xf32>
    %589 = arith.addf %588, %587 : vector<2x32xf32>
    %590 = arith.divf %588, %589 : vector<2x32xf32>
    %591 = vector.extract_strided_slice %578 {offsets = [0, 64], sizes = [2, 32], strides = [1, 1]} : vector<2x128xf32> to vector<2x32xf32>
    %592 = math.tanh %591 : vector<2x32xf32>
    %593 = vector.extract_strided_slice %578 {offsets = [0, 96], sizes = [2, 32], strides = [1, 1]} : vector<2x128xf32> to vector<2x32xf32>
    %594 = arith.negf %593 : vector<2x32xf32>
    %595 = math.exp %594 : vector<2x32xf32>
    %cst_108 = arith.constant 1.000000e+00 : f32
    %596 = vector.broadcast %cst_108 : f32 to vector<2x32xf32>
    %597 = arith.addf %596, %595 : vector<2x32xf32>
    %598 = arith.divf %596, %597 : vector<2x32xf32>
    %599 = arith.mulf %590, %533 : vector<2x32xf32>
    %600 = arith.mulf %584, %592 : vector<2x32xf32>
    %601 = arith.addf %599, %600 : vector<2x32xf32>
    %602 = math.tanh %601 : vector<2x32xf32>
    %603 = arith.mulf %598, %602 : vector<2x32xf32>
    %cst_109 = arith.constant 5.000000e+00 : f32
    %604 = vector.broadcast %cst_109 : f32 to vector<2x1xf32>
    %605 = arith.cmpf ogt, %9, %604 : vector<2x1xf32>
    %606 = arith.extui %605 : vector<2x1xi1> to vector<2x1xi32>
    %607 = arith.sitofp %606 : vector<2x1xi32> to vector<2x1xf32>
    %cst_110 = arith.constant 2.000000e+00 : f32
    %608 = vector.broadcast %cst_110 : f32 to vector<2x1xf32>
    %609 = arith.cmpf ogt, %9, %608 : vector<2x1xf32>
    %610 = arith.extui %609 : vector<2x1xi1> to vector<2x1xi32>
    %611 = arith.sitofp %610 : vector<2x1xi32> to vector<2x1xf32>
    %612 = vector.broadcast %607 : vector<2x1xf32> to vector<2x32xf32>
    %613 = arith.mulf %612, %574 : vector<2x32xf32>
    %cst_111 = arith.constant 1.000000e+00 : f32
    %614 = vector.broadcast %cst_111 : f32 to vector<2x1xf32>
    %615 = arith.subf %614, %607 : vector<2x1xf32>
    %616 = vector.broadcast %615 : vector<2x1xf32> to vector<2x32xf32>
    %617 = arith.mulf %616, %512 : vector<2x32xf32>
    %618 = arith.addf %613, %617 : vector<2x32xf32>
    %619 = vector.broadcast %607 : vector<2x1xf32> to vector<2x32xf32>
    %620 = arith.mulf %619, %572 : vector<2x32xf32>
    %cst_112 = arith.constant 1.000000e+00 : f32
    %621 = vector.broadcast %cst_112 : f32 to vector<2x1xf32>
    %622 = arith.subf %621, %607 : vector<2x1xf32>
    %623 = vector.broadcast %622 : vector<2x1xf32> to vector<2x32xf32>
    %624 = arith.mulf %623, %519 : vector<2x32xf32>
    %625 = arith.addf %620, %624 : vector<2x32xf32>
    %626 = vector.broadcast %611 : vector<2x1xf32> to vector<2x32xf32>
    %627 = arith.mulf %626, %603 : vector<2x32xf32>
    %cst_113 = arith.constant 1.000000e+00 : f32
    %628 = vector.broadcast %cst_113 : f32 to vector<2x1xf32>
    %629 = arith.subf %628, %611 : vector<2x1xf32>
    %630 = vector.broadcast %629 : vector<2x1xf32> to vector<2x32xf32>
    %631 = arith.mulf %630, %526 : vector<2x32xf32>
    %632 = arith.addf %627, %631 : vector<2x32xf32>
    %633 = vector.broadcast %611 : vector<2x1xf32> to vector<2x32xf32>
    %634 = arith.mulf %633, %601 : vector<2x32xf32>
    %cst_114 = arith.constant 1.000000e+00 : f32
    %635 = vector.broadcast %cst_114 : f32 to vector<2x1xf32>
    %636 = arith.subf %635, %611 : vector<2x1xf32>
    %637 = vector.broadcast %636 : vector<2x1xf32> to vector<2x32xf32>
    %638 = arith.mulf %637, %533 : vector<2x32xf32>
    %639 = arith.addf %634, %638 : vector<2x32xf32>
    %640 = vector.broadcast %607 : vector<2x1xf32> to vector<2x32xf32>
    %641 = arith.mulf %618, %640 : vector<2x32xf32>
    %c5_115 = arith.constant 5 : index
    %c0_116 = arith.constant 0 : index
    %c0_117 = arith.constant 0 : index
    %642 = vector.load %arg13[%c5_115, %c0_116, %c0_117] : memref<8x2x32xf32, #tpu.memory_space<vmem>>, vector<1x2x32xf32>
    %643 = vector.shape_cast %642 : vector<1x2x32xf32> to vector<2x32xf32>
    %644 = vector.shape_cast %641 : vector<2x32xf32> to vector<1x2x32xf32>
    tpu.vector_store %arg13[%c5_115, %c0_116, %c0_117], %644 {strides = array<i32>} : memref<8x2x32xf32, #tpu.memory_space<vmem>>, vector<1x2x32xf32>,
    %645 = vector.broadcast %611 : vector<2x1xf32> to vector<2x32xf32>
    %646 = arith.mulf %632, %645 : vector<2x32xf32>
    %c2_118 = arith.constant 2 : index
    %c0_119 = arith.constant 0 : index
    %c0_120 = arith.constant 0 : index
    %647 = vector.load %arg14[%c2_118, %c0_119, %c0_120] : memref<8x2x32xf32, #tpu.memory_space<vmem>>, vector<1x2x32xf32>
    %648 = vector.shape_cast %647 : vector<1x2x32xf32> to vector<2x32xf32>
    %649 = vector.shape_cast %646 : vector<2x32xf32> to vector<1x2x32xf32>
    tpu.vector_store %arg14[%c2_118, %c0_119, %c0_120], %649 {strides = array<i32>} : memref<8x2x32xf32, #tpu.memory_space<vmem>>, vector<1x2x32xf32>,
    %650 = tpu.concatenate %618, %632 in 1 : vector<2x32xf32>, vector<2x32xf32> -> vector<2x64xf32>
    %cst_121 = arith.constant dense<0.000000e+00> : vector<2x256xf32>
    %651 = tpu.matmul %650, %8, %cst_121 {dimension_numbers = #tpu.dot_dimension_numbers<[1], [0], [0], [1], [0, 0, 1, 1], [], []>} : vector<2x64xf32>, vector<64x256xf32>, vector<2x256xf32> -> vector<2x256xf32>
    %652 = vector.extract_strided_slice %7 {offsets = [0, 6, 0], sizes = [2, 1, 128], strides = [1, 1, 1]} : vector<2x8x256xf32> to vector<2x1x128xf32>
    %653 = vector.shape_cast %652 : vector<2x1x128xf32> to vector<2x128xf32>
    %654 = vector.extract_strided_slice %651 {offsets = [0, 0], sizes = [2, 128], strides = [1, 1]} : vector<2x256xf32> to vector<2x128xf32>
    %655 = arith.addf %653, %654 : vector<2x128xf32>
    %656 = vector.extract_strided_slice %655 {offsets = [0, 0], sizes = [2, 32], strides = [1, 1]} : vector<2x128xf32> to vector<2x32xf32>
    %657 = arith.negf %656 : vector<2x32xf32>
    %658 = math.exp %657 : vector<2x32xf32>
    %cst_122 = arith.constant 1.000000e+00 : f32
    %659 = vector.broadcast %cst_122 : f32 to vector<2x32xf32>
    %660 = arith.addf %659, %658 : vector<2x32xf32>
    %661 = arith.divf %659, %660 : vector<2x32xf32>
    %662 = vector.extract_strided_slice %655 {offsets = [0, 32], sizes = [2, 32], strides = [1, 1]} : vector<2x128xf32> to vector<2x32xf32>
    %663 = arith.negf %662 : vector<2x32xf32>
    %664 = math.exp %663 : vector<2x32xf32>
    %cst_123 = arith.constant 1.000000e+00 : f32
    %665 = vector.broadcast %cst_123 : f32 to vector<2x32xf32>
    %666 = arith.addf %665, %664 : vector<2x32xf32>
    %667 = arith.divf %665, %666 : vector<2x32xf32>
    %668 = vector.extract_strided_slice %655 {offsets = [0, 64], sizes = [2, 32], strides = [1, 1]} : vector<2x128xf32> to vector<2x32xf32>
    %669 = math.tanh %668 : vector<2x32xf32>
    %670 = vector.extract_strided_slice %655 {offsets = [0, 96], sizes = [2, 32], strides = [1, 1]} : vector<2x128xf32> to vector<2x32xf32>
    %671 = arith.negf %670 : vector<2x32xf32>
    %672 = math.exp %671 : vector<2x32xf32>
    %cst_124 = arith.constant 1.000000e+00 : f32
    %673 = vector.broadcast %cst_124 : f32 to vector<2x32xf32>
    %674 = arith.addf %673, %672 : vector<2x32xf32>
    %675 = arith.divf %673, %674 : vector<2x32xf32>
    %676 = arith.mulf %667, %625 : vector<2x32xf32>
    %677 = arith.mulf %661, %669 : vector<2x32xf32>
    %678 = arith.addf %676, %677 : vector<2x32xf32>
    %679 = math.tanh %678 : vector<2x32xf32>
    %680 = arith.mulf %675, %679 : vector<2x32xf32>
    %681 = vector.extract_strided_slice %7 {offsets = [0, 1, 128], sizes = [2, 1, 128], strides = [1, 1, 1]} : vector<2x8x256xf32> to vector<2x1x128xf32>
    %682 = vector.shape_cast %681 : vector<2x1x128xf32> to vector<2x128xf32>
    %683 = vector.extract_strided_slice %651 {offsets = [0, 128], sizes = [2, 128], strides = [1, 1]} : vector<2x256xf32> to vector<2x128xf32>
    %684 = arith.addf %682, %683 : vector<2x128xf32>
    %685 = vector.extract_strided_slice %684 {offsets = [0, 0], sizes = [2, 32], strides = [1, 1]} : vector<2x128xf32> to vector<2x32xf32>
    %686 = arith.negf %685 : vector<2x32xf32>
    %687 = math.exp %686 : vector<2x32xf32>
    %cst_125 = arith.constant 1.000000e+00 : f32
    %688 = vector.broadcast %cst_125 : f32 to vector<2x32xf32>
    %689 = arith.addf %688, %687 : vector<2x32xf32>
    %690 = arith.divf %688, %689 : vector<2x32xf32>
    %691 = vector.extract_strided_slice %684 {offsets = [0, 32], sizes = [2, 32], strides = [1, 1]} : vector<2x128xf32> to vector<2x32xf32>
    %692 = arith.negf %691 : vector<2x32xf32>
    %693 = math.exp %692 : vector<2x32xf32>
    %cst_126 = arith.constant 1.000000e+00 : f32
    %694 = vector.broadcast %cst_126 : f32 to vector<2x32xf32>
    %695 = arith.addf %694, %693 : vector<2x32xf32>
    %696 = arith.divf %694, %695 : vector<2x32xf32>
    %697 = vector.extract_strided_slice %684 {offsets = [0, 64], sizes = [2, 32], strides = [1, 1]} : vector<2x128xf32> to vector<2x32xf32>
    %698 = math.tanh %697 : vector<2x32xf32>
    %699 = vector.extract_strided_slice %684 {offsets = [0, 96], sizes = [2, 32], strides = [1, 1]} : vector<2x128xf32> to vector<2x32xf32>
    %700 = arith.negf %699 : vector<2x32xf32>
    %701 = math.exp %700 : vector<2x32xf32>
    %cst_127 = arith.constant 1.000000e+00 : f32
    %702 = vector.broadcast %cst_127 : f32 to vector<2x32xf32>
    %703 = arith.addf %702, %701 : vector<2x32xf32>
    %704 = arith.divf %702, %703 : vector<2x32xf32>
    %705 = arith.mulf %696, %639 : vector<2x32xf32>
    %706 = arith.mulf %690, %698 : vector<2x32xf32>
    %707 = arith.addf %705, %706 : vector<2x32xf32>
    %708 = math.tanh %707 : vector<2x32xf32>
    %709 = arith.mulf %704, %708 : vector<2x32xf32>
    %cst_128 = arith.constant 6.000000e+00 : f32
    %710 = vector.broadcast %cst_128 : f32 to vector<2x1xf32>
    %711 = arith.cmpf ogt, %9, %710 : vector<2x1xf32>
    %712 = arith.extui %711 : vector<2x1xi1> to vector<2x1xi32>
    %713 = arith.sitofp %712 : vector<2x1xi32> to vector<2x1xf32>
    %cst_129 = arith.constant 1.000000e+00 : f32
    %714 = vector.broadcast %cst_129 : f32 to vector<2x1xf32>
    %715 = arith.cmpf ogt, %9, %714 : vector<2x1xf32>
    %716 = arith.extui %715 : vector<2x1xi1> to vector<2x1xi32>
    %717 = arith.sitofp %716 : vector<2x1xi32> to vector<2x1xf32>
    %718 = vector.broadcast %713 : vector<2x1xf32> to vector<2x32xf32>
    %719 = arith.mulf %718, %680 : vector<2x32xf32>
    %cst_130 = arith.constant 1.000000e+00 : f32
    %720 = vector.broadcast %cst_130 : f32 to vector<2x1xf32>
    %721 = arith.subf %720, %713 : vector<2x1xf32>
    %722 = vector.broadcast %721 : vector<2x1xf32> to vector<2x32xf32>
    %723 = arith.mulf %722, %618 : vector<2x32xf32>
    %724 = arith.addf %719, %723 : vector<2x32xf32>
    %725 = vector.broadcast %713 : vector<2x1xf32> to vector<2x32xf32>
    %726 = arith.mulf %725, %678 : vector<2x32xf32>
    %cst_131 = arith.constant 1.000000e+00 : f32
    %727 = vector.broadcast %cst_131 : f32 to vector<2x1xf32>
    %728 = arith.subf %727, %713 : vector<2x1xf32>
    %729 = vector.broadcast %728 : vector<2x1xf32> to vector<2x32xf32>
    %730 = arith.mulf %729, %625 : vector<2x32xf32>
    %731 = arith.addf %726, %730 : vector<2x32xf32>
    %732 = vector.broadcast %717 : vector<2x1xf32> to vector<2x32xf32>
    %733 = arith.mulf %732, %709 : vector<2x32xf32>
    %cst_132 = arith.constant 1.000000e+00 : f32
    %734 = vector.broadcast %cst_132 : f32 to vector<2x1xf32>
    %735 = arith.subf %734, %717 : vector<2x1xf32>
    %736 = vector.broadcast %735 : vector<2x1xf32> to vector<2x32xf32>
    %737 = arith.mulf %736, %632 : vector<2x32xf32>
    %738 = arith.addf %733, %737 : vector<2x32xf32>
    %739 = vector.broadcast %717 : vector<2x1xf32> to vector<2x32xf32>
    %740 = arith.mulf %739, %707 : vector<2x32xf32>
    %cst_133 = arith.constant 1.000000e+00 : f32
    %741 = vector.broadcast %cst_133 : f32 to vector<2x1xf32>
    %742 = arith.subf %741, %717 : vector<2x1xf32>
    %743 = vector.broadcast %742 : vector<2x1xf32> to vector<2x32xf32>
    %744 = arith.mulf %743, %639 : vector<2x32xf32>
    %745 = arith.addf %740, %744 : vector<2x32xf32>
    %746 = vector.broadcast %713 : vector<2x1xf32> to vector<2x32xf32>
    %747 = arith.mulf %724, %746 : vector<2x32xf32>
    %c6_134 = arith.constant 6 : index
    %c0_135 = arith.constant 0 : index
    %c0_136 = arith.constant 0 : index
    %748 = vector.load %arg13[%c6_134, %c0_135, %c0_136] : memref<8x2x32xf32, #tpu.memory_space<vmem>>, vector<1x2x32xf32>
    %749 = vector.shape_cast %748 : vector<1x2x32xf32> to vector<2x32xf32>
    %750 = vector.shape_cast %747 : vector<2x32xf32> to vector<1x2x32xf32>
    tpu.vector_store %arg13[%c6_134, %c0_135, %c0_136], %750 {strides = array<i32>} : memref<8x2x32xf32, #tpu.memory_space<vmem>>, vector<1x2x32xf32>,
    %751 = vector.broadcast %717 : vector<2x1xf32> to vector<2x32xf32>
    %752 = arith.mulf %738, %751 : vector<2x32xf32>
    %c1_137 = arith.constant 1 : index
    %c0_138 = arith.constant 0 : index
    %c0_139 = arith.constant 0 : index
    %753 = vector.load %arg14[%c1_137, %c0_138, %c0_139] : memref<8x2x32xf32, #tpu.memory_space<vmem>>, vector<1x2x32xf32>
    %754 = vector.shape_cast %753 : vector<1x2x32xf32> to vector<2x32xf32>
    %755 = vector.shape_cast %752 : vector<2x32xf32> to vector<1x2x32xf32>
    tpu.vector_store %arg14[%c1_137, %c0_138, %c0_139], %755 {strides = array<i32>} : memref<8x2x32xf32, #tpu.memory_space<vmem>>, vector<1x2x32xf32>,
    %756 = tpu.concatenate %724, %738 in 1 : vector<2x32xf32>, vector<2x32xf32> -> vector<2x64xf32>
    %cst_140 = arith.constant dense<0.000000e+00> : vector<2x256xf32>
    %757 = tpu.matmul %756, %8, %cst_140 {dimension_numbers = #tpu.dot_dimension_numbers<[1], [0], [0], [1], [0, 0, 1, 1], [], []>} : vector<2x64xf32>, vector<64x256xf32>, vector<2x256xf32> -> vector<2x256xf32>
    %758 = vector.extract_strided_slice %7 {offsets = [0, 7, 0], sizes = [2, 1, 128], strides = [1, 1, 1]} : vector<2x8x256xf32> to vector<2x1x128xf32>
    %759 = vector.shape_cast %758 : vector<2x1x128xf32> to vector<2x128xf32>
    %760 = vector.extract_strided_slice %757 {offsets = [0, 0], sizes = [2, 128], strides = [1, 1]} : vector<2x256xf32> to vector<2x128xf32>
    %761 = arith.addf %759, %760 : vector<2x128xf32>
    %762 = vector.extract_strided_slice %761 {offsets = [0, 0], sizes = [2, 32], strides = [1, 1]} : vector<2x128xf32> to vector<2x32xf32>
    %763 = arith.negf %762 : vector<2x32xf32>
    %764 = math.exp %763 : vector<2x32xf32>
    %cst_141 = arith.constant 1.000000e+00 : f32
    %765 = vector.broadcast %cst_141 : f32 to vector<2x32xf32>
    %766 = arith.addf %765, %764 : vector<2x32xf32>
    %767 = arith.divf %765, %766 : vector<2x32xf32>
    %768 = vector.extract_strided_slice %761 {offsets = [0, 32], sizes = [2, 32], strides = [1, 1]} : vector<2x128xf32> to vector<2x32xf32>
    %769 = arith.negf %768 : vector<2x32xf32>
    %770 = math.exp %769 : vector<2x32xf32>
    %cst_142 = arith.constant 1.000000e+00 : f32
    %771 = vector.broadcast %cst_142 : f32 to vector<2x32xf32>
    %772 = arith.addf %771, %770 : vector<2x32xf32>
    %773 = arith.divf %771, %772 : vector<2x32xf32>
    %774 = vector.extract_strided_slice %761 {offsets = [0, 64], sizes = [2, 32], strides = [1, 1]} : vector<2x128xf32> to vector<2x32xf32>
    %775 = math.tanh %774 : vector<2x32xf32>
    %776 = vector.extract_strided_slice %761 {offsets = [0, 96], sizes = [2, 32], strides = [1, 1]} : vector<2x128xf32> to vector<2x32xf32>
    %777 = arith.negf %776 : vector<2x32xf32>
    %778 = math.exp %777 : vector<2x32xf32>
    %cst_143 = arith.constant 1.000000e+00 : f32
    %779 = vector.broadcast %cst_143 : f32 to vector<2x32xf32>
    %780 = arith.addf %779, %778 : vector<2x32xf32>
    %781 = arith.divf %779, %780 : vector<2x32xf32>
    %782 = arith.mulf %773, %731 : vector<2x32xf32>
    %783 = arith.mulf %767, %775 : vector<2x32xf32>
    %784 = arith.addf %782, %783 : vector<2x32xf32>
    %785 = math.tanh %784 : vector<2x32xf32>
    %786 = arith.mulf %781, %785 : vector<2x32xf32>
    %787 = vector.extract_strided_slice %7 {offsets = [0, 0, 128], sizes = [2, 1, 128], strides = [1, 1, 1]} : vector<2x8x256xf32> to vector<2x1x128xf32>
    %788 = vector.shape_cast %787 : vector<2x1x128xf32> to vector<2x128xf32>
    %789 = vector.extract_strided_slice %757 {offsets = [0, 128], sizes = [2, 128], strides = [1, 1]} : vector<2x256xf32> to vector<2x128xf32>
    %790 = arith.addf %788, %789 : vector<2x128xf32>
    %791 = vector.extract_strided_slice %790 {offsets = [0, 0], sizes = [2, 32], strides = [1, 1]} : vector<2x128xf32> to vector<2x32xf32>
    %792 = arith.negf %791 : vector<2x32xf32>
    %793 = math.exp %792 : vector<2x32xf32>
    %cst_144 = arith.constant 1.000000e+00 : f32
    %794 = vector.broadcast %cst_144 : f32 to vector<2x32xf32>
    %795 = arith.addf %794, %793 : vector<2x32xf32>
    %796 = arith.divf %794, %795 : vector<2x32xf32>
    %797 = vector.extract_strided_slice %790 {offsets = [0, 32], sizes = [2, 32], strides = [1, 1]} : vector<2x128xf32> to vector<2x32xf32>
    %798 = arith.negf %797 : vector<2x32xf32>
    %799 = math.exp %798 : vector<2x32xf32>
    %cst_145 = arith.constant 1.000000e+00 : f32
    %800 = vector.broadcast %cst_145 : f32 to vector<2x32xf32>
    %801 = arith.addf %800, %799 : vector<2x32xf32>
    %802 = arith.divf %800, %801 : vector<2x32xf32>
    %803 = vector.extract_strided_slice %790 {offsets = [0, 64], sizes = [2, 32], strides = [1, 1]} : vector<2x128xf32> to vector<2x32xf32>
    %804 = math.tanh %803 : vector<2x32xf32>
    %805 = vector.extract_strided_slice %790 {offsets = [0, 96], sizes = [2, 32], strides = [1, 1]} : vector<2x128xf32> to vector<2x32xf32>
    %806 = arith.negf %805 : vector<2x32xf32>
    %807 = math.exp %806 : vector<2x32xf32>
    %cst_146 = arith.constant 1.000000e+00 : f32
    %808 = vector.broadcast %cst_146 : f32 to vector<2x32xf32>
    %809 = arith.addf %808, %807 : vector<2x32xf32>
    %810 = arith.divf %808, %809 : vector<2x32xf32>
    %811 = arith.mulf %802, %745 : vector<2x32xf32>
    %812 = arith.mulf %796, %804 : vector<2x32xf32>
    %813 = arith.addf %811, %812 : vector<2x32xf32>
    %814 = math.tanh %813 : vector<2x32xf32>
    %815 = arith.mulf %810, %814 : vector<2x32xf32>
    %cst_147 = arith.constant 7.000000e+00 : f32
    %816 = vector.broadcast %cst_147 : f32 to vector<2x1xf32>
    %817 = arith.cmpf ogt, %9, %816 : vector<2x1xf32>
    %818 = arith.extui %817 : vector<2x1xi1> to vector<2x1xi32>
    %819 = arith.sitofp %818 : vector<2x1xi32> to vector<2x1xf32>
    %cst_148 = arith.constant 0.000000e+00 : f32
    %820 = vector.broadcast %cst_148 : f32 to vector<2x1xf32>
    %821 = arith.cmpf ogt, %9, %820 : vector<2x1xf32>
    %822 = arith.extui %821 : vector<2x1xi1> to vector<2x1xi32>
    %823 = arith.sitofp %822 : vector<2x1xi32> to vector<2x1xf32>
    %824 = vector.broadcast %819 : vector<2x1xf32> to vector<2x32xf32>
    %825 = arith.mulf %824, %786 : vector<2x32xf32>
    %cst_149 = arith.constant 1.000000e+00 : f32
    %826 = vector.broadcast %cst_149 : f32 to vector<2x1xf32>
    %827 = arith.subf %826, %819 : vector<2x1xf32>
    %828 = vector.broadcast %827 : vector<2x1xf32> to vector<2x32xf32>
    %829 = arith.mulf %828, %724 : vector<2x32xf32>
    %830 = arith.addf %825, %829 : vector<2x32xf32>
    %831 = vector.broadcast %823 : vector<2x1xf32> to vector<2x32xf32>
    %832 = arith.mulf %831, %815 : vector<2x32xf32>
    %cst_150 = arith.constant 1.000000e+00 : f32
    %833 = vector.broadcast %cst_150 : f32 to vector<2x1xf32>
    %834 = arith.subf %833, %823 : vector<2x1xf32>
    %835 = vector.broadcast %834 : vector<2x1xf32> to vector<2x32xf32>
    %836 = arith.mulf %835, %738 : vector<2x32xf32>
    %837 = arith.addf %832, %836 : vector<2x32xf32>
    %838 = vector.broadcast %819 : vector<2x1xf32> to vector<2x32xf32>
    %839 = arith.mulf %830, %838 : vector<2x32xf32>
    %c7_151 = arith.constant 7 : index
    %c0_152 = arith.constant 0 : index
    %c0_153 = arith.constant 0 : index
    %840 = vector.load %arg13[%c7_151, %c0_152, %c0_153] : memref<8x2x32xf32, #tpu.memory_space<vmem>>, vector<1x2x32xf32>
    %841 = vector.shape_cast %840 : vector<1x2x32xf32> to vector<2x32xf32>
    %842 = vector.shape_cast %839 : vector<2x32xf32> to vector<1x2x32xf32>
    tpu.vector_store %arg13[%c7_151, %c0_152, %c0_153], %842 {strides = array<i32>} : memref<8x2x32xf32, #tpu.memory_space<vmem>>, vector<1x2x32xf32>,
    %843 = vector.broadcast %823 : vector<2x1xf32> to vector<2x32xf32>
    %844 = arith.mulf %837, %843 : vector<2x32xf32>
    %c0_154 = arith.constant 0 : index
    %c0_155 = arith.constant 0 : index
    %c0_156 = arith.constant 0 : index
    %845 = vector.load %arg14[%c0_154, %c0_155, %c0_156] : memref<8x2x32xf32, #tpu.memory_space<vmem>>, vector<1x2x32xf32>
    %846 = vector.shape_cast %845 : vector<1x2x32xf32> to vector<2x32xf32>
    %847 = vector.shape_cast %844 : vector<2x32xf32> to vector<1x2x32xf32>
    tpu.vector_store %arg14[%c0_154, %c0_155, %c0_156], %847 {strides = array<i32>} : memref<8x2x32xf32, #tpu.memory_space<vmem>>, vector<1x2x32xf32>,
    %c0_157 = arith.constant 0 : index
    %c0_158 = arith.constant 0 : index
    %c0_159 = arith.constant 0 : index
    %848 = vector.load %arg13[%c0_157, %c0_158, %c0_159] : memref<8x2x32xf32, #tpu.memory_space<vmem>>, vector<8x2x32xf32>
    %c0_160 = arith.constant 0 : index
    %c0_161 = arith.constant 0 : index
    %c0_162 = arith.constant 0 : index
    %849 = vector.load %arg14[%c0_160, %c0_161, %c0_162] : memref<8x2x32xf32, #tpu.memory_space<vmem>>, vector<8x2x32xf32>
    %850 = tpu.concatenate %848, %849 in 2 : vector<8x2x32xf32>, vector<8x2x32xf32> -> vector<8x2x64xf32>
    %c0_163 = arith.constant 0 : index
    %c0_164 = arith.constant 0 : index
    %c0_165 = arith.constant 0 : index
    %851 = vector.load %arg1[%c0_163, %c0_164, %c0_165] : memref<2x8x8xf32, #tpu.memory_space<vmem>>, vector<2x8x8xf32>
    %c0_166 = arith.constant 0 : index
    %c0_167 = arith.constant 0 : index
    %c0_168 = arith.constant 0 : index
    %852 = vector.load %arg2[%c0_166, %c0_167, %c0_168] : memref<2x8x1xf32, #tpu.memory_space<vmem>>, vector<2x8x1xf32>
    %853 = vector.extract_strided_slice %850 {offsets = [0, 0, 0], sizes = [8, 1, 64], strides = [1, 1, 1]} : vector<8x2x64xf32> to vector<8x1x64xf32>
    %854 = vector.shape_cast %853 : vector<8x1x64xf32> to vector<8x64xf32>
    %855 = vector.extract_strided_slice %851 {offsets = [0, 0, 0], sizes = [1, 8, 8], strides = [1, 1, 1]} : vector<2x8x8xf32> to vector<1x8x8xf32>
    %856 = vector.shape_cast %855 : vector<1x8x8xf32> to vector<8x8xf32>
    %cst_169 = arith.constant dense<0.000000e+00> : vector<8xf32>
    %857 = vector.multi_reduction <add>, %856, %cst_169 [1] : vector<8x8xf32> to vector<8xf32>
    %858 = vector.shape_cast %857 : vector<8xf32> to vector<8x1xf32>
    %cst_170 = arith.constant 1.000000e+00 : f32
    %859 = vector.broadcast %cst_170 : f32 to vector<8x1xf32>
    %860 = arith.addf %858, %859 : vector<8x1xf32>
    %861 = tpu.reciprocal %860 {approx = true} : vector<8x1xf32> -> vector<8x1xf32>
    %c0_171 = arith.constant 0 : index
    %c0_172 = arith.constant 0 : index
    %862 = vector.load %arg7[%c0_171, %c0_172] : memref<64x32xf32, #tpu.memory_space<vmem>>, vector<64x32xf32>
    %c0_173 = arith.constant 0 : index
    %c0_174 = arith.constant 0 : index
    %863 = vector.load %arg8[%c0_173, %c0_174] : memref<1x32xf32, #tpu.memory_space<vmem>>, vector<1x32xf32>
    %cst_175 = arith.constant dense<0.000000e+00> : vector<8x32xf32>
    %864 = tpu.matmul %854, %862, %cst_175 {dimension_numbers = #tpu.dot_dimension_numbers<[1], [0], [0], [1], [0, 0, 1, 1], [], []>} : vector<8x64xf32>, vector<64x32xf32>, vector<8x32xf32> -> vector<8x32xf32>
    %cst_176 = arith.constant dense<0.000000e+00> : vector<8x32xf32>
    %865 = tpu.matmul %856, %864, %cst_176 {dimension_numbers = #tpu.dot_dimension_numbers<[1], [0], [0], [1], [0, 0, 1, 1], [], []>} : vector<8x8xf32>, vector<8x32xf32>, vector<8x32xf32> -> vector<8x32xf32>
    %866 = vector.broadcast %863 : vector<1x32xf32> to vector<8x32xf32>
    %867 = arith.addf %865, %866 : vector<8x32xf32>
    %868 = vector.broadcast %861 : vector<8x1xf32> to vector<8x32xf32>
    %869 = arith.mulf %867, %868 : vector<8x32xf32>
    %cst_177 = arith.constant 0.000000e+00 : f32
    %870 = vector.broadcast %cst_177 : f32 to vector<8x32xf32>
    %871 = arith.maximumf %869, %870 : vector<8x32xf32>
    %c0_178 = arith.constant 0 : index
    %c0_179 = arith.constant 0 : index
    %872 = vector.load %arg9[%c0_178, %c0_179] : memref<32x32xf32, #tpu.memory_space<vmem>>, vector<32x32xf32>
    %c0_180 = arith.constant 0 : index
    %c0_181 = arith.constant 0 : index
    %873 = vector.load %arg10[%c0_180, %c0_181] : memref<1x32xf32, #tpu.memory_space<vmem>>, vector<1x32xf32>
    %cst_182 = arith.constant dense<0.000000e+00> : vector<8x32xf32>
    %874 = tpu.matmul %871, %872, %cst_182 {dimension_numbers = #tpu.dot_dimension_numbers<[1], [0], [0], [1], [0, 0, 1, 1], [], []>} : vector<8x32xf32>, vector<32x32xf32>, vector<8x32xf32> -> vector<8x32xf32>
    %cst_183 = arith.constant dense<0.000000e+00> : vector<8x32xf32>
    %875 = tpu.matmul %856, %874, %cst_183 {dimension_numbers = #tpu.dot_dimension_numbers<[1], [0], [0], [1], [0, 0, 1, 1], [], []>} : vector<8x8xf32>, vector<8x32xf32>, vector<8x32xf32> -> vector<8x32xf32>
    %876 = vector.broadcast %873 : vector<1x32xf32> to vector<8x32xf32>
    %877 = arith.addf %875, %876 : vector<8x32xf32>
    %878 = vector.broadcast %861 : vector<8x1xf32> to vector<8x32xf32>
    %879 = arith.mulf %877, %878 : vector<8x32xf32>
    %cst_184 = arith.constant 0.000000e+00 : f32
    %880 = vector.broadcast %cst_184 : f32 to vector<8x32xf32>
    %881 = arith.maximumf %879, %880 : vector<8x32xf32>
    %c0_185 = arith.constant 0 : index
    %c0_186 = arith.constant 0 : index
    %c0_187 = arith.constant 0 : index
    %882 = vector.load %arg11[%c0_185, %c0_186, %c0_187] : memref<2x8x32xf32, #tpu.memory_space<vmem>>, vector<1x8x32xf32>
    %883 = vector.shape_cast %882 : vector<1x8x32xf32> to vector<8x32xf32>
    %884 = vector.shape_cast %881 : vector<8x32xf32> to vector<1x8x32xf32>
    tpu.vector_store %arg11[%c0_185, %c0_186, %c0_187], %884 {strides = array<i32>} : memref<2x8x32xf32, #tpu.memory_space<vmem>>, vector<1x8x32xf32>,
    %885 = vector.extract_strided_slice %852 {offsets = [0, 0, 0], sizes = [1, 8, 1], strides = [1, 1, 1]} : vector<2x8x1xf32> to vector<1x8x1xf32>
    %886 = vector.shape_cast %885 : vector<1x8x1xf32> to vector<8x1xf32>
    %cst_188 = arith.constant dense<0.000000e+00> : vector<1xf32>
    %887 = vector.multi_reduction <add>, %886, %cst_188 [0] : vector<8x1xf32> to vector<1xf32>
    %888 = vector.shape_cast %887 : vector<1xf32> to vector<1x1xf32>
    %cst_189 = arith.constant 1.000000e+00 : f32
    %889 = vector.broadcast %cst_189 : f32 to vector<1x1xf32>
    %890 = arith.maximumf %888, %889 : vector<1x1xf32>
    %891 = vector.broadcast %886 : vector<8x1xf32> to vector<8x32xf32>
    %892 = arith.mulf %881, %891 : vector<8x32xf32>
    %cst_190 = arith.constant dense<0.000000e+00> : vector<32xf32>
    %893 = vector.multi_reduction <add>, %892, %cst_190 [0] : vector<8x32xf32> to vector<32xf32>
    %894 = vector.shape_cast %893 : vector<32xf32> to vector<1x32xf32>
    %895 = vector.broadcast %890 : vector<1x1xf32> to vector<1x32xf32>
    %896 = arith.divf %894, %895 : vector<1x32xf32>
    %c0_191 = arith.constant 0 : index
    %c0_192 = arith.constant 0 : index
    %c0_193 = arith.constant 0 : index
    %897 = vector.load %arg12[%c0_191, %c0_192, %c0_193] : memref<2x1x32xf32, #tpu.memory_space<vmem>>, vector<1x1x32xf32>
    %898 = vector.shape_cast %897 : vector<1x1x32xf32> to vector<1x32xf32>
    %899 = vector.shape_cast %896 : vector<1x32xf32> to vector<1x1x32xf32>
    tpu.vector_store %arg12[%c0_191, %c0_192, %c0_193], %899 {strides = array<i32>} : memref<2x1x32xf32, #tpu.memory_space<vmem>>, vector<1x1x32xf32>,
    %900 = vector.extract_strided_slice %850 {offsets = [0, 1, 0], sizes = [8, 1, 64], strides = [1, 1, 1]} : vector<8x2x64xf32> to vector<8x1x64xf32>
    %901 = vector.shape_cast %900 : vector<8x1x64xf32> to vector<8x64xf32>
    %902 = vector.extract_strided_slice %851 {offsets = [1, 0, 0], sizes = [1, 8, 8], strides = [1, 1, 1]} : vector<2x8x8xf32> to vector<1x8x8xf32>
    %903 = vector.shape_cast %902 : vector<1x8x8xf32> to vector<8x8xf32>
    %cst_194 = arith.constant dense<0.000000e+00> : vector<8xf32>
    %904 = vector.multi_reduction <add>, %903, %cst_194 [1] : vector<8x8xf32> to vector<8xf32>
    %905 = vector.shape_cast %904 : vector<8xf32> to vector<8x1xf32>
    %cst_195 = arith.constant 1.000000e+00 : f32
    %906 = vector.broadcast %cst_195 : f32 to vector<8x1xf32>
    %907 = arith.addf %905, %906 : vector<8x1xf32>
    %908 = tpu.reciprocal %907 {approx = true} : vector<8x1xf32> -> vector<8x1xf32>
    %c0_196 = arith.constant 0 : index
    %c0_197 = arith.constant 0 : index
    %909 = vector.load %arg7[%c0_196, %c0_197] : memref<64x32xf32, #tpu.memory_space<vmem>>, vector<64x32xf32>
    %c0_198 = arith.constant 0 : index
    %c0_199 = arith.constant 0 : index
    %910 = vector.load %arg8[%c0_198, %c0_199] : memref<1x32xf32, #tpu.memory_space<vmem>>, vector<1x32xf32>
    %cst_200 = arith.constant dense<0.000000e+00> : vector<8x32xf32>
    %911 = tpu.matmul %901, %909, %cst_200 {dimension_numbers = #tpu.dot_dimension_numbers<[1], [0], [0], [1], [0, 0, 1, 1], [], []>} : vector<8x64xf32>, vector<64x32xf32>, vector<8x32xf32> -> vector<8x32xf32>
    %cst_201 = arith.constant dense<0.000000e+00> : vector<8x32xf32>
    %912 = tpu.matmul %903, %911, %cst_201 {dimension_numbers = #tpu.dot_dimension_numbers<[1], [0], [0], [1], [0, 0, 1, 1], [], []>} : vector<8x8xf32>, vector<8x32xf32>, vector<8x32xf32> -> vector<8x32xf32>
    %913 = vector.broadcast %910 : vector<1x32xf32> to vector<8x32xf32>
    %914 = arith.addf %912, %913 : vector<8x32xf32>
    %915 = vector.broadcast %908 : vector<8x1xf32> to vector<8x32xf32>
    %916 = arith.mulf %914, %915 : vector<8x32xf32>
    %cst_202 = arith.constant 0.000000e+00 : f32
    %917 = vector.broadcast %cst_202 : f32 to vector<8x32xf32>
    %918 = arith.maximumf %916, %917 : vector<8x32xf32>
    %c0_203 = arith.constant 0 : index
    %c0_204 = arith.constant 0 : index
    %919 = vector.load %arg9[%c0_203, %c0_204] : memref<32x32xf32, #tpu.memory_space<vmem>>, vector<32x32xf32>
    %c0_205 = arith.constant 0 : index
    %c0_206 = arith.constant 0 : index
    %920 = vector.load %arg10[%c0_205, %c0_206] : memref<1x32xf32, #tpu.memory_space<vmem>>, vector<1x32xf32>
    %cst_207 = arith.constant dense<0.000000e+00> : vector<8x32xf32>
    %921 = tpu.matmul %918, %919, %cst_207 {dimension_numbers = #tpu.dot_dimension_numbers<[1], [0], [0], [1], [0, 0, 1, 1], [], []>} : vector<8x32xf32>, vector<32x32xf32>, vector<8x32xf32> -> vector<8x32xf32>
    %cst_208 = arith.constant dense<0.000000e+00> : vector<8x32xf32>
    %922 = tpu.matmul %903, %921, %cst_208 {dimension_numbers = #tpu.dot_dimension_numbers<[1], [0], [0], [1], [0, 0, 1, 1], [], []>} : vector<8x8xf32>, vector<8x32xf32>, vector<8x32xf32> -> vector<8x32xf32>
    %923 = vector.broadcast %920 : vector<1x32xf32> to vector<8x32xf32>
    %924 = arith.addf %922, %923 : vector<8x32xf32>
    %925 = vector.broadcast %908 : vector<8x1xf32> to vector<8x32xf32>
    %926 = arith.mulf %924, %925 : vector<8x32xf32>
    %cst_209 = arith.constant 0.000000e+00 : f32
    %927 = vector.broadcast %cst_209 : f32 to vector<8x32xf32>
    %928 = arith.maximumf %926, %927 : vector<8x32xf32>
    %c1_210 = arith.constant 1 : index
    %c0_211 = arith.constant 0 : index
    %c0_212 = arith.constant 0 : index
    %929 = vector.load %arg11[%c1_210, %c0_211, %c0_212] : memref<2x8x32xf32, #tpu.memory_space<vmem>>, vector<1x8x32xf32>
    %930 = vector.shape_cast %929 : vector<1x8x32xf32> to vector<8x32xf32>
    %931 = vector.shape_cast %928 : vector<8x32xf32> to vector<1x8x32xf32>
    tpu.vector_store %arg11[%c1_210, %c0_211, %c0_212], %931 {strides = array<i32>} : memref<2x8x32xf32, #tpu.memory_space<vmem>>, vector<1x8x32xf32>,
    %932 = vector.extract_strided_slice %852 {offsets = [1, 0, 0], sizes = [1, 8, 1], strides = [1, 1, 1]} : vector<2x8x1xf32> to vector<1x8x1xf32>
    %933 = vector.shape_cast %932 : vector<1x8x1xf32> to vector<8x1xf32>
    %cst_213 = arith.constant dense<0.000000e+00> : vector<1xf32>
    %934 = vector.multi_reduction <add>, %933, %cst_213 [0] : vector<8x1xf32> to vector<1xf32>
    %935 = vector.shape_cast %934 : vector<1xf32> to vector<1x1xf32>
    %cst_214 = arith.constant 1.000000e+00 : f32
    %936 = vector.broadcast %cst_214 : f32 to vector<1x1xf32>
    %937 = arith.maximumf %935, %936 : vector<1x1xf32>
    %938 = vector.broadcast %933 : vector<8x1xf32> to vector<8x32xf32>
    %939 = arith.mulf %928, %938 : vector<8x32xf32>
    %cst_215 = arith.constant dense<0.000000e+00> : vector<32xf32>
    %940 = vector.multi_reduction <add>, %939, %cst_215 [0] : vector<8x32xf32> to vector<32xf32>
    %941 = vector.shape_cast %940 : vector<32xf32> to vector<1x32xf32>
    %942 = vector.broadcast %937 : vector<1x1xf32> to vector<1x32xf32>
    %943 = arith.divf %941, %942 : vector<1x32xf32>
    %c1_216 = arith.constant 1 : index
    %c0_217 = arith.constant 0 : index
    %c0_218 = arith.constant 0 : index
    %944 = vector.load %arg12[%c1_216, %c0_217, %c0_218] : memref<2x1x32xf32, #tpu.memory_space<vmem>>, vector<1x1x32xf32>
    %945 = vector.shape_cast %944 : vector<1x1x32xf32> to vector<1x32xf32>
    %946 = vector.shape_cast %943 : vector<1x32xf32> to vector<1x1x32xf32>
    tpu.vector_store %arg12[%c1_216, %c0_217, %c0_218], %946 {strides = array<i32>} : memref<2x1x32xf32, #tpu.memory_space<vmem>>, vector<1x1x32xf32>,
    return
  }
}

</mosaic_0001>

<llo_original>
// kernel: gcn_forward.1
$region0: #{gcn_forward.1}
  #allocation0 [shape = 'u32[]', space=smem, size = 0x4, offset = 0x4, fixed_abs, tag = 'smem constant byte address 0x4 - core index']
  #allocation1 [shape = 'u32[144,128]{1,0:T(1,128)}', space=vmem, size = 0x12000, scoped, tag = 'internal scratch']
  #allocation2 [shape = 'f32[8,2,32]{2,1,0:T(2,128)}', space=vmem, size = 0x2000, scoped, tag = 'scratch operand']
  #allocation3 [shape = 'f32[8,2,32]{2,1,0:T(2,128)}', space=vmem, size = 0x2000, scoped, tag = 'scratch operand']
  %s0 = inlined_call_operand.vmem [shape: f32[2,8,64], index: 0, kind: input, shape index: {}]
  %s1 = inlined_call_operand.vmem [shape: f32[2,8,8], index: 1, kind: input, shape index: {}]
  %s2 = inlined_call_operand.vmem [shape: f32[2,8,1], index: 2, kind: input, shape index: {}]
  %s3 = inlined_call_operand.vmem [shape: f32[2,1], index: 3, kind: input, shape index: {}]
  %s4 = inlined_call_operand.vmem [shape: f32[64,256], index: 4, kind: input, shape index: {}]
  %s5 = inlined_call_operand.vmem [shape: f32[64,256], index: 5, kind: input, shape index: {}]
  %s6 = inlined_call_operand.vmem [shape: f32[1,256], index: 6, kind: input, shape index: {}]
  %s7 = inlined_call_operand.vmem [shape: f32[64,32], index: 7, kind: input, shape index: {}]
  %s8 = inlined_call_operand.vmem [shape: f32[1,32], index: 8, kind: input, shape index: {}]
  %s9 = inlined_call_operand.vmem [shape: f32[32,32], index: 9, kind: input, shape index: {}]
  %s10 = inlined_call_operand.vmem [shape: f32[1,32], index: 10, kind: input, shape index: {}]
  %s11 = inlined_call_operand.hbm [shape: f32[2,8,32], index: 11, kind: output, shape index: {0}]
  %s12 = inlined_call_operand.hbm [shape: f32[2,1,32], index: 12, kind: output, shape index: {1}]
  %13 = xla_tuple %s11, %s12
  %s14 = sld [smem:[#allocation0]]
  $region62: #{gcn_forward.1} parent=0
    _
  %s16 = ssub.s32 1, %s14
  %s17 = scalar_select 0, %s16, %s14
  $region1: #{gcn_forward.1} parent=0
    #allocation4 [shape = 'u8[8192]{0}', space=vmem, size = 0x2000, scoped, tag = 'output window, operand 0, single buffered']
    #allocation5 [shape = 's32[1]{0}', space=sflag, size = 0x4, scoped, tag = 'scoped memory for gcn_forward.1']
    #allocation6 [shape = 'u8[1024]{0}', space=vmem, size = 0x400, scoped, tag = 'output window, operand 1, single buffered']
    #allocation7 [shape = 's32[1]{0}', space=sflag, size = 0x4, scoped, tag = 'scoped memory for gcn_forward.1']
    %18 = vsyncpa [#allocation5], 0
    %19 = vsyncpa [#allocation7], 0
    // Predicated region
    $region2: #{gcn_forward.1} parent=1 // pred_check
      _
    $region3: #{gcn_forward.1} parent=1 // pred_check_branch
      %21 = sbr.rel (0) target = $region5
    $region4: #{gcn_forward.1} parent=1 // pred_region
      _
    $region5: #{gcn_forward.1} parent=1 // pred_fallthru
      _
    // Predicated region
    $region6: #{gcn_forward.1} parent=1 // pred_check
      _
    $region7: #{gcn_forward.1} parent=1 // pred_check_branch
      %23 = sbr.rel (0) target = $region9
    $region8: #{gcn_forward.1} parent=1 // pred_region
      _
    $region9: #{gcn_forward.1} parent=1 // pred_fallthru
      _
    // Predicated region
    $region10: #{gcn_forward.1} parent=1 // pred_check
      _
    $region11: #{gcn_forward.1} parent=1 // pred_check_branch
      %25 = sbr.rel (0) target = $region13
    $region12: #{gcn_forward.1} parent=1 // pred_region
      _
    $region13: #{gcn_forward.1} parent=1 // pred_fallthru
      _
    // Predicated region
    $region14: #{gcn_forward.1} parent=1 // pred_check
      _
    $region15: #{gcn_forward.1} parent=1 // pred_check_branch
      %27 = sbr.rel (0) target = $region17
    $region16: #{gcn_forward.1} parent=1 // pred_region
      _
    $region17: #{gcn_forward.1} parent=1 // pred_fallthru
      _
    // Predicated region
    $region18: #{gcn_forward.1} parent=1 // pred_check
      _
    $region19: #{gcn_forward.1} parent=1 // pred_check_branch
      %29 = sbr.rel (0) target = $region21
    $region20: #{gcn_forward.1} parent=1 // pred_region
      _
    $region21: #{gcn_forward.1} parent=1 // pred_fallthru
      _
    // Predicated region
    $region22: #{gcn_forward.1} parent=1 // pred_check
      _
    $region23: #{gcn_forward.1} parent=1 // pred_check_branch
      %31 = sbr.rel (0) target = $region25
    $region24: #{gcn_forward.1} parent=1 // pred_region
      _
    $region25: #{gcn_forward.1} parent=1 // pred_fallthru
      _
    // Predicated region
    $region26: #{gcn_forward.1} parent=1 // pred_check
      _
    $region27: #{gcn_forward.1} parent=1 // pred_check_branch
      %33 = sbr.rel (0) target = $region29
    $region28: #{gcn_forward.1} parent=1 // pred_region
      _
    $region29: #{gcn_forward.1} parent=1 // pred_fallthru
      _
    // Predicated region
    $region30: #{gcn_forward.1} parent=1 // pred_check
      _
    $region31: #{gcn_forward.1} parent=1 // pred_check_branch
      %35 = sbr.rel (0) target = $region33
    $region32: #{gcn_forward.1} parent=1 // pred_region
      _
    $region33: #{gcn_forward.1} parent=1 // pred_fallthru
      _
    // Predicated region
    $region34: #{gcn_forward.1} parent=1 // pred_check
      _
    $region35: #{gcn_forward.1} parent=1 // pred_check_branch
      %37 = sbr.rel (0) target = $region37
    $region36: #{gcn_forward.1} parent=1 // pred_region
      _
    $region37: #{gcn_forward.1} parent=1 // pred_fallthru
      _
    // Predicated region
    $region38: #{gcn_forward.1} parent=1 // pred_check
      _
    $region39: #{gcn_forward.1} parent=1 // pred_check_branch
      %39 = sbr.rel (0) target = $region41
    $region40: #{gcn_forward.1} parent=1 // pred_region
      _
    $region41: #{gcn_forward.1} parent=1 // pred_fallthru
      _
    // Predicated region
    $region42: #{gcn_forward.1} parent=1 // pred_check
      _
    $region43: #{gcn_forward.1} parent=1 // pred_check_branch
      %41 = sbr.rel (0) target = $region45
    $region44: #{gcn_forward.1} parent=1 // pred_region
      _
    $region45: #{gcn_forward.1} parent=1 // pred_fallthru
      _
    %v42 = vld [vmem:[%s0] sm:$0xff]
    %v43 = vld [vmem:[%s0 + $0x8] sm:$0xff]
    %v44 = vld [vmem:[%s4] sm:$0xff]
    %v45 = vld [vmem:[%s4 + $0x8] sm:$0xff]
    %v46 = vld [vmem:[%s4 + $0x10] sm:$0xff]
    %v47 = vld [vmem:[%s4 + $0x18] sm:$0xff]
    %v48 = vld [vmem:[%s4 + $0x20] sm:$0xff]
    %v49 = vld [vmem:[%s4 + $0x28] sm:$0xff]
    %v50 = vld [vmem:[%s4 + $0x30] sm:$0xff]
    %v51 = vld [vmem:[%s4 + $0x38] sm:$0xff]
    %v52 = vld [vmem:[%s4 + $0x40] sm:$0xff]
    %v53 = vld [vmem:[%s4 + $0x48] sm:$0xff]
    %v54 = vld [vmem:[%s4 + $0x50] sm:$0xff]
    %v55 = vld [vmem:[%s4 + $0x58] sm:$0xff]
    %v56 = vld [vmem:[%s4 + $0x60] sm:$0xff]
    %v57 = vld [vmem:[%s4 + $0x68] sm:$0xff]
    %v58 = vld [vmem:[%s4 + $0x70] sm:$0xff]
    %v59 = vld [vmem:[%s4 + $0x78] sm:$0xff]
    %v60 = vld [vmem:[%s6] sm:$0x3]
    %v62 = vlaneseq
    %v63 = vshrl.u32 %v62, 7
    %v64 = vsub.s32 0, %v63
    %v65 = vrot.slane %v60, %v64
    %v66 = vlaneseq
    %v67 = vshrl.u32 %v66, 7
    %v68 = vsub.s32 1, %v67
    %v69 = vrot.slane %v60, %v68
    %vm72 = vcmask 523264
    %v74 = vsel %vm72, %v42, 0
    %v77 = vsel %vm72, %v43, 0
    %79 = vmatprep.subr.mxu0 %v45
    %80 = vmatpush1.msra.mxu0 %v44
    %81 = vmatprep.subr.mxu0 %v47
    %82 = vmatpush1.msra.mxu0 %v46
    %83 = vmatprep.subr.mxu0 %v49
    %84 = vmatpush1.msra.mxu0 %v48
    %85 = vmatprep.subr.mxu0 %v51
    %86 = vmatpush1.msra.mxu0 %v50
    %87 = vmatprep.subr.mxu0 %v53
    %88 = vmatpush1.msra.mxu0 %v52
    %89 = vmatprep.subr.mxu0 %v55
    %90 = vmatpush1.msra.mxu0 %v54
    %91 = vmatprep.subr.mxu0 %v57
    %92 = vmatpush1.msra.mxu0 %v56
    %93 = vmatprep.subr.mxu0 %v59
    %94 = vmatpush1.msra.mxu0 %v58
    %95 = vmatprep.subr.mxu0 0.0
    %96 = vmatpush1.msra.mxu0 0.0
    %97 = vmatprep.subr.mxu0 0.0
    %98 = vmatpush1.msra.mxu0 0.0
    %99 = vmatprep.subr.mxu0 0.0
    %100 = vmatpush1.msra.mxu0 0.0
    %101 = vmatprep.subr.mxu0 0.0
    %102 = vmatpush1.msra.mxu0 0.0
    %103 = vmatprep.subr.mxu0 0.0
    %104 = vmatpush1.msra.mxu0 0.0
    %105 = vmatprep.subr.mxu0 0.0
    %106 = vmatpush1.msra.mxu0 0.0
    %107 = vmatprep.subr.mxu0 0.0
    %108 = vmatpush1.msra.mxu0 0.0
    %109 = vmatprep.subr.mxu0 0.0
    %110 = vmatpush1.msra.mxu0 0.0
    %111 = vmatprep.subr.mxu0 0.0
    %112 = vmatpush1.msra.mxu0 0.0
    %113 = vmatprep.subr.mxu0 0.0
    %114 = vmatpush1.msra.mxu0 0.0
    %115 = vmatprep.subr.mxu0 0.0
    %116 = vmatpush1.msra.mxu0 0.0
    %117 = vmatprep.subr.mxu0 0.0
    %118 = vmatpush1.msra.mxu0 0.0
    %119 = vmatprep.subr.mxu0 0.0
    %120 = vmatpush1.msra.mxu0 0.0
    %121 = vmatprep.subr.mxu0 0.0
    %122 = vmatpush1.msra.mxu0 0.0
    %123 = vmatprep.subr.mxu0 0.0
    %124 = vmatpush1.msra.mxu0 0.0
    %125 = vmatprep.subr.mxu0 0.0
    %126 = vmatpush1.msra.mxu0 0.0
    %127 = vmatprep.subr.mxu0 0.0
    %128 = vmatpush1.msra.mxu0 0.0
    %129 = vmatprep.subr.mxu0 0.0
    %130 = vmatpush1.msra.mxu0 0.0
    %131 = vmatprep.subr.mxu0 0.0
    %132 = vmatpush1.msra.mxu0 0.0
    %133 = vmatprep.subr.mxu0 0.0
    %134 = vmatpush1.msra.mxu0 0.0
    %135 = vmatprep.subr.mxu0 0.0
    %136 = vmatpush1.msra.mxu0 0.0
    %137 = vmatprep.subr.mxu0 0.0
    %138 = vmatpush1.msra.mxu0 0.0
    %139 = vmatprep.subr.mxu0 0.0
    %140 = vmatpush1.msra.mxu0 0.0
    %141 = vmatprep.subr.mxu0 0.0
    %142 = vmatpush1.msra.mxu0 0.0
    %143 = vmatprep.mubr.f32.mxu0 0.0
    %144 = vmatmul.mubr.f32.gmra.mrb[0].mxu0 %v74
    %v145 = vpop.f32.mrb[0].mxu0
    %v146 = vadd.f32 %v65, %v145
    %v147 = vpop.f32.mrb[0].mxu0
    %v148 = vadd.f32 %v69, %v147
    %149 = vmatprep.mubr.f32.mxu0 0.0
    %150 = vmatmul.mubr.f32.gmra.mrb[0].mxu0 %v77
    %v151 = vpop.f32.mrb[0].mxu0
    %v152 = vadd.f32 %v65, %v151
    %v153 = vpop.f32.mrb[0].mxu0
    %v154 = vadd.f32 %v69, %v153
    %155 = vdwg.mxu0
    %v156 = vld [vmem:[%s5] sm:$0xff]
    %v157 = vld [vmem:[%s5 + $0x8] sm:$0xff]
    %v158 = vld [vmem:[%s5 + $0x10] sm:$0xff]
    %v159 = vld [vmem:[%s5 + $0x18] sm:$0xff]
    %v160 = vld [vmem:[%s5 + $0x20] sm:$0xff]
    %v161 = vld [vmem:[%s5 + $0x28] sm:$0xff]
    %v162 = vld [vmem:[%s5 + $0x30] sm:$0xff]
    %v163 = vld [vmem:[%s5 + $0x38] sm:$0xff]
    %v164 = vld [vmem:[%s5 + $0x40] sm:$0xff]
    %v165 = vld [vmem:[%s5 + $0x48] sm:$0xff]
    %v166 = vld [vmem:[%s5 + $0x50] sm:$0xff]
    %v167 = vld [vmem:[%s5 + $0x58] sm:$0xff]
    %v168 = vld [vmem:[%s5 + $0x60] sm:$0xff]
    %v169 = vld [vmem:[%s5 + $0x68] sm:$0xff]
    %v170 = vld [vmem:[%s5 + $0x70] sm:$0xff]
    %v171 = vld [vmem:[%s5 + $0x78] sm:$0xff]
    %v172 = vld [vmem:[%s3] sm:$0x3]
    %v174 = vsel %vm72, 0.0, 0
    %176 = vmatprep.subr.mxu0 %v157
    %177 = vmatpush1.msra.mxu0 %v156
    %178 = vmatprep.subr.mxu0 %v159
    %179 = vmatpush1.msra.mxu0 %v158
    %180 = vmatprep.subr.mxu0 %v161
    %181 = vmatpush1.msra.mxu0 %v160
    %182 = vmatprep.subr.mxu0 %v163
    %183 = vmatpush1.msra.mxu0 %v162
    %184 = vmatprep.subr.mxu0 %v165
    %185 = vmatpush1.msra.mxu0 %v164
    %186 = vmatprep.subr.mxu0 %v167
    %187 = vmatpush1.msra.mxu0 %v166
    %188 = vmatprep.subr.mxu0 %v169
    %189 = vmatpush1.msra.mxu0 %v168
    %190 = vmatprep.subr.mxu0 %v171
    %191 = vmatpush1.msra.mxu0 %v170
    %192 = vmatprep.subr.mxu0 0.0
    %193 = vmatpush1.msra.mxu0 0.0
    %194 = vmatprep.subr.mxu0 0.0
    %195 = vmatpush1.msra.mxu0 0.0
    %196 = vmatprep.subr.mxu0 0.0
    %197 = vmatpush1.msra.mxu0 0.0
    %198 = vmatprep.subr.mxu0 0.0
    %199 = vmatpush1.msra.mxu0 0.0
    %200 = vmatprep.subr.mxu0 0.0
    %201 = vmatpush1.msra.mxu0 0.0
    %202 = vmatprep.subr.mxu0 0.0
    %203 = vmatpush1.msra.mxu0 0.0
    %204 = vmatprep.subr.mxu0 0.0
    %205 = vmatpush1.msra.mxu0 0.0
    %206 = vmatprep.subr.mxu0 0.0
    %207 = vmatpush1.msra.mxu0 0.0
    %208 = vmatprep.subr.mxu0 0.0
    %209 = vmatpush1.msra.mxu0 0.0
    %210 = vmatprep.subr.mxu0 0.0
    %211 = vmatpush1.msra.mxu0 0.0
    %212 = vmatprep.subr.mxu0 0.0
    %213 = vmatpush1.msra.mxu0 0.0
    %214 = vmatprep.subr.mxu0 0.0
    %215 = vmatpush1.msra.mxu0 0.0
    %216 = vmatprep.subr.mxu0 0.0
    %217 = vmatpush1.msra.mxu0 0.0
    %218 = vmatprep.subr.mxu0 0.0
    %219 = vmatpush1.msra.mxu0 0.0
    %220 = vmatprep.subr.mxu0 0.0
    %221 = vmatpush1.msra.mxu0 0.0
    %222 = vmatprep.subr.mxu0 0.0
    %223 = vmatpush1.msra.mxu0 0.0
    %224 = vmatprep.subr.mxu0 0.0
    %225 = vmatpush1.msra.mxu0 0.0
    %226 = vmatprep.subr.mxu0 0.0
    %227 = vmatpush1.msra.mxu0 0.0
    %228 = vmatprep.subr.mxu0 0.0
    %229 = vmatpush1.msra.mxu0 0.0
    %230 = vmatprep.subr.mxu0 0.0
    %231 = vmatpush1.msra.mxu0 0.0
    %232 = vmatprep.subr.mxu0 0.0
    %233 = vmatpush1.msra.mxu0 0.0
    %234 = vmatprep.subr.mxu0 0.0
    %235 = vmatpush1.msra.mxu0 0.0
    %236 = vmatprep.subr.mxu0 0.0
    %237 = vmatpush1.msra.mxu0 0.0
    %238 = vmatprep.subr.mxu0 0.0
    %239 = vmatpush1.msra.mxu0 0.0
    %240 = vmatprep.mubr.f32.mxu0 0.0
    %241 = vmatmul.mubr.f32.gmra.mrb[0].mxu0 %v174
    %v242 = vpop.f32.mrb[0].mxu0
    %v243 = vadd.f32 0.0, %v242
    %v244 = vpop.f32.mrb[0].mxu0
    %v245 = vadd.f32 0.0, %v244
    %246 = vdwg.mxu0
    %v248 = vrot.slane %v243, 1
    %v251 = vadd.f32 %v146, %v243
    %v252 = vadd.f32 %v152, %v248
    %v253 = vxor.u32 %v251, 2147483648
    %v254 = vxor.u32 %v252, 2147483648
    %v255 = vmul.f32 %v253, 1.442695
    %v256 = vpow.pop %v255
    %v257 = vmul.f32 %v254, 1.442695
    %v258 = vpow.pop %v257
    %v259 = vadd.f32 %v256, 1.0
    %v260 = vadd.f32 %v258, 1.0
    %v261 = vrcp.pop %v259
    %v262 = vmul.f32 1.0, %v261
    %v263 = vrcp.pop %v260
    %v264 = vmul.f32 1.0, %v263
    %v265 = vtanh.pop %v251
    %v266 = vtanh.pop %v252
    %v267 = vmul.f32 %v262, 0.0
    %v268 = vmul.f32 %v264, 0.0
    %271 = vrot.lane.b32.xlu0 %v265, 64
    %v272 = vpop.permute.xlu0 %271
    %273 = vrot.lane.b32.xlu0 %v266, 64
    %v274 = vpop.permute.xlu0 %273
    %v277 = vmul.f32 %v262, %v272
    %v278 = vmul.f32 %v264, %v274
    %281 = vrot.lane.b32.xlu0 %v277, 32
    %v282 = vpop.permute.xlu0 %281
    %283 = vrot.lane.b32.xlu0 %v278, 32
    %v284 = vpop.permute.xlu0 %283
    %v287 = vadd.f32 %v267, %v282
    %v288 = vadd.f32 %v268, %v284
    %v289 = vtanh.pop %v287
    %v290 = vtanh.pop %v288
    %293 = vrot.lane.b32.xlu0 %v289, 64
    %v294 = vpop.permute.xlu0 %293
    %295 = vrot.lane.b32.xlu0 %v290, 64
    %v296 = vpop.permute.xlu0 %295
    %v299 = vmul.f32 %v262, %v294
    %v300 = vmul.f32 %v264, %v296
    %v302 = vrot.slane %v245, 1
    %v303 = vrot.slane %v245, 2
    %v306 = vadd.f32 %v148, %v302
    %v307 = vadd.f32 %v154, %v303
    %v308 = vxor.u32 %v306, 2147483648
    %v309 = vxor.u32 %v307, 2147483648
    %v310 = vmul.f32 %v308, 1.442695
    %v311 = vpow.pop %v310
    %v312 = vmul.f32 %v309, 1.442695
    %v313 = vpow.pop %v312
    %v314 = vadd.f32 %v311, 1.0
    %v315 = vadd.f32 %v313, 1.0
    %v316 = vrcp.pop %v314
    %v317 = vmul.f32 1.0, %v316
    %v318 = vrcp.pop %v315
    %v319 = vmul.f32 1.0, %v318
    %v320 = vtanh.pop %v306
    %v321 = vtanh.pop %v307
    %v322 = vmul.f32 %v317, 0.0
    %v323 = vmul.f32 %v319, 0.0
    %326 = vrot.lane.b32.xlu0 %v320, 64
    %v327 = vpop.permute.xlu0 %326
    %328 = vrot.lane.b32.xlu0 %v321, 64
    %v329 = vpop.permute.xlu0 %328
    %v332 = vmul.f32 %v317, %v327
    %v333 = vmul.f32 %v319, %v329
    %336 = vrot.lane.b32.xlu0 %v332, 32
    %v337 = vpop.permute.xlu0 %336
    %338 = vrot.lane.b32.xlu0 %v333, 32
    %v339 = vpop.permute.xlu0 %338
    %v342 = vadd.f32 %v322, %v337
    %v343 = vadd.f32 %v323, %v339
    %v344 = vtanh.pop %v342
    %v345 = vtanh.pop %v343
    %348 = vrot.lane.b32.xlu0 %v344, 64
    %v349 = vpop.permute.xlu0 %348
    %350 = vrot.lane.b32.xlu0 %v345, 64
    %v351 = vpop.permute.xlu0 %350
    %v354 = vmul.f32 %v317, %v349
    %v355 = vmul.f32 %v319, %v351
    %vm356 = vcmp.gt.f32.partialorder %v172, 0.0
    %v357 = vsel %vm356, 1, 0
    %v358 = vcvt.s32.f32 %v357
    %vm359 = vcmp.gt.f32.partialorder %v172, 7.0
    %v360 = vsel %vm359, 1, 0
    %v361 = vcvt.s32.f32 %v360
    %363 = vset.pattern.permute.xlu0 0
    %364 = vperm.xlu0 %363, %v358
    %v365 = vpop.permute.xlu0 %364
    %v369 = vrot.slane %v300, 7
    %vm370 = vcmask 1041409
    %v371 = vsel %vm370, %v369, %v299
    %372 = vrot.lane.b32.xlu0 %v371, 32
    %v373 = vpop.permute.xlu0 %372
    %v375 = vmul.f32 %v365, %v373
    %v376 = vsub.f32 1.0, %v358
    %378 = vset.pattern.permute.xlu0 0
    %379 = vperm.xlu0 %378, %v376
    %v380 = vpop.permute.xlu0 %379
    %v382 = vmul.f32 %v380, 0.0
    %v383 = vadd.f32 %v375, %v382
    %v386 = vrot.slane %v288, 7
    %v387 = vsel %vm370, %v386, %v287
    %388 = vrot.lane.b32.xlu0 %v387, 96
    %v389 = vpop.permute.xlu0 %388
    %v391 = vmul.f32 %v365, %v389
    %v392 = vadd.f32 %v391, %v382
    %394 = vset.pattern.permute.xlu0 0
    %395 = vperm.xlu0 %394, %v361
    %v396 = vpop.permute.xlu0 %395
    %v400 = vrot.slane %v354, 7
    %v401 = vrot.slane %v355, 6
    %v402 = vsel %vm370, %v401, %v400
    %403 = vrot.lane.b32.xlu0 %v402, 32
    %v404 = vpop.permute.xlu0 %403
    %v406 = vmul.f32 %v396, %v404
    %v407 = vsub.f32 1.0, %v361
    %409 = vset.pattern.permute.xlu0 0
    %410 = vperm.xlu0 %409, %v407
    %v411 = vpop.permute.xlu0 %410
    %v413 = vmul.f32 %v411, 0.0
    %v414 = vadd.f32 %v406, %v413
    %v417 = vrot.slane %v342, 7
    %v418 = vrot.slane %v343, 6
    %v419 = vsel %vm370, %v418, %v417
    %420 = vrot.lane.b32.xlu0 %v419, 96
    %v421 = vpop.permute.xlu0 %420
    %v423 = vmul.f32 %v396, %v421
    %v424 = vadd.f32 %v423, %v413
    %v425 = vmul.f32 %v383, %v365
    %vm426 = vcmask 254976
    %427 = vst.msk [vmem:[#allocation2] sm:$0x3] %vm426, %v425
    %v428 = vmul.f32 %v414, %v396
    %s429 = scalar_lea.vmem [#allocation3], 14
    %430 = vst.msk [vmem:[%s429] sm:$0x3] %vm426, %v428
    %432 = vrot.lane.b32.xlu0 %v414, 32
    %v433 = vpop.permute.xlu0 %432
    %vm435 = vcmask 261120
    %v436 = vsel %vm435, %v383, %v433
    %v438 = vsel %vm72, %v436, 0
    %440 = vmatprep.subr.mxu0 %v157
    %441 = vmatpush1.msra.mxu0 %v156
    %442 = vmatprep.subr.mxu0 %v159
    %443 = vmatpush1.msra.mxu0 %v158
    %444 = vmatprep.subr.mxu0 %v161
    %445 = vmatpush1.msra.mxu0 %v160
    %446 = vmatprep.subr.mxu0 %v163
    %447 = vmatpush1.msra.mxu0 %v162
    %448 = vmatprep.subr.mxu0 %v165
    %449 = vmatpush1.msra.mxu0 %v164
    %450 = vmatprep.subr.mxu0 %v167
    %451 = vmatpush1.msra.mxu0 %v166
    %452 = vmatprep.subr.mxu0 %v169
    %453 = vmatpush1.msra.mxu0 %v168
    %454 = vmatprep.subr.mxu0 %v171
    %455 = vmatpush1.msra.mxu0 %v170
    %456 = vmatprep.subr.mxu0 0.0
    %457 = vmatpush1.msra.mxu0 0.0
    %458 = vmatprep.subr.mxu0 0.0
    %459 = vmatpush1.msra.mxu0 0.0
    %460 = vmatprep.subr.mxu0 0.0
    %461 = vmatpush1.msra.mxu0 0.0
    %462 = vmatprep.subr.mxu0 0.0
    %463 = vmatpush1.msra.mxu0 0.0
    %464 = vmatprep.subr.mxu0 0.0
    %465 = vmatpush1.msra.mxu0 0.0
    %466 = vmatprep.subr.mxu0 0.0
    %467 = vmatpush1.msra.mxu0 0.0
    %468 = vmatprep.subr.mxu0 0.0
    %469 = vmatpush1.msra.mxu0 0.0
    %470 = vmatprep.subr.mxu0 0.0
    %471 = vmatpush1.msra.mxu0 0.0
    %472 = vmatprep.subr.mxu0 0.0
    %473 = vmatpush1.msra.mxu0 0.0
    %474 = vmatprep.subr.mxu0 0.0
    %475 = vmatpush1.msra.mxu0 0.0
    %476 = vmatprep.subr.mxu0 0.0
    %477 = vmatpush1.msra.mxu0 0.0
    %478 = vmatprep.subr.mxu0 0.0
    %479 = vmatpush1.msra.mxu0 0.0
    %480 = vmatprep.subr.mxu0 0.0
    %481 = vmatpush1.msra.mxu0 0.0
    %482 = vmatprep.subr.mxu0 0.0
    %483 = vmatpush1.msra.mxu0 0.0
    %484 = vmatprep.subr.mxu0 0.0
    %485 = vmatpush1.msra.mxu0 0.0
    %486 = vmatprep.subr.mxu0 0.0
    %487 = vmatpush1.msra.mxu0 0.0
    %488 = vmatprep.subr.mxu0 0.0
    %489 = vmatpush1.msra.mxu0 0.0
    %490 = vmatprep.subr.mxu0 0.0
    %491 = vmatpush1.msra.mxu0 0.0
    %492 = vmatprep.subr.mxu0 0.0
    %493 = vmatpush1.msra.mxu0 0.0
    %494 = vmatprep.subr.mxu0 0.0
    %495 = vmatpush1.msra.mxu0 0.0
    %496 = vmatprep.subr.mxu0 0.0
    %497 = vmatpush1.msra.mxu0 0.0
    %498 = vmatprep.subr.mxu0 0.0
    %499 = vmatpush1.msra.mxu0 0.0
    %500 = vmatprep.subr.mxu0 0.0
    %501 = vmatpush1.msra.mxu0 0.0
    %502 = vmatprep.subr.mxu0 0.0
    %503 = vmatpush1.msra.mxu0 0.0
    %504 = vmatprep.mubr.f32.mxu0 0.0
    %505 = vmatmul.mubr.f32.gmra.mrb[0].mxu0 %v438
    %v506 = vpop.f32.mrb[0].mxu0
    %v507 = vadd.f32 0.0, %v506
    %v508 = vpop.f32.mrb[0].mxu0
    %v509 = vadd.f32 0.0, %v508
    %510 = vdwg.mxu0
    %v512 = vrot.slane %v507, 7
    %v515 = vadd.f32 %v146, %v512
    %v516 = vadd.f32 %v152, %v507
    %v517 = vxor.u32 %v515, 2147483648
    %v518 = vxor.u32 %v516, 2147483648
    %v519 = vmul.f32 %v517, 1.442695
    %v520 = vpow.pop %v519
    %v521 = vmul.f32 %v518, 1.442695
    %v522 = vpow.pop %v521
    %v523 = vadd.f32 %v520, 1.0
    %v524 = vadd.f32 %v522, 1.0
    %v525 = vrcp.pop %v523
    %v526 = vmul.f32 1.0, %v525
    %v527 = vrcp.pop %v524
    %v528 = vmul.f32 1.0, %v527
    %v529 = vtanh.pop %v515
    %v530 = vtanh.pop %v516
    %v532 = vrot.slane %v392, 7
    %533 = vrot.lane.b32.xlu0 %v532, 32
    %v534 = vpop.permute.xlu0 %533
    %535 = vrot.lane.b32.xlu0 %v392, 32
    %v536 = vpop.permute.xlu0 %535
    %v539 = vmul.f32 %v526, %v534
    %v540 = vmul.f32 %v528, %v536
    %543 = vrot.lane.b32.xlu0 %v529, 64
    %v544 = vpop.permute.xlu0 %543
    %545 = vrot.lane.b32.xlu0 %v530, 64
    %v546 = vpop.permute.xlu0 %545
    %v549 = vmul.f32 %v526, %v544
    %v550 = vmul.f32 %v528, %v546
    %553 = vrot.lane.b32.xlu0 %v549, 32
    %v554 = vpop.permute.xlu0 %553
    %555 = vrot.lane.b32.xlu0 %v550, 32
    %v556 = vpop.permute.xlu0 %555
    %v559 = vadd.f32 %v539, %v554
    %v560 = vadd.f32 %v540, %v556
    %v561 = vtanh.pop %v559
    %v562 = vtanh.pop %v560
    %565 = vrot.lane.b32.xlu0 %v561, 64
    %v566 = vpop.permute.xlu0 %565
    %567 = vrot.lane.b32.xlu0 %v562, 64
    %v568 = vpop.permute.xlu0 %567
    %v571 = vmul.f32 %v526, %v566
    %v572 = vmul.f32 %v528, %v568
    %v574 = vrot.slane %v509, 2
    %v575 = vrot.slane %v509, 3
    %v578 = vadd.f32 %v148, %v574
    %v579 = vadd.f32 %v154, %v575
    %v580 = vxor.u32 %v578, 2147483648
    %v581 = vxor.u32 %v579, 2147483648
    %v582 = vmul.f32 %v580, 1.442695
    %v583 = vpow.pop %v582
    %v584 = vmul.f32 %v581, 1.442695
    %v585 = vpow.pop %v584
    %v586 = vadd.f32 %v583, 1.0
    %v587 = vadd.f32 %v585, 1.0
    %v588 = vrcp.pop %v586
    %v589 = vmul.f32 1.0, %v588
    %v590 = vrcp.pop %v587
    %v591 = vmul.f32 1.0, %v590
    %v592 = vtanh.pop %v578
    %v593 = vtanh.pop %v579
    %v595 = vrot.slane %v424, 2
    %v596 = vrot.slane %v424, 3
    %597 = vrot.lane.b32.xlu0 %v595, 32
    %v598 = vpop.permute.xlu0 %597
    %599 = vrot.lane.b32.xlu0 %v596, 32
    %v600 = vpop.permute.xlu0 %599
    %v603 = vmul.f32 %v589, %v598
    %v604 = vmul.f32 %v591, %v600
    %607 = vrot.lane.b32.xlu0 %v592, 64
    %v608 = vpop.permute.xlu0 %607
    %609 = vrot.lane.b32.xlu0 %v593, 64
    %v610 = vpop.permute.xlu0 %609
    %v613 = vmul.f32 %v589, %v608
    %v614 = vmul.f32 %v591, %v610
    %617 = vrot.lane.b32.xlu0 %v613, 32
    %v618 = vpop.permute.xlu0 %617
    %619 = vrot.lane.b32.xlu0 %v614, 32
    %v620 = vpop.permute.xlu0 %619
    %v623 = vadd.f32 %v603, %v618
    %v624 = vadd.f32 %v604, %v620
    %v625 = vtanh.pop %v623
    %v626 = vtanh.pop %v624
    %629 = vrot.lane.b32.xlu0 %v625, 64
    %v630 = vpop.permute.xlu0 %629
    %631 = vrot.lane.b32.xlu0 %v626, 64
    %v632 = vpop.permute.xlu0 %631
    %v635 = vmul.f32 %v589, %v630
    %v636 = vmul.f32 %v591, %v632
    %vm637 = vcmp.gt.f32.partialorder %v172, 1.0
    %v638 = vsel %vm637, 1, 0
    %v639 = vcvt.s32.f32 %v638
    %vm640 = vcmp.gt.f32.partialorder %v172, 6.0
    %v641 = vsel %vm640, 1, 0
    %v642 = vcvt.s32.f32 %v641
    %644 = vset.pattern.permute.xlu0 0
    %645 = vperm.xlu0 %644, %v639
    %v646 = vpop.permute.xlu0 %645
    %v650 = vrot.slane %v571, 1
    %v651 = vsel %vm370, %v572, %v650
    %652 = vrot.lane.b32.xlu0 %v651, 32
    %v653 = vpop.permute.xlu0 %652
    %v655 = vmul.f32 %v646, %v653
    %v656 = vsub.f32 1.0, %v639
    %658 = vset.pattern.permute.xlu0 0
    %659 = vperm.xlu0 %658, %v656
    %v660 = vpop.permute.xlu0 %659
    %v662 = vmul.f32 %v660, %v383
    %v663 = vadd.f32 %v655, %v662
    %v666 = vrot.slane %v559, 1
    %v667 = vsel %vm370, %v560, %v666
    %668 = vrot.lane.b32.xlu0 %v667, 96
    %v669 = vpop.permute.xlu0 %668
    %v671 = vmul.f32 %v646, %v669
    %v672 = vmul.f32 %v660, %v392
    %v673 = vadd.f32 %v671, %v672
    %675 = vset.pattern.permute.xlu0 0
    %676 = vperm.xlu0 %675, %v642
    %v677 = vpop.permute.xlu0 %676
    %v681 = vrot.slane %v635, 6
    %v682 = vrot.slane %v636, 5
    %v683 = vsel %vm370, %v682, %v681
    %684 = vrot.lane.b32.xlu0 %v683, 32
    %v685 = vpop.permute.xlu0 %684
    %v687 = vmul.f32 %v677, %v685
    %v688 = vsub.f32 1.0, %v642
    %690 = vset.pattern.permute.xlu0 0
    %691 = vperm.xlu0 %690, %v688
    %v692 = vpop.permute.xlu0 %691
    %v694 = vmul.f32 %v692, %v414
    %v695 = vadd.f32 %v687, %v694
    %v698 = vrot.slane %v623, 6
    %v699 = vrot.slane %v624, 5
    %v700 = vsel %vm370, %v699, %v698
    %701 = vrot.lane.b32.xlu0 %v700, 96
    %v702 = vpop.permute.xlu0 %701
    %v704 = vmul.f32 %v677, %v702
    %v705 = vmul.f32 %v692, %v424
    %v706 = vadd.f32 %v704, %v705
    %v707 = vmul.f32 %v663, %v646
    %s708 = scalar_lea.vmem [#allocation2], 2
    %709 = vst.msk [vmem:[%s708] sm:$0x3] %vm426, %v707
    %v710 = vmul.f32 %v695, %v677
    %s711 = scalar_lea.vmem [#allocation3], 12
    %712 = vst.msk [vmem:[%s711] sm:$0x3] %vm426, %v710
    %714 = vrot.lane.b32.xlu0 %v695, 32
    %v715 = vpop.permute.xlu0 %714
    %v717 = vsel %vm435, %v663, %v715
    %v719 = vsel %vm72, %v717, 0
    %721 = vmatprep.subr.mxu0 %v157
    %722 = vmatpush1.msra.mxu0 %v156
    %723 = vmatprep.subr.mxu0 %v159
    %724 = vmatpush1.msra.mxu0 %v158
    %725 = vmatprep.subr.mxu0 %v161
    %726 = vmatpush1.msra.mxu0 %v160
    %727 = vmatprep.subr.mxu0 %v163
    %728 = vmatpush1.msra.mxu0 %v162
    %729 = vmatprep.subr.mxu0 %v165
    %730 = vmatpush1.msra.mxu0 %v164
    %731 = vmatprep.subr.mxu0 %v167
    %732 = vmatpush1.msra.mxu0 %v166
    %733 = vmatprep.subr.mxu0 %v169
    %734 = vmatpush1.msra.mxu0 %v168
    %735 = vmatprep.subr.mxu0 %v171
    %736 = vmatpush1.msra.mxu0 %v170
    %737 = vmatprep.subr.mxu0 0.0
    %738 = vmatpush1.msra.mxu0 0.0
    %739 = vmatprep.subr.mxu0 0.0
    %740 = vmatpush1.msra.mxu0 0.0
    %741 = vmatprep.subr.mxu0 0.0
    %742 = vmatpush1.msra.mxu0 0.0
    %743 = vmatprep.subr.mxu0 0.0
    %744 = vmatpush1.msra.mxu0 0.0
    %745 = vmatprep.subr.mxu0 0.0
    %746 = vmatpush1.msra.mxu0 0.0
    %747 = vmatprep.subr.mxu0 0.0
    %748 = vmatpush1.msra.mxu0 0.0
    %749 = vmatprep.subr.mxu0 0.0
    %750 = vmatpush1.msra.mxu0 0.0
    %751 = vmatprep.subr.mxu0 0.0
    %752 = vmatpush1.msra.mxu0 0.0
    %753 = vmatprep.subr.mxu0 0.0
    %754 = vmatpush1.msra.mxu0 0.0
    %755 = vmatprep.subr.mxu0 0.0
    %756 = vmatpush1.msra.mxu0 0.0
    %757 = vmatprep.subr.mxu0 0.0
    %758 = vmatpush1.msra.mxu0 0.0
    %759 = vmatprep.subr.mxu0 0.0
    %760 = vmatpush1.msra.mxu0 0.0
    %761 = vmatprep.subr.mxu0 0.0
    %762 = vmatpush1.msra.mxu0 0.0
    %763 = vmatprep.subr.mxu0 0.0
    %764 = vmatpush1.msra.mxu0 0.0
    %765 = vmatprep.subr.mxu0 0.0
    %766 = vmatpush1.msra.mxu0 0.0
    %767 = vmatprep.subr.mxu0 0.0
    %768 = vmatpush1.msra.mxu0 0.0
    %769 = vmatprep.subr.mxu0 0.0
    %770 = vmatpush1.msra.mxu0 0.0
    %771 = vmatprep.subr.mxu0 0.0
    %772 = vmatpush1.msra.mxu0 0.0
    %773 = vmatprep.subr.mxu0 0.0
    %774 = vmatpush1.msra.mxu0 0.0
    %775 = vmatprep.subr.mxu0 0.0
    %776 = vmatpush1.msra.mxu0 0.0
    %777 = vmatprep.subr.mxu0 0.0
    %778 = vmatpush1.msra.mxu0 0.0
    %779 = vmatprep.subr.mxu0 0.0
    %780 = vmatpush1.msra.mxu0 0.0
    %781 = vmatprep.subr.mxu0 0.0
    %782 = vmatpush1.msra.mxu0 0.0
    %783 = vmatprep.subr.mxu0 0.0
    %784 = vmatpush1.msra.mxu0 0.0
    %785 = vmatprep.mubr.f32.mxu0 0.0
    %786 = vmatmul.mubr.f32.gmra.mrb[0].mxu0 %v719
    %v787 = vpop.f32.mrb[0].mxu0
    %v788 = vadd.f32 0.0, %v787
    %v789 = vpop.f32.mrb[0].mxu0
    %v790 = vadd.f32 0.0, %v789
    %791 = vdwg.mxu0
    %v793 = vrot.slane %v788, 6
    %v794 = vrot.slane %v788, 7
    %v797 = vadd.f32 %v146, %v793
    %v798 = vadd.f32 %v152, %v794
    %v799 = vxor.u32 %v797, 2147483648
    %v800 = vxor.u32 %v798, 2147483648
    %v801 = vmul.f32 %v799, 1.442695
    %v802 = vpow.pop %v801
    %v803 = vmul.f32 %v800, 1.442695
    %v804 = vpow.pop %v803
    %v805 = vadd.f32 %v802, 1.0
    %v806 = vadd.f32 %v804, 1.0
    %v807 = vrcp.pop %v805
    %v808 = vmul.f32 1.0, %v807
    %v809 = vrcp.pop %v806
    %v810 = vmul.f32 1.0, %v809
    %v811 = vtanh.pop %v797
    %v812 = vtanh.pop %v798
    %v814 = vrot.slane %v673, 6
    %v815 = vrot.slane %v673, 7
    %816 = vrot.lane.b32.xlu0 %v814, 32
    %v817 = vpop.permute.xlu0 %816
    %818 = vrot.lane.b32.xlu0 %v815, 32
    %v819 = vpop.permute.xlu0 %818
    %v822 = vmul.f32 %v808, %v817
    %v823 = vmul.f32 %v810, %v819
    %826 = vrot.lane.b32.xlu0 %v811, 64
    %v827 = vpop.permute.xlu0 %826
    %828 = vrot.lane.b32.xlu0 %v812, 64
    %v829 = vpop.permute.xlu0 %828
    %v832 = vmul.f32 %v808, %v827
    %v833 = vmul.f32 %v810, %v829
    %836 = vrot.lane.b32.xlu0 %v832, 32
    %v837 = vpop.permute.xlu0 %836
    %838 = vrot.lane.b32.xlu0 %v833, 32
    %v839 = vpop.permute.xlu0 %838
    %v842 = vadd.f32 %v822, %v837
    %v843 = vadd.f32 %v823, %v839
    %v844 = vtanh.pop %v842
    %v845 = vtanh.pop %v843
    %848 = vrot.lane.b32.xlu0 %v844, 64
    %v849 = vpop.permute.xlu0 %848
    %850 = vrot.lane.b32.xlu0 %v845, 64
    %v851 = vpop.permute.xlu0 %850
    %v854 = vmul.f32 %v808, %v849
    %v855 = vmul.f32 %v810, %v851
    %v857 = vrot.slane %v790, 3
    %v858 = vrot.slane %v790, 4
    %v861 = vadd.f32 %v148, %v857
    %v862 = vadd.f32 %v154, %v858
    %v863 = vxor.u32 %v861, 2147483648
    %v864 = vxor.u32 %v862, 2147483648
    %v865 = vmul.f32 %v863, 1.442695
    %v866 = vpow.pop %v865
    %v867 = vmul.f32 %v864, 1.442695
    %v868 = vpow.pop %v867
    %v869 = vadd.f32 %v866, 1.0
    %v870 = vadd.f32 %v868, 1.0
    %v871 = vrcp.pop %v869
    %v872 = vmul.f32 1.0, %v871
    %v873 = vrcp.pop %v870
    %v874 = vmul.f32 1.0, %v873
    %v875 = vtanh.pop %v861
    %v876 = vtanh.pop %v862
    %v878 = vrot.slane %v706, 3
    %v879 = vrot.slane %v706, 4
    %880 = vrot.lane.b32.xlu0 %v878, 32
    %v881 = vpop.permute.xlu0 %880
    %882 = vrot.lane.b32.xlu0 %v879, 32
    %v883 = vpop.permute.xlu0 %882
    %v886 = vmul.f32 %v872, %v881
    %v887 = vmul.f32 %v874, %v883
    %890 = vrot.lane.b32.xlu0 %v875, 64
    %v891 = vpop.permute.xlu0 %890
    %892 = vrot.lane.b32.xlu0 %v876, 64
    %v893 = vpop.permute.xlu0 %892
    %v896 = vmul.f32 %v872, %v891
    %v897 = vmul.f32 %v874, %v893
    %900 = vrot.lane.b32.xlu0 %v896, 32
    %v901 = vpop.permute.xlu0 %900
    %902 = vrot.lane.b32.xlu0 %v897, 32
    %v903 = vpop.permute.xlu0 %902
    %v906 = vadd.f32 %v886, %v901
    %v907 = vadd.f32 %v887, %v903
    %v908 = vtanh.pop %v906
    %v909 = vtanh.pop %v907
    %912 = vrot.lane.b32.xlu0 %v908, 64
    %v913 = vpop.permute.xlu0 %912
    %914 = vrot.lane.b32.xlu0 %v909, 64
    %v915 = vpop.permute.xlu0 %914
    %v918 = vmul.f32 %v872, %v913
    %v919 = vmul.f32 %v874, %v915
    %vm920 = vcmp.gt.f32.partialorder %v172, 2.0
    %v921 = vsel %vm920, 1, 0
    %v922 = vcvt.s32.f32 %v921
    %vm923 = vcmp.gt.f32.partialorder %v172, 5.0
    %v924 = vsel %vm923, 1, 0
    %v925 = vcvt.s32.f32 %v924
    %927 = vset.pattern.permute.xlu0 0
    %928 = vperm.xlu0 %927, %v922
    %v929 = vpop.permute.xlu0 %928
    %v933 = vrot.slane %v854, 2
    %v934 = vrot.slane %v855, 1
    %v935 = vsel %vm370, %v934, %v933
    %936 = vrot.lane.b32.xlu0 %v935, 32
    %v937 = vpop.permute.xlu0 %936
    %v939 = vmul.f32 %v929, %v937
    %v940 = vsub.f32 1.0, %v922
    %942 = vset.pattern.permute.xlu0 0
    %943 = vperm.xlu0 %942, %v940
    %v944 = vpop.permute.xlu0 %943
    %v946 = vmul.f32 %v944, %v663
    %v947 = vadd.f32 %v939, %v946
    %v950 = vrot.slane %v842, 2
    %v951 = vrot.slane %v843, 1
    %v952 = vsel %vm370, %v951, %v950
    %953 = vrot.lane.b32.xlu0 %v952, 96
    %v954 = vpop.permute.xlu0 %953
    %v956 = vmul.f32 %v929, %v954
    %v957 = vmul.f32 %v944, %v673
    %v958 = vadd.f32 %v956, %v957
    %960 = vset.pattern.permute.xlu0 0
    %961 = vperm.xlu0 %960, %v925
    %v962 = vpop.permute.xlu0 %961
    %v966 = vrot.slane %v918, 5
    %v967 = vrot.slane %v919, 4
    %v968 = vsel %vm370, %v967, %v966
    %969 = vrot.lane.b32.xlu0 %v968, 32
    %v970 = vpop.permute.xlu0 %969
    %v972 = vmul.f32 %v962, %v970
    %v973 = vsub.f32 1.0, %v925
    %975 = vset.pattern.permute.xlu0 0
    %976 = vperm.xlu0 %975, %v973
    %v977 = vpop.permute.xlu0 %976
    %v979 = vmul.f32 %v977, %v695
    %v980 = vadd.f32 %v972, %v979
    %v983 = vrot.slane %v906, 5
    %v984 = vrot.slane %v907, 4
    %v985 = vsel %vm370, %v984, %v983
    %986 = vrot.lane.b32.xlu0 %v985, 96
    %v987 = vpop.permute.xlu0 %986
    %v989 = vmul.f32 %v962, %v987
    %v990 = vmul.f32 %v977, %v706
    %v991 = vadd.f32 %v989, %v990
    %v992 = vmul.f32 %v947, %v929
    %s993 = scalar_lea.vmem [#allocation2], 4
    %994 = vst.msk [vmem:[%s993] sm:$0x3] %vm426, %v992
    %v995 = vmul.f32 %v980, %v962
    %s996 = scalar_lea.vmem [#allocation3], 10
    %997 = vst.msk [vmem:[%s996] sm:$0x3] %vm426, %v995
    %999 = vrot.lane.b32.xlu0 %v980, 32
    %v1000 = vpop.permute.xlu0 %999
    %v1002 = vsel %vm435, %v947, %v1000
    %v1004 = vsel %vm72, %v1002, 0
    %1006 = vmatprep.subr.mxu0 %v157
    %1007 = vmatpush1.msra.mxu0 %v156
    %1008 = vmatprep.subr.mxu0 %v159
    %1009 = vmatpush1.msra.mxu0 %v158
    %1010 = vmatprep.subr.mxu0 %v161
    %1011 = vmatpush1.msra.mxu0 %v160
    %1012 = vmatprep.subr.mxu0 %v163
    %1013 = vmatpush1.msra.mxu0 %v162
    %1014 = vmatprep.subr.mxu0 %v165
    %1015 = vmatpush1.msra.mxu0 %v164
    %1016 = vmatprep.subr.mxu0 %v167
    %1017 = vmatpush1.msra.mxu0 %v166
    %1018 = vmatprep.subr.mxu0 %v169
    %1019 = vmatpush1.msra.mxu0 %v168
    %1020 = vmatprep.subr.mxu0 %v171
    %1021 = vmatpush1.msra.mxu0 %v170
    %1022 = vmatprep.subr.mxu0 0.0
    %1023 = vmatpush1.msra.mxu0 0.0
    %1024 = vmatprep.subr.mxu0 0.0
    %1025 = vmatpush1.msra.mxu0 0.0
    %1026 = vmatprep.subr.mxu0 0.0
    %1027 = vmatpush1.msra.mxu0 0.0
    %1028 = vmatprep.subr.mxu0 0.0
    %1029 = vmatpush1.msra.mxu0 0.0
    %1030 = vmatprep.subr.mxu0 0.0
    %1031 = vmatpush1.msra.mxu0 0.0
    %1032 = vmatprep.subr.mxu0 0.0
    %1033 = vmatpush1.msra.mxu0 0.0
    %1034 = vmatprep.subr.mxu0 0.0
    %1035 = vmatpush1.msra.mxu0 0.0
    %1036 = vmatprep.subr.mxu0 0.0
    %1037 = vmatpush1.msra.mxu0 0.0
    %1038 = vmatprep.subr.mxu0 0.0
    %1039 = vmatpush1.msra.mxu0 0.0
    %1040 = vmatprep.subr.mxu0 0.0
    %1041 = vmatpush1.msra.mxu0 0.0
    %1042 = vmatprep.subr.mxu0 0.0
    %1043 = vmatpush1.msra.mxu0 0.0
    %1044 = vmatprep.subr.mxu0 0.0
    %1045 = vmatpush1.msra.mxu0 0.0
    %1046 = vmatprep.subr.mxu0 0.0
    %1047 = vmatpush1.msra.mxu0 0.0
    %1048 = vmatprep.subr.mxu0 0.0
    %1049 = vmatpush1.msra.mxu0 0.0
    %1050 = vmatprep.subr.mxu0 0.0
    %1051 = vmatpush1.msra.mxu0 0.0
    %1052 = vmatprep.subr.mxu0 0.0
    %1053 = vmatpush1.msra.mxu0 0.0
    %1054 = vmatprep.subr.mxu0 0.0
    %1055 = vmatpush1.msra.mxu0 0.0
    %1056 = vmatprep.subr.mxu0 0.0
    %1057 = vmatpush1.msra.mxu0 0.0
    %1058 = vmatprep.subr.mxu0 0.0
    %1059 = vmatpush1.msra.mxu0 0.0
    %1060 = vmatprep.subr.mxu0 0.0
    %1061 = vmatpush1.msra.mxu0 0.0
    %1062 = vmatprep.subr.mxu0 0.0
    %1063 = vmatpush1.msra.mxu0 0.0
    %1064 = vmatprep.subr.mxu0 0.0
    %1065 = vmatpush1.msra.mxu0 0.0
    %1066 = vmatprep.subr.mxu0 0.0
    %1067 = vmatpush1.msra.mxu0 0.0
    %1068 = vmatprep.subr.mxu0 0.0
    %1069 = vmatpush1.msra.mxu0 0.0
    %1070 = vmatprep.mubr.f32.mxu0 0.0
    %1071 = vmatmul.mubr.f32.gmra.mrb[0].mxu0 %v1004
    %v1072 = vpop.f32.mrb[0].mxu0
    %v1073 = vadd.f32 0.0, %v1072
    %v1074 = vpop.f32.mrb[0].mxu0
    %v1075 = vadd.f32 0.0, %v1074
    %1076 = vdwg.mxu0
    %v1078 = vrot.slane %v1073, 5
    %v1079 = vrot.slane %v1073, 6
    %v1082 = vadd.f32 %v146, %v1078
    %v1083 = vadd.f32 %v152, %v1079
    %v1084 = vxor.u32 %v1082, 2147483648
    %v1085 = vxor.u32 %v1083, 2147483648
    %v1086 = vmul.f32 %v1084, 1.442695
    %v1087 = vpow.pop %v1086
    %v1088 = vmul.f32 %v1085, 1.442695
    %v1089 = vpow.pop %v1088
    %v1090 = vadd.f32 %v1087, 1.0
    %v1091 = vadd.f32 %v1089, 1.0
    %v1092 = vrcp.pop %v1090
    %v1093 = vmul.f32 1.0, %v1092
    %v1094 = vrcp.pop %v1091
    %v1095 = vmul.f32 1.0, %v1094
    %v1096 = vtanh.pop %v1082
    %v1097 = vtanh.pop %v1083
    %v1099 = vrot.slane %v958, 5
    %v1100 = vrot.slane %v958, 6
    %1101 = vrot.lane.b32.xlu0 %v1099, 32
    %v1102 = vpop.permute.xlu0 %1101
    %1103 = vrot.lane.b32.xlu0 %v1100, 32
    %v1104 = vpop.permute.xlu0 %1103
    %v1107 = vmul.f32 %v1093, %v1102
    %v1108 = vmul.f32 %v1095, %v1104
    %1111 = vrot.lane.b32.xlu0 %v1096, 64
    %v1112 = vpop.permute.xlu0 %1111
    %1113 = vrot.lane.b32.xlu0 %v1097, 64
    %v1114 = vpop.permute.xlu0 %1113
    %v1117 = vmul.f32 %v1093, %v1112
    %v1118 = vmul.f32 %v1095, %v1114
    %1121 = vrot.lane.b32.xlu0 %v1117, 32
    %v1122 = vpop.permute.xlu0 %1121
    %1123 = vrot.lane.b32.xlu0 %v1118, 32
    %v1124 = vpop.permute.xlu0 %1123
    %v1127 = vadd.f32 %v1107, %v1122
    %v1128 = vadd.f32 %v1108, %v1124
    %v1129 = vtanh.pop %v1127
    %v1130 = vtanh.pop %v1128
    %1133 = vrot.lane.b32.xlu0 %v1129, 64
    %v1134 = vpop.permute.xlu0 %1133
    %1135 = vrot.lane.b32.xlu0 %v1130, 64
    %v1136 = vpop.permute.xlu0 %1135
    %v1139 = vmul.f32 %v1093, %v1134
    %v1140 = vmul.f32 %v1095, %v1136
    %v1142 = vrot.slane %v1075, 4
    %v1143 = vrot.slane %v1075, 5
    %v1146 = vadd.f32 %v148, %v1142
    %v1147 = vadd.f32 %v154, %v1143
    %v1148 = vxor.u32 %v1146, 2147483648
    %v1149 = vxor.u32 %v1147, 2147483648
    %v1150 = vmul.f32 %v1148, 1.442695
    %v1151 = vpow.pop %v1150
    %v1152 = vmul.f32 %v1149, 1.442695
    %v1153 = vpow.pop %v1152
    %v1154 = vadd.f32 %v1151, 1.0
    %v1155 = vadd.f32 %v1153, 1.0
    %v1156 = vrcp.pop %v1154
    %v1157 = vmul.f32 1.0, %v1156
    %v1158 = vrcp.pop %v1155
    %v1159 = vmul.f32 1.0, %v1158
    %v1160 = vtanh.pop %v1146
    %v1161 = vtanh.pop %v1147
    %v1163 = vrot.slane %v991, 4
    %v1164 = vrot.slane %v991, 5
    %1165 = vrot.lane.b32.xlu0 %v1163, 32
    %v1166 = vpop.permute.xlu0 %1165
    %1167 = vrot.lane.b32.xlu0 %v1164, 32
    %v1168 = vpop.permute.xlu0 %1167
    %v1171 = vmul.f32 %v1157, %v1166
    %v1172 = vmul.f32 %v1159, %v1168
    %1175 = vrot.lane.b32.xlu0 %v1160, 64
    %v1176 = vpop.permute.xlu0 %1175
    %1177 = vrot.lane.b32.xlu0 %v1161, 64
    %v1178 = vpop.permute.xlu0 %1177
    %v1181 = vmul.f32 %v1157, %v1176
    %v1182 = vmul.f32 %v1159, %v1178
    %1185 = vrot.lane.b32.xlu0 %v1181, 32
    %v1186 = vpop.permute.xlu0 %1185
    %1187 = vrot.lane.b32.xlu0 %v1182, 32
    %v1188 = vpop.permute.xlu0 %1187
    %v1191 = vadd.f32 %v1171, %v1186
    %v1192 = vadd.f32 %v1172, %v1188
    %v1193 = vtanh.pop %v1191
    %v1194 = vtanh.pop %v1192
    %1197 = vrot.lane.b32.xlu0 %v1193, 64
    %v1198 = vpop.permute.xlu0 %1197
    %1199 = vrot.lane.b32.xlu0 %v1194, 64
    %v1200 = vpop.permute.xlu0 %1199
    %v1203 = vmul.f32 %v1157, %v1198
    %v1204 = vmul.f32 %v1159, %v1200
    %vm1205 = vcmp.gt.f32.partialorder %v172, 3.0
    %v1206 = vsel %vm1205, 1, 0
    %v1207 = vcvt.s32.f32 %v1206
    %vm1208 = vcmp.gt.f32.partialorder %v172, 4.0
    %v1209 = vsel %vm1208, 1, 0
    %v1210 = vcvt.s32.f32 %v1209
    %1212 = vset.pattern.permute.xlu0 0
    %1213 = vperm.xlu0 %1212, %v1207
    %v1214 = vpop.permute.xlu0 %1213
    %v1218 = vrot.slane %v1139, 3
    %v1219 = vrot.slane %v1140, 2
    %v1220 = vsel %vm370, %v1219, %v1218
    %1221 = vrot.lane.b32.xlu0 %v1220, 32
    %v1222 = vpop.permute.xlu0 %1221
    %v1224 = vmul.f32 %v1214, %v1222
    %v1225 = vsub.f32 1.0, %v1207
    %1227 = vset.pattern.permute.xlu0 0
    %1228 = vperm.xlu0 %1227, %v1225
    %v1229 = vpop.permute.xlu0 %1228
    %v1231 = vmul.f32 %v1229, %v947
    %v1232 = vadd.f32 %v1224, %v1231
    %v1235 = vrot.slane %v1127, 3
    %v1236 = vrot.slane %v1128, 2
    %v1237 = vsel %vm370, %v1236, %v1235
    %1238 = vrot.lane.b32.xlu0 %v1237, 96
    %v1239 = vpop.permute.xlu0 %1238
    %v1241 = vmul.f32 %v1214, %v1239
    %v1242 = vmul.f32 %v1229, %v958
    %v1243 = vadd.f32 %v1241, %v1242
    %1245 = vset.pattern.permute.xlu0 0
    %1246 = vperm.xlu0 %1245, %v1210
    %v1247 = vpop.permute.xlu0 %1246
    %v1251 = vrot.slane %v1203, 4
    %v1252 = vrot.slane %v1204, 3
    %v1253 = vsel %vm370, %v1252, %v1251
    %1254 = vrot.lane.b32.xlu0 %v1253, 32
    %v1255 = vpop.permute.xlu0 %1254
    %v1257 = vmul.f32 %v1247, %v1255
    %v1258 = vsub.f32 1.0, %v1210
    %1260 = vset.pattern.permute.xlu0 0
    %1261 = vperm.xlu0 %1260, %v1258
    %v1262 = vpop.permute.xlu0 %1261
    %v1264 = vmul.f32 %v1262, %v980
    %v1265 = vadd.f32 %v1257, %v1264
    %v1268 = vrot.slane %v1191, 4
    %v1269 = vrot.slane %v1192, 3
    %v1270 = vsel %vm370, %v1269, %v1268
    %1271 = vrot.lane.b32.xlu0 %v1270, 96
    %v1272 = vpop.permute.xlu0 %1271
    %v1274 = vmul.f32 %v1247, %v1272
    %v1275 = vmul.f32 %v1262, %v991
    %v1276 = vadd.f32 %v1274, %v1275
    %v1277 = vmul.f32 %v1232, %v1214
    %s1278 = scalar_lea.vmem [#allocation2], 6
    %1279 = vst.msk [vmem:[%s1278] sm:$0x3] %vm426, %v1277
    %v1280 = vmul.f32 %v1265, %v1247
    %s1281 = scalar_lea.vmem [#allocation3], 8
    %1282 = vst.msk [vmem:[%s1281] sm:$0x3] %vm426, %v1280
    %1284 = vrot.lane.b32.xlu0 %v1265, 32
    %v1285 = vpop.permute.xlu0 %1284
    %v1287 = vsel %vm435, %v1232, %v1285
    %v1289 = vsel %vm72, %v1287, 0
    %1291 = vmatprep.subr.mxu0 %v157
    %1292 = vmatpush1.msra.mxu0 %v156
    %1293 = vmatprep.subr.mxu0 %v159
    %1294 = vmatpush1.msra.mxu0 %v158
    %1295 = vmatprep.subr.mxu0 %v161
    %1296 = vmatpush1.msra.mxu0 %v160
    %1297 = vmatprep.subr.mxu0 %v163
    %1298 = vmatpush1.msra.mxu0 %v162
    %1299 = vmatprep.subr.mxu0 %v165
    %1300 = vmatpush1.msra.mxu0 %v164
    %1301 = vmatprep.subr.mxu0 %v167
    %1302 = vmatpush1.msra.mxu0 %v166
    %1303 = vmatprep.subr.mxu0 %v169
    %1304 = vmatpush1.msra.mxu0 %v168
    %1305 = vmatprep.subr.mxu0 %v171
    %1306 = vmatpush1.msra.mxu0 %v170
    %1307 = vmatprep.subr.mxu0 0.0
    %1308 = vmatpush1.msra.mxu0 0.0
    %1309 = vmatprep.subr.mxu0 0.0
    %1310 = vmatpush1.msra.mxu0 0.0
    %1311 = vmatprep.subr.mxu0 0.0
    %1312 = vmatpush1.msra.mxu0 0.0
    %1313 = vmatprep.subr.mxu0 0.0
    %1314 = vmatpush1.msra.mxu0 0.0
    %1315 = vmatprep.subr.mxu0 0.0
    %1316 = vmatpush1.msra.mxu0 0.0
    %1317 = vmatprep.subr.mxu0 0.0
    %1318 = vmatpush1.msra.mxu0 0.0
    %1319 = vmatprep.subr.mxu0 0.0
    %1320 = vmatpush1.msra.mxu0 0.0
    %1321 = vmatprep.subr.mxu0 0.0
    %1322 = vmatpush1.msra.mxu0 0.0
    %1323 = vmatprep.subr.mxu0 0.0
    %1324 = vmatpush1.msra.mxu0 0.0
    %1325 = vmatprep.subr.mxu0 0.0
    %1326 = vmatpush1.msra.mxu0 0.0
    %1327 = vmatprep.subr.mxu0 0.0
    %1328 = vmatpush1.msra.mxu0 0.0
    %1329 = vmatprep.subr.mxu0 0.0
    %1330 = vmatpush1.msra.mxu0 0.0
    %1331 = vmatprep.subr.mxu0 0.0
    %1332 = vmatpush1.msra.mxu0 0.0
    %1333 = vmatprep.subr.mxu0 0.0
    %1334 = vmatpush1.msra.mxu0 0.0
    %1335 = vmatprep.subr.mxu0 0.0
    %1336 = vmatpush1.msra.mxu0 0.0
    %1337 = vmatprep.subr.mxu0 0.0
    %1338 = vmatpush1.msra.mxu0 0.0
    %1339 = vmatprep.subr.mxu0 0.0
    %1340 = vmatpush1.msra.mxu0 0.0
    %1341 = vmatprep.subr.mxu0 0.0
    %1342 = vmatpush1.msra.mxu0 0.0
    %1343 = vmatprep.subr.mxu0 0.0
    %1344 = vmatpush1.msra.mxu0 0.0
    %1345 = vmatprep.subr.mxu0 0.0
    %1346 = vmatpush1.msra.mxu0 0.0
    %1347 = vmatprep.subr.mxu0 0.0
    %1348 = vmatpush1.msra.mxu0 0.0
    %1349 = vmatprep.subr.mxu0 0.0
    %1350 = vmatpush1.msra.mxu0 0.0
    %1351 = vmatprep.subr.mxu0 0.0
    %1352 = vmatpush1.msra.mxu0 0.0
    %1353 = vmatprep.subr.mxu0 0.0
    %1354 = vmatpush1.msra.mxu0 0.0
    %1355 = vmatprep.mubr.f32.mxu0 0.0
    %1356 = vmatmul.mubr.f32.gmra.mrb[0].mxu0 %v1289
    %v1357 = vpop.f32.mrb[0].mxu0
    %v1358 = vadd.f32 0.0, %v1357
    %v1359 = vpop.f32.mrb[0].mxu0
    %v1360 = vadd.f32 0.0, %v1359
    %1361 = vdwg.mxu0
    %v1363 = vrot.slane %v1358, 4
    %v1364 = vrot.slane %v1358, 5
    %v1367 = vadd.f32 %v146, %v1363
    %v1368 = vadd.f32 %v152, %v1364
    %v1369 = vxor.u32 %v1367, 2147483648
    %v1370 = vxor.u32 %v1368, 2147483648
    %v1371 = vmul.f32 %v1369, 1.442695
    %v1372 = vpow.pop %v1371
    %v1373 = vmul.f32 %v1370, 1.442695
    %v1374 = vpow.pop %v1373
    %v1375 = vadd.f32 %v1372, 1.0
    %v1376 = vadd.f32 %v1374, 1.0
    %v1377 = vrcp.pop %v1375
    %v1378 = vmul.f32 1.0, %v1377
    %v1379 = vrcp.pop %v1376
    %v1380 = vmul.f32 1.0, %v1379
    %v1381 = vtanh.pop %v1367
    %v1382 = vtanh.pop %v1368
    %v1384 = vrot.slane %v1243, 4
    %v1385 = vrot.slane %v1243, 5
    %1386 = vrot.lane.b32.xlu0 %v1384, 32
    %v1387 = vpop.permute.xlu0 %1386
    %1388 = vrot.lane.b32.xlu0 %v1385, 32
    %v1389 = vpop.permute.xlu0 %1388
    %v1392 = vmul.f32 %v1378, %v1387
    %v1393 = vmul.f32 %v1380, %v1389
    %1396 = vrot.lane.b32.xlu0 %v1381, 64
    %v1397 = vpop.permute.xlu0 %1396
    %1398 = vrot.lane.b32.xlu0 %v1382, 64
    %v1399 = vpop.permute.xlu0 %1398
    %v1402 = vmul.f32 %v1378, %v1397
    %v1403 = vmul.f32 %v1380, %v1399
    %1406 = vrot.lane.b32.xlu0 %v1402, 32
    %v1407 = vpop.permute.xlu0 %1406
    %1408 = vrot.lane.b32.xlu0 %v1403, 32
    %v1409 = vpop.permute.xlu0 %1408
    %v1412 = vadd.f32 %v1392, %v1407
    %v1413 = vadd.f32 %v1393, %v1409
    %v1414 = vtanh.pop %v1412
    %v1415 = vtanh.pop %v1413
    %1418 = vrot.lane.b32.xlu0 %v1414, 64
    %v1419 = vpop.permute.xlu0 %1418
    %1420 = vrot.lane.b32.xlu0 %v1415, 64
    %v1421 = vpop.permute.xlu0 %1420
    %v1424 = vmul.f32 %v1378, %v1419
    %v1425 = vmul.f32 %v1380, %v1421
    %v1427 = vrot.slane %v1360, 5
    %v1428 = vrot.slane %v1360, 6
    %v1431 = vadd.f32 %v148, %v1427
    %v1432 = vadd.f32 %v154, %v1428
    %v1433 = vxor.u32 %v1431, 2147483648
    %v1434 = vxor.u32 %v1432, 2147483648
    %v1435 = vmul.f32 %v1433, 1.442695
    %v1436 = vpow.pop %v1435
    %v1437 = vmul.f32 %v1434, 1.442695
    %v1438 = vpow.pop %v1437
    %v1439 = vadd.f32 %v1436, 1.0
    %v1440 = vadd.f32 %v1438, 1.0
    %v1441 = vrcp.pop %v1439
    %v1442 = vmul.f32 1.0, %v1441
    %v1443 = vrcp.pop %v1440
    %v1444 = vmul.f32 1.0, %v1443
    %v1445 = vtanh.pop %v1431
    %v1446 = vtanh.pop %v1432
    %v1448 = vrot.slane %v1276, 5
    %v1449 = vrot.slane %v1276, 6
    %1450 = vrot.lane.b32.xlu0 %v1448, 32
    %v1451 = vpop.permute.xlu0 %1450
    %1452 = vrot.lane.b32.xlu0 %v1449, 32
    %v1453 = vpop.permute.xlu0 %1452
    %v1456 = vmul.f32 %v1442, %v1451
    %v1457 = vmul.f32 %v1444, %v1453
    %1460 = vrot.lane.b32.xlu0 %v1445, 64
    %v1461 = vpop.permute.xlu0 %1460
    %1462 = vrot.lane.b32.xlu0 %v1446, 64
    %v1463 = vpop.permute.xlu0 %1462
    %v1466 = vmul.f32 %v1442, %v1461
    %v1467 = vmul.f32 %v1444, %v1463
    %1470 = vrot.lane.b32.xlu0 %v1466, 32
    %v1471 = vpop.permute.xlu0 %1470
    %1472 = vrot.lane.b32.xlu0 %v1467, 32
    %v1473 = vpop.permute.xlu0 %1472
    %v1476 = vadd.f32 %v1456, %v1471
    %v1477 = vadd.f32 %v1457, %v1473
    %v1478 = vtanh.pop %v1476
    %v1479 = vtanh.pop %v1477
    %1482 = vrot.lane.b32.xlu0 %v1478, 64
    %v1483 = vpop.permute.xlu0 %1482
    %1484 = vrot.lane.b32.xlu0 %v1479, 64
    %v1485 = vpop.permute.xlu0 %1484
    %v1488 = vmul.f32 %v1442, %v1483
    %v1489 = vmul.f32 %v1444, %v1485
    %v1492 = vrot.slane %v1424, 4
    %v1493 = vrot.slane %v1425, 3
    %v1494 = vsel %vm370, %v1493, %v1492
    %1495 = vrot.lane.b32.xlu0 %v1494, 32
    %v1496 = vpop.permute.xlu0 %1495
    %v1498 = vmul.f32 %v1247, %v1496
    %v1499 = vmul.f32 %v1262, %v1232
    %v1500 = vadd.f32 %v1498, %v1499
    %v1503 = vrot.slane %v1412, 4
    %v1504 = vrot.slane %v1413, 3
    %v1505 = vsel %vm370, %v1504, %v1503
    %1506 = vrot.lane.b32.xlu0 %v1505, 96
    %v1507 = vpop.permute.xlu0 %1506
    %v1509 = vmul.f32 %v1247, %v1507
    %v1510 = vmul.f32 %v1262, %v1243
    %v1511 = vadd.f32 %v1509, %v1510
    %v1514 = vrot.slane %v1488, 3
    %v1515 = vrot.slane %v1489, 2
    %v1516 = vsel %vm370, %v1515, %v1514
    %1517 = vrot.lane.b32.xlu0 %v1516, 32
    %v1518 = vpop.permute.xlu0 %1517
    %v1520 = vmul.f32 %v1214, %v1518
    %v1521 = vmul.f32 %v1229, %v1265
    %v1522 = vadd.f32 %v1520, %v1521
    %v1525 = vrot.slane %v1476, 3
    %v1526 = vrot.slane %v1477, 2
    %v1527 = vsel %vm370, %v1526, %v1525
    %1528 = vrot.lane.b32.xlu0 %v1527, 96
    %v1529 = vpop.permute.xlu0 %1528
    %v1531 = vmul.f32 %v1214, %v1529
    %v1532 = vmul.f32 %v1229, %v1276
    %v1533 = vadd.f32 %v1531, %v1532
    %v1534 = vmul.f32 %v1500, %v1247
    %s1535 = scalar_lea.vmem [#allocation2], 8
    %1536 = vst.msk [vmem:[%s1535] sm:$0x3] %vm426, %v1534
    %v1537 = vmul.f32 %v1522, %v1214
    %s1538 = scalar_lea.vmem [#allocation3], 6
    %1539 = vst.msk [vmem:[%s1538] sm:$0x3] %vm426, %v1537
    %1541 = vrot.lane.b32.xlu0 %v1522, 32
    %v1542 = vpop.permute.xlu0 %1541
    %v1544 = vsel %vm435, %v1500, %v1542
    %v1546 = vsel %vm72, %v1544, 0
    %1548 = vmatprep.subr.mxu0 %v157
    %1549 = vmatpush1.msra.mxu0 %v156
    %1550 = vmatprep.subr.mxu0 %v159
    %1551 = vmatpush1.msra.mxu0 %v158
    %1552 = vmatprep.subr.mxu0 %v161
    %1553 = vmatpush1.msra.mxu0 %v160
    %1554 = vmatprep.subr.mxu0 %v163
    %1555 = vmatpush1.msra.mxu0 %v162
    %1556 = vmatprep.subr.mxu0 %v165
    %1557 = vmatpush1.msra.mxu0 %v164
    %1558 = vmatprep.subr.mxu0 %v167
    %1559 = vmatpush1.msra.mxu0 %v166
    %1560 = vmatprep.subr.mxu0 %v169
    %1561 = vmatpush1.msra.mxu0 %v168
    %1562 = vmatprep.subr.mxu0 %v171
    %1563 = vmatpush1.msra.mxu0 %v170
    %1564 = vmatprep.subr.mxu0 0.0
    %1565 = vmatpush1.msra.mxu0 0.0
    %1566 = vmatprep.subr.mxu0 0.0
    %1567 = vmatpush1.msra.mxu0 0.0
    %1568 = vmatprep.subr.mxu0 0.0
    %1569 = vmatpush1.msra.mxu0 0.0
    %1570 = vmatprep.subr.mxu0 0.0
    %1571 = vmatpush1.msra.mxu0 0.0
    %1572 = vmatprep.subr.mxu0 0.0
    %1573 = vmatpush1.msra.mxu0 0.0
    %1574 = vmatprep.subr.mxu0 0.0
    %1575 = vmatpush1.msra.mxu0 0.0
    %1576 = vmatprep.subr.mxu0 0.0
    %1577 = vmatpush1.msra.mxu0 0.0
    %1578 = vmatprep.subr.mxu0 0.0
    %1579 = vmatpush1.msra.mxu0 0.0
    %1580 = vmatprep.subr.mxu0 0.0
    %1581 = vmatpush1.msra.mxu0 0.0
    %1582 = vmatprep.subr.mxu0 0.0
    %1583 = vmatpush1.msra.mxu0 0.0
    %1584 = vmatprep.subr.mxu0 0.0
    %1585 = vmatpush1.msra.mxu0 0.0
    %1586 = vmatprep.subr.mxu0 0.0
    %1587 = vmatpush1.msra.mxu0 0.0
    %1588 = vmatprep.subr.mxu0 0.0
    %1589 = vmatpush1.msra.mxu0 0.0
    %1590 = vmatprep.subr.mxu0 0.0
    %1591 = vmatpush1.msra.mxu0 0.0
    %1592 = vmatprep.subr.mxu0 0.0
    %1593 = vmatpush1.msra.mxu0 0.0
    %1594 = vmatprep.subr.mxu0 0.0
    %1595 = vmatpush1.msra.mxu0 0.0
    %1596 = vmatprep.subr.mxu0 0.0
    %1597 = vmatpush1.msra.mxu0 0.0
    %1598 = vmatprep.subr.mxu0 0.0
    %1599 = vmatpush1.msra.mxu0 0.0
    %1600 = vmatprep.subr.mxu0 0.0
    %1601 = vmatpush1.msra.mxu0 0.0
    %1602 = vmatprep.subr.mxu0 0.0
    %1603 = vmatpush1.msra.mxu0 0.0
    %1604 = vmatprep.subr.mxu0 0.0
    %1605 = vmatpush1.msra.mxu0 0.0
    %1606 = vmatprep.subr.mxu0 0.0
    %1607 = vmatpush1.msra.mxu0 0.0
    %1608 = vmatprep.subr.mxu0 0.0
    %1609 = vmatpush1.msra.mxu0 0.0
    %1610 = vmatprep.subr.mxu0 0.0
    %1611 = vmatpush1.msra.mxu0 0.0
    %1612 = vmatprep.mubr.f32.mxu0 0.0
    %1613 = vmatmul.mubr.f32.gmra.mrb[0].mxu0 %v1546
    %v1614 = vpop.f32.mrb[0].mxu0
    %v1615 = vadd.f32 0.0, %v1614
    %v1616 = vpop.f32.mrb[0].mxu0
    %v1617 = vadd.f32 0.0, %v1616
    %1618 = vdwg.mxu0
    %v1620 = vrot.slane %v1615, 3
    %v1621 = vrot.slane %v1615, 4
    %v1624 = vadd.f32 %v146, %v1620
    %v1625 = vadd.f32 %v152, %v1621
    %v1626 = vxor.u32 %v1624, 2147483648
    %v1627 = vxor.u32 %v1625, 2147483648
    %v1628 = vmul.f32 %v1626, 1.442695
    %v1629 = vpow.pop %v1628
    %v1630 = vmul.f32 %v1627, 1.442695
    %v1631 = vpow.pop %v1630
    %v1632 = vadd.f32 %v1629, 1.0
    %v1633 = vadd.f32 %v1631, 1.0
    %v1634 = vrcp.pop %v1632
    %v1635 = vmul.f32 1.0, %v1634
    %v1636 = vrcp.pop %v1633
    %v1637 = vmul.f32 1.0, %v1636
    %v1638 = vtanh.pop %v1624
    %v1639 = vtanh.pop %v1625
    %v1641 = vrot.slane %v1511, 3
    %v1642 = vrot.slane %v1511, 4
    %1643 = vrot.lane.b32.xlu0 %v1641, 32
    %v1644 = vpop.permute.xlu0 %1643
    %1645 = vrot.lane.b32.xlu0 %v1642, 32
    %v1646 = vpop.permute.xlu0 %1645
    %v1649 = vmul.f32 %v1635, %v1644
    %v1650 = vmul.f32 %v1637, %v1646
    %1653 = vrot.lane.b32.xlu0 %v1638, 64
    %v1654 = vpop.permute.xlu0 %1653
    %1655 = vrot.lane.b32.xlu0 %v1639, 64
    %v1656 = vpop.permute.xlu0 %1655
    %v1659 = vmul.f32 %v1635, %v1654
    %v1660 = vmul.f32 %v1637, %v1656
    %1663 = vrot.lane.b32.xlu0 %v1659, 32
    %v1664 = vpop.permute.xlu0 %1663
    %1665 = vrot.lane.b32.xlu0 %v1660, 32
    %v1666 = vpop.permute.xlu0 %1665
    %v1669 = vadd.f32 %v1649, %v1664
    %v1670 = vadd.f32 %v1650, %v1666
    %v1671 = vtanh.pop %v1669
    %v1672 = vtanh.pop %v1670
    %1675 = vrot.lane.b32.xlu0 %v1671, 64
    %v1676 = vpop.permute.xlu0 %1675
    %1677 = vrot.lane.b32.xlu0 %v1672, 64
    %v1678 = vpop.permute.xlu0 %1677
    %v1681 = vmul.f32 %v1635, %v1676
    %v1682 = vmul.f32 %v1637, %v1678
    %v1684 = vrot.slane %v1617, 6
    %v1685 = vrot.slane %v1617, 7
    %v1688 = vadd.f32 %v148, %v1684
    %v1689 = vadd.f32 %v154, %v1685
    %v1690 = vxor.u32 %v1688, 2147483648
    %v1691 = vxor.u32 %v1689, 2147483648
    %v1692 = vmul.f32 %v1690, 1.442695
    %v1693 = vpow.pop %v1692
    %v1694 = vmul.f32 %v1691, 1.442695
    %v1695 = vpow.pop %v1694
    %v1696 = vadd.f32 %v1693, 1.0
    %v1697 = vadd.f32 %v1695, 1.0
    %v1698 = vrcp.pop %v1696
    %v1699 = vmul.f32 1.0, %v1698
    %v1700 = vrcp.pop %v1697
    %v1701 = vmul.f32 1.0, %v1700
    %v1702 = vtanh.pop %v1688
    %v1703 = vtanh.pop %v1689
    %v1705 = vrot.slane %v1533, 6
    %v1706 = vrot.slane %v1533, 7
    %1707 = vrot.lane.b32.xlu0 %v1705, 32
    %v1708 = vpop.permute.xlu0 %1707
    %1709 = vrot.lane.b32.xlu0 %v1706, 32
    %v1710 = vpop.permute.xlu0 %1709
    %v1713 = vmul.f32 %v1699, %v1708
    %v1714 = vmul.f32 %v1701, %v1710
    %1717 = vrot.lane.b32.xlu0 %v1702, 64
    %v1718 = vpop.permute.xlu0 %1717
    %1719 = vrot.lane.b32.xlu0 %v1703, 64
    %v1720 = vpop.permute.xlu0 %1719
    %v1723 = vmul.f32 %v1699, %v1718
    %v1724 = vmul.f32 %v1701, %v1720
    %1727 = vrot.lane.b32.xlu0 %v1723, 32
    %v1728 = vpop.permute.xlu0 %1727
    %1729 = vrot.lane.b32.xlu0 %v1724, 32
    %v1730 = vpop.permute.xlu0 %1729
    %v1733 = vadd.f32 %v1713, %v1728
    %v1734 = vadd.f32 %v1714, %v1730
    %v1735 = vtanh.pop %v1733
    %v1736 = vtanh.pop %v1734
    %1739 = vrot.lane.b32.xlu0 %v1735, 64
    %v1740 = vpop.permute.xlu0 %1739
    %1741 = vrot.lane.b32.xlu0 %v1736, 64
    %v1742 = vpop.permute.xlu0 %1741
    %v1745 = vmul.f32 %v1699, %v1740
    %v1746 = vmul.f32 %v1701, %v1742
    %v1749 = vrot.slane %v1681, 5
    %v1750 = vrot.slane %v1682, 4
    %v1751 = vsel %vm370, %v1750, %v1749
    %1752 = vrot.lane.b32.xlu0 %v1751, 32
    %v1753 = vpop.permute.xlu0 %1752
    %v1755 = vmul.f32 %v962, %v1753
    %v1756 = vmul.f32 %v977, %v1500
    %v1757 = vadd.f32 %v1755, %v1756
    %v1760 = vrot.slane %v1669, 5
    %v1761 = vrot.slane %v1670, 4
    %v1762 = vsel %vm370, %v1761, %v1760
    %1763 = vrot.lane.b32.xlu0 %v1762, 96
    %v1764 = vpop.permute.xlu0 %1763
    %v1766 = vmul.f32 %v962, %v1764
    %v1767 = vmul.f32 %v977, %v1511
    %v1768 = vadd.f32 %v1766, %v1767
    %v1771 = vrot.slane %v1745, 2
    %v1772 = vrot.slane %v1746, 1
    %v1773 = vsel %vm370, %v1772, %v1771
    %1774 = vrot.lane.b32.xlu0 %v1773, 32
    %v1775 = vpop.permute.xlu0 %1774
    %v1777 = vmul.f32 %v929, %v1775
    %v1778 = vmul.f32 %v944, %v1522
    %v1779 = vadd.f32 %v1777, %v1778
    %v1782 = vrot.slane %v1733, 2
    %v1783 = vrot.slane %v1734, 1
    %v1784 = vsel %vm370, %v1783, %v1782
    %1785 = vrot.lane.b32.xlu0 %v1784, 96
    %v1786 = vpop.permute.xlu0 %1785
    %v1788 = vmul.f32 %v929, %v1786
    %v1789 = vmul.f32 %v944, %v1533
    %v1790 = vadd.f32 %v1788, %v1789
    %v1791 = vmul.f32 %v1757, %v962
    %s1792 = scalar_lea.vmem [#allocation2], 10
    %1793 = vst.msk [vmem:[%s1792] sm:$0x3] %vm426, %v1791
    %v1794 = vmul.f32 %v1779, %v929
    %s1795 = scalar_lea.vmem [#allocation3], 4
    %1796 = vst.msk [vmem:[%s1795] sm:$0x3] %vm426, %v1794
    %1798 = vrot.lane.b32.xlu0 %v1779, 32
    %v1799 = vpop.permute.xlu0 %1798
    %v1801 = vsel %vm435, %v1757, %v1799
    %v1803 = vsel %vm72, %v1801, 0
    %1805 = vmatprep.subr.mxu0 %v157
    %1806 = vmatpush1.msra.mxu0 %v156
    %1807 = vmatprep.subr.mxu0 %v159
    %1808 = vmatpush1.msra.mxu0 %v158
    %1809 = vmatprep.subr.mxu0 %v161
    %1810 = vmatpush1.msra.mxu0 %v160
    %1811 = vmatprep.subr.mxu0 %v163
    %1812 = vmatpush1.msra.mxu0 %v162
    %1813 = vmatprep.subr.mxu0 %v165
    %1814 = vmatpush1.msra.mxu0 %v164
    %1815 = vmatprep.subr.mxu0 %v167
    %1816 = vmatpush1.msra.mxu0 %v166
    %1817 = vmatprep.subr.mxu0 %v169
    %1818 = vmatpush1.msra.mxu0 %v168
    %1819 = vmatprep.subr.mxu0 %v171
    %1820 = vmatpush1.msra.mxu0 %v170
    %1821 = vmatprep.subr.mxu0 0.0
    %1822 = vmatpush1.msra.mxu0 0.0
    %1823 = vmatprep.subr.mxu0 0.0
    %1824 = vmatpush1.msra.mxu0 0.0
    %1825 = vmatprep.subr.mxu0 0.0
    %1826 = vmatpush1.msra.mxu0 0.0
    %1827 = vmatprep.subr.mxu0 0.0
    %1828 = vmatpush1.msra.mxu0 0.0
    %1829 = vmatprep.subr.mxu0 0.0
    %1830 = vmatpush1.msra.mxu0 0.0
    %1831 = vmatprep.subr.mxu0 0.0
    %1832 = vmatpush1.msra.mxu0 0.0
    %1833 = vmatprep.subr.mxu0 0.0
    %1834 = vmatpush1.msra.mxu0 0.0
    %1835 = vmatprep.subr.mxu0 0.0
    %1836 = vmatpush1.msra.mxu0 0.0
    %1837 = vmatprep.subr.mxu0 0.0
    %1838 = vmatpush1.msra.mxu0 0.0
    %1839 = vmatprep.subr.mxu0 0.0
    %1840 = vmatpush1.msra.mxu0 0.0
    %1841 = vmatprep.subr.mxu0 0.0
    %1842 = vmatpush1.msra.mxu0 0.0
    %1843 = vmatprep.subr.mxu0 0.0
    %1844 = vmatpush1.msra.mxu0 0.0
    %1845 = vmatprep.subr.mxu0 0.0
    %1846 = vmatpush1.msra.mxu0 0.0
    %1847 = vmatprep.subr.mxu0 0.0
    %1848 = vmatpush1.msra.mxu0 0.0
    %1849 = vmatprep.subr.mxu0 0.0
    %1850 = vmatpush1.msra.mxu0 0.0
    %1851 = vmatprep.subr.mxu0 0.0
    %1852 = vmatpush1.msra.mxu0 0.0
    %1853 = vmatprep.subr.mxu0 0.0
    %1854 = vmatpush1.msra.mxu0 0.0
    %1855 = vmatprep.subr.mxu0 0.0
    %1856 = vmatpush1.msra.mxu0 0.0
    %1857 = vmatprep.subr.mxu0 0.0
    %1858 = vmatpush1.msra.mxu0 0.0
    %1859 = vmatprep.subr.mxu0 0.0
    %1860 = vmatpush1.msra.mxu0 0.0
    %1861 = vmatprep.subr.mxu0 0.0
    %1862 = vmatpush1.msra.mxu0 0.0
    %1863 = vmatprep.subr.mxu0 0.0
    %1864 = vmatpush1.msra.mxu0 0.0
    %1865 = vmatprep.subr.mxu0 0.0
    %1866 = vmatpush1.msra.mxu0 0.0
    %1867 = vmatprep.subr.mxu0 0.0
    %1868 = vmatpush1.msra.mxu0 0.0
    %1869 = vmatprep.mubr.f32.mxu0 0.0
    %1870 = vmatmul.mubr.f32.gmra.mrb[0].mxu0 %v1803
    %v1871 = vpop.f32.mrb[0].mxu0
    %v1872 = vadd.f32 0.0, %v1871
    %v1873 = vpop.f32.mrb[0].mxu0
    %v1874 = vadd.f32 0.0, %v1873
    %1875 = vdwg.mxu0
    %v1877 = vrot.slane %v1872, 2
    %v1878 = vrot.slane %v1872, 3
    %v1881 = vadd.f32 %v146, %v1877
    %v1882 = vadd.f32 %v152, %v1878
    %v1883 = vxor.u32 %v1881, 2147483648
    %v1884 = vxor.u32 %v1882, 2147483648
    %v1885 = vmul.f32 %v1883, 1.442695
    %v1886 = vpow.pop %v1885
    %v1887 = vmul.f32 %v1884, 1.442695
    %v1888 = vpow.pop %v1887
    %v1889 = vadd.f32 %v1886, 1.0
    %v1890 = vadd.f32 %v1888, 1.0
    %v1891 = vrcp.pop %v1889
    %v1892 = vmul.f32 1.0, %v1891
    %v1893 = vrcp.pop %v1890
    %v1894 = vmul.f32 1.0, %v1893
    %v1895 = vtanh.pop %v1881
    %v1896 = vtanh.pop %v1882
    %v1898 = vrot.slane %v1768, 2
    %v1899 = vrot.slane %v1768, 3
    %1900 = vrot.lane.b32.xlu0 %v1898, 32
    %v1901 = vpop.permute.xlu0 %1900
    %1902 = vrot.lane.b32.xlu0 %v1899, 32
    %v1903 = vpop.permute.xlu0 %1902
    %v1906 = vmul.f32 %v1892, %v1901
    %v1907 = vmul.f32 %v1894, %v1903
    %1910 = vrot.lane.b32.xlu0 %v1895, 64
    %v1911 = vpop.permute.xlu0 %1910
    %1912 = vrot.lane.b32.xlu0 %v1896, 64
    %v1913 = vpop.permute.xlu0 %1912
    %v1916 = vmul.f32 %v1892, %v1911
    %v1917 = vmul.f32 %v1894, %v1913
    %1920 = vrot.lane.b32.xlu0 %v1916, 32
    %v1921 = vpop.permute.xlu0 %1920
    %1922 = vrot.lane.b32.xlu0 %v1917, 32
    %v1923 = vpop.permute.xlu0 %1922
    %v1926 = vadd.f32 %v1906, %v1921
    %v1927 = vadd.f32 %v1907, %v1923
    %v1928 = vtanh.pop %v1926
    %v1929 = vtanh.pop %v1927
    %1932 = vrot.lane.b32.xlu0 %v1928, 64
    %v1933 = vpop.permute.xlu0 %1932
    %1934 = vrot.lane.b32.xlu0 %v1929, 64
    %v1935 = vpop.permute.xlu0 %1934
    %v1938 = vmul.f32 %v1892, %v1933
    %v1939 = vmul.f32 %v1894, %v1935
    %v1941 = vrot.slane %v1874, 7
    %v1944 = vadd.f32 %v148, %v1941
    %v1945 = vadd.f32 %v154, %v1874
    %v1946 = vxor.u32 %v1944, 2147483648
    %v1947 = vxor.u32 %v1945, 2147483648
    %v1948 = vmul.f32 %v1946, 1.442695
    %v1949 = vpow.pop %v1948
    %v1950 = vmul.f32 %v1947, 1.442695
    %v1951 = vpow.pop %v1950
    %v1952 = vadd.f32 %v1949, 1.0
    %v1953 = vadd.f32 %v1951, 1.0
    %v1954 = vrcp.pop %v1952
    %v1955 = vmul.f32 1.0, %v1954
    %v1956 = vrcp.pop %v1953
    %v1957 = vmul.f32 1.0, %v1956
    %v1958 = vtanh.pop %v1944
    %v1959 = vtanh.pop %v1945
    %v1961 = vrot.slane %v1790, 7
    %1962 = vrot.lane.b32.xlu0 %v1961, 32
    %v1963 = vpop.permute.xlu0 %1962
    %1964 = vrot.lane.b32.xlu0 %v1790, 32
    %v1965 = vpop.permute.xlu0 %1964
    %v1968 = vmul.f32 %v1955, %v1963
    %v1969 = vmul.f32 %v1957, %v1965
    %1972 = vrot.lane.b32.xlu0 %v1958, 64
    %v1973 = vpop.permute.xlu0 %1972
    %1974 = vrot.lane.b32.xlu0 %v1959, 64
    %v1975 = vpop.permute.xlu0 %1974
    %v1978 = vmul.f32 %v1955, %v1973
    %v1979 = vmul.f32 %v1957, %v1975
    %1982 = vrot.lane.b32.xlu0 %v1978, 32
    %v1983 = vpop.permute.xlu0 %1982
    %1984 = vrot.lane.b32.xlu0 %v1979, 32
    %v1985 = vpop.permute.xlu0 %1984
    %v1988 = vadd.f32 %v1968, %v1983
    %v1989 = vadd.f32 %v1969, %v1985
    %v1990 = vtanh.pop %v1988
    %v1991 = vtanh.pop %v1989
    %1994 = vrot.lane.b32.xlu0 %v1990, 64
    %v1995 = vpop.permute.xlu0 %1994
    %1996 = vrot.lane.b32.xlu0 %v1991, 64
    %v1997 = vpop.permute.xlu0 %1996
    %v2000 = vmul.f32 %v1955, %v1995
    %v2001 = vmul.f32 %v1957, %v1997
    %v2004 = vrot.slane %v1938, 6
    %v2005 = vrot.slane %v1939, 5
    %v2006 = vsel %vm370, %v2005, %v2004
    %2007 = vrot.lane.b32.xlu0 %v2006, 32
    %v2008 = vpop.permute.xlu0 %2007
    %v2010 = vmul.f32 %v677, %v2008
    %v2011 = vmul.f32 %v692, %v1757
    %v2012 = vadd.f32 %v2010, %v2011
    %v2015 = vrot.slane %v1926, 6
    %v2016 = vrot.slane %v1927, 5
    %v2017 = vsel %vm370, %v2016, %v2015
    %2018 = vrot.lane.b32.xlu0 %v2017, 96
    %v2019 = vpop.permute.xlu0 %2018
    %v2021 = vmul.f32 %v677, %v2019
    %v2022 = vmul.f32 %v692, %v1768
    %v2023 = vadd.f32 %v2021, %v2022
    %v2026 = vrot.slane %v2000, 1
    %v2027 = vsel %vm370, %v2001, %v2026
    %2028 = vrot.lane.b32.xlu0 %v2027, 32
    %v2029 = vpop.permute.xlu0 %2028
    %v2031 = vmul.f32 %v646, %v2029
    %v2032 = vmul.f32 %v660, %v1779
    %v2033 = vadd.f32 %v2031, %v2032
    %v2036 = vrot.slane %v1988, 1
    %v2037 = vsel %vm370, %v1989, %v2036
    %2038 = vrot.lane.b32.xlu0 %v2037, 96
    %v2039 = vpop.permute.xlu0 %2038
    %v2041 = vmul.f32 %v646, %v2039
    %v2042 = vmul.f32 %v660, %v1790
    %v2043 = vadd.f32 %v2041, %v2042
    %v2044 = vmul.f32 %v2012, %v677
    %s2045 = scalar_lea.vmem [#allocation2], 12
    %2046 = vst.msk [vmem:[%s2045] sm:$0x3] %vm426, %v2044
    %v2047 = vmul.f32 %v2033, %v646
    %s2048 = scalar_lea.vmem [#allocation3], 2
    %2049 = vst.msk [vmem:[%s2048] sm:$0x3] %vm426, %v2047
    %2051 = vrot.lane.b32.xlu0 %v2033, 32
    %v2052 = vpop.permute.xlu0 %2051
    %v2054 = vsel %vm435, %v2012, %v2052
    %v2056 = vsel %vm72, %v2054, 0
    %2058 = vmatprep.subr.mxu0 %v157
    %2059 = vmatpush1.msra.mxu0 %v156
    %2060 = vmatprep.subr.mxu0 %v159
    %2061 = vmatpush1.msra.mxu0 %v158
    %2062 = vmatprep.subr.mxu0 %v161
    %2063 = vmatpush1.msra.mxu0 %v160
    %2064 = vmatprep.subr.mxu0 %v163
    %2065 = vmatpush1.msra.mxu0 %v162
    %2066 = vmatprep.subr.mxu0 %v165
    %2067 = vmatpush1.msra.mxu0 %v164
    %2068 = vmatprep.subr.mxu0 %v167
    %2069 = vmatpush1.msra.mxu0 %v166
    %2070 = vmatprep.subr.mxu0 %v169
    %2071 = vmatpush1.msra.mxu0 %v168
    %2072 = vmatprep.subr.mxu0 %v171
    %2073 = vmatpush1.msra.mxu0 %v170
    %2074 = vmatprep.subr.mxu0 0.0
    %2075 = vmatpush1.msra.mxu0 0.0
    %2076 = vmatprep.subr.mxu0 0.0
    %2077 = vmatpush1.msra.mxu0 0.0
    %2078 = vmatprep.subr.mxu0 0.0
    %2079 = vmatpush1.msra.mxu0 0.0
    %2080 = vmatprep.subr.mxu0 0.0
    %2081 = vmatpush1.msra.mxu0 0.0
    %2082 = vmatprep.subr.mxu0 0.0
    %2083 = vmatpush1.msra.mxu0 0.0
    %2084 = vmatprep.subr.mxu0 0.0
    %2085 = vmatpush1.msra.mxu0 0.0
    %2086 = vmatprep.subr.mxu0 0.0
    %2087 = vmatpush1.msra.mxu0 0.0
    %2088 = vmatprep.subr.mxu0 0.0
    %2089 = vmatpush1.msra.mxu0 0.0
    %2090 = vmatprep.subr.mxu0 0.0
    %2091 = vmatpush1.msra.mxu0 0.0
    %2092 = vmatprep.subr.mxu0 0.0
    %2093 = vmatpush1.msra.mxu0 0.0
    %2094 = vmatprep.subr.mxu0 0.0
    %2095 = vmatpush1.msra.mxu0 0.0
    %2096 = vmatprep.subr.mxu0 0.0
    %2097 = vmatpush1.msra.mxu0 0.0
    %2098 = vmatprep.subr.mxu0 0.0
    %2099 = vmatpush1.msra.mxu0 0.0
    %2100 = vmatprep.subr.mxu0 0.0
    %2101 = vmatpush1.msra.mxu0 0.0
    %2102 = vmatprep.subr.mxu0 0.0
    %2103 = vmatpush1.msra.mxu0 0.0
    %2104 = vmatprep.subr.mxu0 0.0
    %2105 = vmatpush1.msra.mxu0 0.0
    %2106 = vmatprep.subr.mxu0 0.0
    %2107 = vmatpush1.msra.mxu0 0.0
    %2108 = vmatprep.subr.mxu0 0.0
    %2109 = vmatpush1.msra.mxu0 0.0
    %2110 = vmatprep.subr.mxu0 0.0
    %2111 = vmatpush1.msra.mxu0 0.0
    %2112 = vmatprep.subr.mxu0 0.0
    %2113 = vmatpush1.msra.mxu0 0.0
    %2114 = vmatprep.subr.mxu0 0.0
    %2115 = vmatpush1.msra.mxu0 0.0
    %2116 = vmatprep.subr.mxu0 0.0
    %2117 = vmatpush1.msra.mxu0 0.0
    %2118 = vmatprep.subr.mxu0 0.0
    %2119 = vmatpush1.msra.mxu0 0.0
    %2120 = vmatprep.subr.mxu0 0.0
    %2121 = vmatpush1.msra.mxu0 0.0
    %2122 = vmatprep.mubr.f32.mxu0 0.0
    %2123 = vmatmul.mubr.f32.gmra.mrb[0].mxu0 %v2056
    %v2124 = vpop.f32.mrb[0].mxu0
    %v2125 = vadd.f32 0.0, %v2124
    %v2126 = vpop.f32.mrb[0].mxu0
    %v2127 = vadd.f32 0.0, %v2126
    %2128 = vdwg.mxu0
    %v2130 = vrot.slane %v2125, 1
    %v2131 = vrot.slane %v2125, 2
    %v2134 = vadd.f32 %v146, %v2130
    %v2135 = vadd.f32 %v152, %v2131
    %v2136 = vxor.u32 %v2134, 2147483648
    %v2137 = vxor.u32 %v2135, 2147483648
    %v2138 = vmul.f32 %v2136, 1.442695
    %v2139 = vpow.pop %v2138
    %v2140 = vmul.f32 %v2137, 1.442695
    %v2141 = vpow.pop %v2140
    %v2142 = vadd.f32 %v2139, 1.0
    %v2143 = vadd.f32 %v2141, 1.0
    %v2144 = vrcp.pop %v2142
    %v2145 = vmul.f32 1.0, %v2144
    %v2146 = vrcp.pop %v2143
    %v2147 = vmul.f32 1.0, %v2146
    %v2148 = vtanh.pop %v2134
    %v2149 = vtanh.pop %v2135
    %v2151 = vrot.slane %v2023, 1
    %v2152 = vrot.slane %v2023, 2
    %2153 = vrot.lane.b32.xlu0 %v2151, 32
    %v2154 = vpop.permute.xlu0 %2153
    %2155 = vrot.lane.b32.xlu0 %v2152, 32
    %v2156 = vpop.permute.xlu0 %2155
    %v2159 = vmul.f32 %v2145, %v2154
    %v2160 = vmul.f32 %v2147, %v2156
    %2163 = vrot.lane.b32.xlu0 %v2148, 64
    %v2164 = vpop.permute.xlu0 %2163
    %2165 = vrot.lane.b32.xlu0 %v2149, 64
    %v2166 = vpop.permute.xlu0 %2165
    %v2169 = vmul.f32 %v2145, %v2164
    %v2170 = vmul.f32 %v2147, %v2166
    %2173 = vrot.lane.b32.xlu0 %v2169, 32
    %v2174 = vpop.permute.xlu0 %2173
    %2175 = vrot.lane.b32.xlu0 %v2170, 32
    %v2176 = vpop.permute.xlu0 %2175
    %v2179 = vadd.f32 %v2159, %v2174
    %v2180 = vadd.f32 %v2160, %v2176
    %v2181 = vtanh.pop %v2179
    %v2182 = vtanh.pop %v2180
    %2185 = vrot.lane.b32.xlu0 %v2181, 64
    %v2186 = vpop.permute.xlu0 %2185
    %2187 = vrot.lane.b32.xlu0 %v2182, 64
    %v2188 = vpop.permute.xlu0 %2187
    %v2191 = vmul.f32 %v2145, %v2186
    %v2192 = vmul.f32 %v2147, %v2188
    %v2194 = vrot.slane %v2127, 1
    %v2197 = vadd.f32 %v148, %v2127
    %v2198 = vadd.f32 %v154, %v2194
    %v2199 = vxor.u32 %v2197, 2147483648
    %v2200 = vxor.u32 %v2198, 2147483648
    %v2201 = vmul.f32 %v2199, 1.442695
    %v2202 = vpow.pop %v2201
    %v2203 = vmul.f32 %v2200, 1.442695
    %v2204 = vpow.pop %v2203
    %v2205 = vadd.f32 %v2202, 1.0
    %v2206 = vadd.f32 %v2204, 1.0
    %v2207 = vrcp.pop %v2205
    %v2208 = vmul.f32 1.0, %v2207
    %v2209 = vrcp.pop %v2206
    %v2210 = vmul.f32 1.0, %v2209
    %v2211 = vtanh.pop %v2197
    %v2212 = vtanh.pop %v2198
    %v2214 = vrot.slane %v2043, 1
    %2215 = vrot.lane.b32.xlu0 %v2043, 32
    %v2216 = vpop.permute.xlu0 %2215
    %2217 = vrot.lane.b32.xlu0 %v2214, 32
    %v2218 = vpop.permute.xlu0 %2217
    %v2221 = vmul.f32 %v2208, %v2216
    %v2222 = vmul.f32 %v2210, %v2218
    %2225 = vrot.lane.b32.xlu0 %v2211, 64
    %v2226 = vpop.permute.xlu0 %2225
    %2227 = vrot.lane.b32.xlu0 %v2212, 64
    %v2228 = vpop.permute.xlu0 %2227
    %v2231 = vmul.f32 %v2208, %v2226
    %v2232 = vmul.f32 %v2210, %v2228
    %2235 = vrot.lane.b32.xlu0 %v2231, 32
    %v2236 = vpop.permute.xlu0 %2235
    %2237 = vrot.lane.b32.xlu0 %v2232, 32
    %v2238 = vpop.permute.xlu0 %2237
    %v2241 = vadd.f32 %v2221, %v2236
    %v2242 = vadd.f32 %v2222, %v2238
    %v2243 = vtanh.pop %v2241
    %v2244 = vtanh.pop %v2242
    %2247 = vrot.lane.b32.xlu0 %v2243, 64
    %v2248 = vpop.permute.xlu0 %2247
    %2249 = vrot.lane.b32.xlu0 %v2244, 64
    %v2250 = vpop.permute.xlu0 %2249
    %v2253 = vmul.f32 %v2208, %v2248
    %v2254 = vmul.f32 %v2210, %v2250
    %v2257 = vrot.slane %v2191, 7
    %v2258 = vrot.slane %v2192, 6
    %v2259 = vsel %vm370, %v2258, %v2257
    %2260 = vrot.lane.b32.xlu0 %v2259, 32
    %v2261 = vpop.permute.xlu0 %2260
    %v2263 = vmul.f32 %v396, %v2261
    %v2264 = vmul.f32 %v411, %v2012
    %v2265 = vadd.f32 %v2263, %v2264
    %v2268 = vrot.slane %v2254, 7
    %v2269 = vsel %vm370, %v2268, %v2253
    %2270 = vrot.lane.b32.xlu0 %v2269, 32
    %v2271 = vpop.permute.xlu0 %2270
    %v2273 = vmul.f32 %v365, %v2271
    %v2274 = vmul.f32 %v380, %v2033
    %v2275 = vadd.f32 %v2273, %v2274
    %v2276 = vmul.f32 %v2265, %v396
    %s2277 = scalar_lea.vmem [#allocation2], 14
    %2278 = vst.msk [vmem:[%s2277] sm:$0x3] %vm426, %v2276
    %v2279 = vmul.f32 %v2275, %v365
    %2280 = vst.msk [vmem:[#allocation3] sm:$0x3] %vm426, %v2279
    %v2281 = vld [vmem:[#allocation2] sm:$0x3]
    %v2282 = vld [vmem:[#allocation2 + $0x2] sm:$0x3]
    %v2283 = vld [vmem:[#allocation2 + $0x4] sm:$0x3]
    %v2284 = vld [vmem:[#allocation2 + $0x6] sm:$0x3]
    %v2285 = vld [vmem:[#allocation2 + $0x8] sm:$0x3]
    %v2286 = vld [vmem:[#allocation2 + $0xa] sm:$0x3]
    %v2287 = vld [vmem:[#allocation2 + $0xc] sm:$0x3]
    %v2288 = vld [vmem:[#allocation2 + $0xe] sm:$0x3]
    %v2289 = vld [vmem:[#allocation3] sm:$0x3]
    %v2290 = vld [vmem:[#allocation3 + $0x2] sm:$0x3]
    %v2291 = vld [vmem:[#allocation3 + $0x4] sm:$0x3]
    %v2292 = vld [vmem:[#allocation3 + $0x6] sm:$0x3]
    %v2293 = vld [vmem:[#allocation3 + $0x8] sm:$0x3]
    %v2294 = vld [vmem:[#allocation3 + $0xa] sm:$0x3]
    %v2295 = vld [vmem:[#allocation3 + $0xc] sm:$0x3]
    %v2296 = vld [vmem:[#allocation3 + $0xe] sm:$0x3]
    %2305 = vrot.lane.b32.xlu0 %v2289, 32
    %v2306 = vpop.permute.xlu0 %2305
    %2307 = vrot.lane.b32.xlu0 %v2290, 32
    %v2308 = vpop.permute.xlu0 %2307
    %2309 = vrot.lane.b32.xlu0 %v2291, 32
    %v2310 = vpop.permute.xlu0 %2309
    %2311 = vrot.lane.b32.xlu0 %v2292, 32
    %v2312 = vpop.permute.xlu0 %2311
    %2313 = vrot.lane.b32.xlu0 %v2293, 32
    %v2314 = vpop.permute.xlu0 %2313
    %2315 = vrot.lane.b32.xlu0 %v2294, 32
    %v2316 = vpop.permute.xlu0 %2315
    %2317 = vrot.lane.b32.xlu0 %v2295, 32
    %v2318 = vpop.permute.xlu0 %2317
    %2319 = vrot.lane.b32.xlu0 %v2296, 32
    %v2320 = vpop.permute.xlu0 %2319
    %v2329 = vsel %vm435, %v2281, %v2306
    %v2330 = vsel %vm435, %v2282, %v2308
    %v2331 = vsel %vm435, %v2283, %v2310
    %v2332 = vsel %vm435, %v2284, %v2312
    %v2333 = vsel %vm435, %v2285, %v2314
    %v2334 = vsel %vm435, %v2286, %v2316
    %v2335 = vsel %vm435, %v2287, %v2318
    %v2336 = vsel %vm435, %v2288, %v2320
    %v2337 = vld [vmem:[%s1] sm:$0xff]
    %v2338 = vld [vmem:[%s1 + $0x8] sm:$0xff]
    %v2339 = vld [vmem:[%s2] sm:$0xff]
    %v2340 = vld [vmem:[%s2 + $0x8] sm:$0xff]
    %vm2341 = vcmask 64512
    %v2342 = vsel %vm2341, %v2337, 0.0
    %2343 = vadd.xlane.f32.xlu0 %v2342
    %v2344 = vpop.xlane.xlu0 %2343
    %v2345 = vadd.f32 %v2344, 1.0
    %v2346 = vrcp.pop %v2345
    %v2347 = vld [vmem:[%s7] sm:$0xff]
    %v2348 = vld [vmem:[%s7 + $0x8] sm:$0xff]
    %v2349 = vld [vmem:[%s7 + $0x10] sm:$0xff]
    %v2350 = vld [vmem:[%s7 + $0x18] sm:$0xff]
    %v2351 = vld [vmem:[%s7 + $0x20] sm:$0xff]
    %v2352 = vld [vmem:[%s7 + $0x28] sm:$0xff]
    %v2353 = vld [vmem:[%s7 + $0x30] sm:$0xff]
    %v2354 = vld [vmem:[%s7 + $0x38] sm:$0xff]
    %v2355 = vld [vmem:[%s8] sm:$0x1]
    %v2364 = vrot.slane %v2330, 7
    %v2365 = vsel %vm370, %v2364, %v2329
    %v2366 = vrot.slane %v2331, 6
    %vm2367 = vcmask 1042434
    %v2368 = vsel %vm2367, %v2366, %v2365
    %v2369 = vrot.slane %v2332, 5
    %vm2370 = vcmask 1043459
    %v2371 = vsel %vm2370, %v2369, %v2368
    %v2372 = vrot.slane %v2333, 4
    %vm2373 = vcmask 1044484
    %v2374 = vsel %vm2373, %v2372, %v2371
    %v2375 = vrot.slane %v2334, 3
    %vm2376 = vcmask 1045509
    %v2377 = vsel %vm2376, %v2375, %v2374
    %v2378 = vrot.slane %v2335, 2
    %vm2379 = vcmask 1046534
    %v2380 = vsel %vm2379, %v2378, %v2377
    %v2381 = vrot.slane %v2336, 1
    %vm2382 = vcmask 1047559
    %v2383 = vsel %vm2382, %v2381, %v2380
    %v2384 = vsel %vm72, %v2383, 0
    %2386 = vmatprep.subr.mxu0 0.0
    %2387 = vmatpush1.msra.mxu0 %v2347
    %2388 = vmatprep.subr.mxu0 0.0
    %2389 = vmatpush1.msra.mxu0 %v2348
    %2390 = vmatprep.subr.mxu0 0.0
    %2391 = vmatpush1.msra.mxu0 %v2349
    %2392 = vmatprep.subr.mxu0 0.0
    %2393 = vmatpush1.msra.mxu0 %v2350
    %2394 = vmatprep.subr.mxu0 0.0
    %2395 = vmatpush1.msra.mxu0 %v2351
    %2396 = vmatprep.subr.mxu0 0.0
    %2397 = vmatpush1.msra.mxu0 %v2352
    %2398 = vmatprep.subr.mxu0 0.0
    %2399 = vmatpush1.msra.mxu0 %v2353
    %2400 = vmatprep.subr.mxu0 0.0
    %2401 = vmatpush1.msra.mxu0 %v2354
    %2402 = vmatprep.subr.mxu0 0.0
    %2403 = vmatpush1.msra.mxu0 0.0
    %2404 = vmatprep.subr.mxu0 0.0
    %2405 = vmatpush1.msra.mxu0 0.0
    %2406 = vmatprep.subr.mxu0 0.0
    %2407 = vmatpush1.msra.mxu0 0.0
    %2408 = vmatprep.subr.mxu0 0.0
    %2409 = vmatpush1.msra.mxu0 0.0
    %2410 = vmatprep.subr.mxu0 0.0
    %2411 = vmatpush1.msra.mxu0 0.0
    %2412 = vmatprep.subr.mxu0 0.0
    %2413 = vmatpush1.msra.mxu0 0.0
    %2414 = vmatprep.subr.mxu0 0.0
    %2415 = vmatpush1.msra.mxu0 0.0
    %2416 = vmatprep.subr.mxu0 0.0
    %2417 = vmatpush1.msra.mxu0 0.0
    %2418 = vmatprep.subr.mxu0 0.0
    %2419 = vmatpush1.msra.mxu0 0.0
    %2420 = vmatprep.subr.mxu0 0.0
    %2421 = vmatpush1.msra.mxu0 0.0
    %2422 = vmatprep.subr.mxu0 0.0
    %2423 = vmatpush1.msra.mxu0 0.0
    %2424 = vmatprep.subr.mxu0 0.0
    %2425 = vmatpush1.msra.mxu0 0.0
    %2426 = vmatprep.subr.mxu0 0.0
    %2427 = vmatpush1.msra.mxu0 0.0
    %2428 = vmatprep.subr.mxu0 0.0
    %2429 = vmatpush1.msra.mxu0 0.0
    %2430 = vmatprep.subr.mxu0 0.0
    %2431 = vmatpush1.msra.mxu0 0.0
    %2432 = vmatprep.subr.mxu0 0.0
    %2433 = vmatpush1.msra.mxu0 0.0
    %2434 = vmatprep.subr.mxu0 0.0
    %2435 = vmatpush1.msra.mxu0 0.0
    %2436 = vmatprep.subr.mxu0 0.0
    %2437 = vmatpush1.msra.mxu0 0.0
    %2438 = vmatprep.subr.mxu0 0.0
    %2439 = vmatpush1.msra.mxu0 0.0
    %2440 = vmatprep.subr.mxu0 0.0
    %2441 = vmatpush1.msra.mxu0 0.0
    %2442 = vmatprep.subr.mxu0 0.0
    %2443 = vmatpush1.msra.mxu0 0.0
    %2444 = vmatprep.subr.mxu0 0.0
    %2445 = vmatpush1.msra.mxu0 0.0
    %2446 = vmatprep.subr.mxu0 0.0
    %2447 = vmatpush1.msra.mxu0 0.0
    %2448 = vmatprep.subr.mxu0 0.0
    %2449 = vmatpush1.msra.mxu0 0.0
    %2450 = vmatprep.mubr.f32.mxu0 0.0
    %2451 = vmatmul.mubr.f32.gmra.mrb[0].mxu0 %v2384
    %v2452 = vpop.f32.mrb[0].mxu0
    %v2453 = vadd.f32 0.0, %v2452
    %v2454 = vpop.f32.mrb[0].mxu0
    %2455 = vdwg.mxu0
    %v2457 = vlaneseq
    %v2458 = vshrl.u32 %v2457, 7
    %v2459 = vsub.s32 0, %v2458
    %v2460 = vrot.slane %v2355, %v2459
    %v2463 = vsel %vm2341, %v2337, 0
    %2465 = vmatprep.subr.mxu0 0.0
    %2466 = vmatpush1.msra.mxu0 %v2453
    %2467 = vmatprep.subr.mxu0 0.0
    %2468 = vmatpush1.msra.mxu0 0.0
    %2469 = vmatprep.subr.mxu0 0.0
    %2470 = vmatpush1.msra.mxu0 0.0
    %2471 = vmatprep.subr.mxu0 0.0
    %2472 = vmatpush1.msra.mxu0 0.0
    %2473 = vmatprep.subr.mxu0 0.0
    %2474 = vmatpush1.msra.mxu0 0.0
    %2475 = vmatprep.subr.mxu0 0.0
    %2476 = vmatpush1.msra.mxu0 0.0
    %2477 = vmatprep.subr.mxu0 0.0
    %2478 = vmatpush1.msra.mxu0 0.0
    %2479 = vmatprep.subr.mxu0 0.0
    %2480 = vmatpush1.msra.mxu0 0.0
    %2481 = vmatprep.subr.mxu0 0.0
    %2482 = vmatpush1.msra.mxu0 0.0
    %2483 = vmatprep.subr.mxu0 0.0
    %2484 = vmatpush1.msra.mxu0 0.0
    %2485 = vmatprep.subr.mxu0 0.0
    %2486 = vmatpush1.msra.mxu0 0.0
    %2487 = vmatprep.subr.mxu0 0.0
    %2488 = vmatpush1.msra.mxu0 0.0
    %2489 = vmatprep.subr.mxu0 0.0
    %2490 = vmatpush1.msra.mxu0 0.0
    %2491 = vmatprep.subr.mxu0 0.0
    %2492 = vmatpush1.msra.mxu0 0.0
    %2493 = vmatprep.subr.mxu0 0.0
    %2494 = vmatpush1.msra.mxu0 0.0
    %2495 = vmatprep.subr.mxu0 0.0
    %2496 = vmatpush1.msra.mxu0 0.0
    %2497 = vmatprep.subr.mxu0 0.0
    %2498 = vmatpush1.msra.mxu0 0.0
    %2499 = vmatprep.subr.mxu0 0.0
    %2500 = vmatpush1.msra.mxu0 0.0
    %2501 = vmatprep.subr.mxu0 0.0
    %2502 = vmatpush1.msra.mxu0 0.0
    %2503 = vmatprep.subr.mxu0 0.0
    %2504 = vmatpush1.msra.mxu0 0.0
    %2505 = vmatprep.subr.mxu0 0.0
    %2506 = vmatpush1.msra.mxu0 0.0
    %2507 = vmatprep.subr.mxu0 0.0
    %2508 = vmatpush1.msra.mxu0 0.0
    %2509 = vmatprep.subr.mxu0 0.0
    %2510 = vmatpush1.msra.mxu0 0.0
    %2511 = vmatprep.subr.mxu0 0.0
    %2512 = vmatpush1.msra.mxu0 0.0
    %2513 = vmatprep.subr.mxu0 0.0
    %2514 = vmatpush1.msra.mxu0 0.0
    %2515 = vmatprep.subr.mxu0 0.0
    %2516 = vmatpush1.msra.mxu0 0.0
    %2517 = vmatprep.subr.mxu0 0.0
    %2518 = vmatpush1.msra.mxu0 0.0
    %2519 = vmatprep.subr.mxu0 0.0
    %2520 = vmatpush1.msra.mxu0 0.0
    %2521 = vmatprep.subr.mxu0 0.0
    %2522 = vmatpush1.msra.mxu0 0.0
    %2523 = vmatprep.subr.mxu0 0.0
    %2524 = vmatpush1.msra.mxu0 0.0
    %2525 = vmatprep.subr.mxu0 0.0
    %2526 = vmatpush1.msra.mxu0 0.0
    %2527 = vmatprep.subr.mxu0 0.0
    %2528 = vmatpush1.msra.mxu0 0.0
    %2529 = vmatprep.mubr.f32.mxu0 0.0
    %2530 = vmatmul.mubr.f32.gmra.mrb[0].mxu0 %v2463
    %v2531 = vpop.f32.mrb[0].mxu0
    %v2532 = vadd.f32 %v2460, %v2531
    %v2533 = vpop.f32.mrb[0].mxu0
    %2534 = vdwg.mxu0
    %v2535 = vmul.f32 %v2532, %v2346
    %v2536 = vmax.f32 %v2535, 0.0
    %v2537 = vld [vmem:[%s9] sm:$0xff]
    %v2538 = vld [vmem:[%s9 + $0x8] sm:$0xff]
    %v2539 = vld [vmem:[%s9 + $0x10] sm:$0xff]
    %v2540 = vld [vmem:[%s9 + $0x18] sm:$0xff]
    %v2541 = vld [vmem:[%s10] sm:$0x1]
    %v2543 = vsel %vm435, %v2536, 0
    %2545 = vmatprep.subr.mxu0 0.0
    %2546 = vmatpush1.msra.mxu0 %v2537
    %2547 = vmatprep.subr.mxu0 0.0
    %2548 = vmatpush1.msra.mxu0 %v2538
    %2549 = vmatprep.subr.mxu0 0.0
    %2550 = vmatpush1.msra.mxu0 %v2539
    %2551 = vmatprep.subr.mxu0 0.0
    %2552 = vmatpush1.msra.mxu0 %v2540
    %2553 = vmatprep.subr.mxu0 0.0
    %2554 = vmatpush1.msra.mxu0 0.0
    %2555 = vmatprep.subr.mxu0 0.0
    %2556 = vmatpush1.msra.mxu0 0.0
    %2557 = vmatprep.subr.mxu0 0.0
    %2558 = vmatpush1.msra.mxu0 0.0
    %2559 = vmatprep.subr.mxu0 0.0
    %2560 = vmatpush1.msra.mxu0 0.0
    %2561 = vmatprep.subr.mxu0 0.0
    %2562 = vmatpush1.msra.mxu0 0.0
    %2563 = vmatprep.subr.mxu0 0.0
    %2564 = vmatpush1.msra.mxu0 0.0
    %2565 = vmatprep.subr.mxu0 0.0
    %2566 = vmatpush1.msra.mxu0 0.0
    %2567 = vmatprep.subr.mxu0 0.0
    %2568 = vmatpush1.msra.mxu0 0.0
    %2569 = vmatprep.subr.mxu0 0.0
    %2570 = vmatpush1.msra.mxu0 0.0
    %2571 = vmatprep.subr.mxu0 0.0
    %2572 = vmatpush1.msra.mxu0 0.0
    %2573 = vmatprep.subr.mxu0 0.0
    %2574 = vmatpush1.msra.mxu0 0.0
    %2575 = vmatprep.subr.mxu0 0.0
    %2576 = vmatpush1.msra.mxu0 0.0
    %2577 = vmatprep.subr.mxu0 0.0
    %2578 = vmatpush1.msra.mxu0 0.0
    %2579 = vmatprep.subr.mxu0 0.0
    %2580 = vmatpush1.msra.mxu0 0.0
    %2581 = vmatprep.subr.mxu0 0.0
    %2582 = vmatpush1.msra.mxu0 0.0
    %2583 = vmatprep.subr.mxu0 0.0
    %2584 = vmatpush1.msra.mxu0 0.0
    %2585 = vmatprep.subr.mxu0 0.0
    %2586 = vmatpush1.msra.mxu0 0.0
    %2587 = vmatprep.subr.mxu0 0.0
    %2588 = vmatpush1.msra.mxu0 0.0
    %2589 = vmatprep.subr.mxu0 0.0
    %2590 = vmatpush1.msra.mxu0 0.0
    %2591 = vmatprep.subr.mxu0 0.0
    %2592 = vmatpush1.msra.mxu0 0.0
    %2593 = vmatprep.subr.mxu0 0.0
    %2594 = vmatpush1.msra.mxu0 0.0
    %2595 = vmatprep.subr.mxu0 0.0
    %2596 = vmatpush1.msra.mxu0 0.0
    %2597 = vmatprep.subr.mxu0 0.0
    %2598 = vmatpush1.msra.mxu0 0.0
    %2599 = vmatprep.subr.mxu0 0.0
    %2600 = vmatpush1.msra.mxu0 0.0
    %2601 = vmatprep.subr.mxu0 0.0
    %2602 = vmatpush1.msra.mxu0 0.0
    %2603 = vmatprep.subr.mxu0 0.0
    %2604 = vmatpush1.msra.mxu0 0.0
    %2605 = vmatprep.subr.mxu0 0.0
    %2606 = vmatpush1.msra.mxu0 0.0
    %2607 = vmatprep.subr.mxu0 0.0
    %2608 = vmatpush1.msra.mxu0 0.0
    %2609 = vmatprep.mubr.f32.mxu0 0.0
    %2610 = vmatmul.mubr.f32.gmra.mrb[0].mxu0 %v2543
    %v2611 = vpop.f32.mrb[0].mxu0
    %v2612 = vadd.f32 0.0, %v2611
    %v2613 = vpop.f32.mrb[0].mxu0
    %2614 = vdwg.mxu0
    %v2616 = vlaneseq
    %v2617 = vshrl.u32 %v2616, 7
    %v2618 = vsub.s32 0, %v2617
    %v2619 = vrot.slane %v2541, %v2618
    %2621 = vmatprep.subr.mxu0 0.0
    %2622 = vmatpush1.msra.mxu0 %v2612
    %2623 = vmatprep.subr.mxu0 0.0
    %2624 = vmatpush1.msra.mxu0 0.0
    %2625 = vmatprep.subr.mxu0 0.0
    %2626 = vmatpush1.msra.mxu0 0.0
    %2627 = vmatprep.subr.mxu0 0.0
    %2628 = vmatpush1.msra.mxu0 0.0
    %2629 = vmatprep.subr.mxu0 0.0
    %2630 = vmatpush1.msra.mxu0 0.0
    %2631 = vmatprep.subr.mxu0 0.0
    %2632 = vmatpush1.msra.mxu0 0.0
    %2633 = vmatprep.subr.mxu0 0.0
    %2634 = vmatpush1.msra.mxu0 0.0
    %2635 = vmatprep.subr.mxu0 0.0
    %2636 = vmatpush1.msra.mxu0 0.0
    %2637 = vmatprep.subr.mxu0 0.0
    %2638 = vmatpush1.msra.mxu0 0.0
    %2639 = vmatprep.subr.mxu0 0.0
    %2640 = vmatpush1.msra.mxu0 0.0
    %2641 = vmatprep.subr.mxu0 0.0
    %2642 = vmatpush1.msra.mxu0 0.0
    %2643 = vmatprep.subr.mxu0 0.0
    %2644 = vmatpush1.msra.mxu0 0.0
    %2645 = vmatprep.subr.mxu0 0.0
    %2646 = vmatpush1.msra.mxu0 0.0
    %2647 = vmatprep.subr.mxu0 0.0
    %2648 = vmatpush1.msra.mxu0 0.0
    %2649 = vmatprep.subr.mxu0 0.0
    %2650 = vmatpush1.msra.mxu0 0.0
    %2651 = vmatprep.subr.mxu0 0.0
    %2652 = vmatpush1.msra.mxu0 0.0
    %2653 = vmatprep.subr.mxu0 0.0
    %2654 = vmatpush1.msra.mxu0 0.0
    %2655 = vmatprep.subr.mxu0 0.0
    %2656 = vmatpush1.msra.mxu0 0.0
    %2657 = vmatprep.subr.mxu0 0.0
    %2658 = vmatpush1.msra.mxu0 0.0
    %2659 = vmatprep.subr.mxu0 0.0
    %2660 = vmatpush1.msra.mxu0 0.0
    %2661 = vmatprep.subr.mxu0 0.0
    %2662 = vmatpush1.msra.mxu0 0.0
    %2663 = vmatprep.subr.mxu0 0.0
    %2664 = vmatpush1.msra.mxu0 0.0
    %2665 = vmatprep.subr.mxu0 0.0
    %2666 = vmatpush1.msra.mxu0 0.0
    %2667 = vmatprep.subr.mxu0 0.0
    %2668 = vmatpush1.msra.mxu0 0.0
    %2669 = vmatprep.subr.mxu0 0.0
    %2670 = vmatpush1.msra.mxu0 0.0
    %2671 = vmatprep.subr.mxu0 0.0
    %2672 = vmatpush1.msra.mxu0 0.0
    %2673 = vmatprep.subr.mxu0 0.0
    %2674 = vmatpush1.msra.mxu0 0.0
    %2675 = vmatprep.subr.mxu0 0.0
    %2676 = vmatpush1.msra.mxu0 0.0
    %2677 = vmatprep.subr.mxu0 0.0
    %2678 = vmatpush1.msra.mxu0 0.0
    %2679 = vmatprep.subr.mxu0 0.0
    %2680 = vmatpush1.msra.mxu0 0.0
    %2681 = vmatprep.subr.mxu0 0.0
    %2682 = vmatpush1.msra.mxu0 0.0
    %2683 = vmatprep.subr.mxu0 0.0
    %2684 = vmatpush1.msra.mxu0 0.0
    %2685 = vmatprep.mubr.f32.mxu0 0.0
    %2686 = vmatmul.mubr.f32.gmra.mrb[0].mxu0 %v2463
    %v2687 = vpop.f32.mrb[0].mxu0
    %v2688 = vadd.f32 %v2619, %v2687
    %v2689 = vpop.f32.mrb[0].mxu0
    %2690 = vdwg.mxu0
    %v2691 = vmul.f32 %v2688, %v2346
    %v2692 = vmax.f32 %v2691, 0.0
    %2693 = vst.msk [vmem:[#allocation4] sm:$0xff] %vm435, %v2692
    %vm2694 = vcmask 7168
    %v2695 = vsel %vm2694, %v2339, 0.0
    %v2696 = vrot.slane %v2695, 4
    %v2697 = vadd.f32 %v2695, %v2696
    %v2698 = vrot.slane %v2697, 2
    %v2699 = vadd.f32 %v2697, %v2698
    %v2700 = vrot.slane %v2699, 1
    %v2701 = vadd.f32 %v2699, %v2700
    %v2702 = vmax.f32 %v2701, 1.0
    %2704 = vset.pattern.permute.xlu0 0
    %2705 = vperm.xlu0 %2704, %v2339
    %v2706 = vpop.permute.xlu0 %2705
    %v2708 = vmul.f32 %v2692, %v2706
    %v2709 = vsel %vm435, %v2708, 0.0
    %v2710 = vrot.slane %v2709, 4
    %v2711 = vadd.f32 %v2709, %v2710
    %v2712 = vrot.slane %v2711, 2
    %v2713 = vadd.f32 %v2711, %v2712
    %v2714 = vrot.slane %v2713, 1
    %v2715 = vadd.f32 %v2713, %v2714
    %2717 = vset.pattern.permute.xlu0 0
    %2718 = vperm.xlu0 %2717, %v2702
    %v2719 = vpop.permute.xlu0 %2718
    %v2721 = vrcp.pop %v2719
    %v2722 = vmul.f32 %v2715, %v2721
    %vm2723 = vcmask 253952
    %2724 = vst.msk [vmem:[#allocation6] sm:$0x1] %vm2723, %v2722
    %v2725 = vsel %vm2341, %v2338, 0.0
    %2726 = vadd.xlane.f32.xlu0 %v2725
    %v2727 = vpop.xlane.xlu0 %2726
    %v2728 = vadd.f32 %v2727, 1.0
    %v2729 = vrcp.pop %v2728
    %v2730 = vld [vmem:[%s7] sm:$0xff]
    %v2731 = vld [vmem:[%s7 + $0x8] sm:$0xff]
    %v2732 = vld [vmem:[%s7 + $0x10] sm:$0xff]
    %v2733 = vld [vmem:[%s7 + $0x18] sm:$0xff]
    %v2734 = vld [vmem:[%s7 + $0x20] sm:$0xff]
    %v2735 = vld [vmem:[%s7 + $0x28] sm:$0xff]
    %v2736 = vld [vmem:[%s7 + $0x30] sm:$0xff]
    %v2737 = vld [vmem:[%s7 + $0x38] sm:$0xff]
    %v2738 = vld [vmem:[%s8] sm:$0x1]
    %v2739 = vrot.slane %v2329, 1
    %v2740 = vsel %vm370, %v2330, %v2739
    %v2741 = vrot.slane %v2331, 7
    %v2742 = vsel %vm2367, %v2741, %v2740
    %v2743 = vrot.slane %v2332, 6
    %v2744 = vsel %vm2370, %v2743, %v2742
    %v2745 = vrot.slane %v2333, 5
    %v2746 = vsel %vm2373, %v2745, %v2744
    %v2747 = vrot.slane %v2334, 4
    %v2748 = vsel %vm2376, %v2747, %v2746
    %v2749 = vrot.slane %v2335, 3
    %v2750 = vsel %vm2379, %v2749, %v2748
    %v2751 = vrot.slane %v2336, 2
    %v2752 = vsel %vm2382, %v2751, %v2750
    %v2753 = vsel %vm72, %v2752, 0
    %2755 = vmatprep.subr.mxu0 0.0
    %2756 = vmatpush1.msra.mxu0 %v2730
    %2757 = vmatprep.subr.mxu0 0.0
    %2758 = vmatpush1.msra.mxu0 %v2731
    %2759 = vmatprep.subr.mxu0 0.0
    %2760 = vmatpush1.msra.mxu0 %v2732
    %2761 = vmatprep.subr.mxu0 0.0
    %2762 = vmatpush1.msra.mxu0 %v2733
    %2763 = vmatprep.subr.mxu0 0.0
    %2764 = vmatpush1.msra.mxu0 %v2734
    %2765 = vmatprep.subr.mxu0 0.0
    %2766 = vmatpush1.msra.mxu0 %v2735
    %2767 = vmatprep.subr.mxu0 0.0
    %2768 = vmatpush1.msra.mxu0 %v2736
    %2769 = vmatprep.subr.mxu0 0.0
    %2770 = vmatpush1.msra.mxu0 %v2737
    %2771 = vmatprep.subr.mxu0 0.0
    %2772 = vmatpush1.msra.mxu0 0.0
    %2773 = vmatprep.subr.mxu0 0.0
    %2774 = vmatpush1.msra.mxu0 0.0
    %2775 = vmatprep.subr.mxu0 0.0
    %2776 = vmatpush1.msra.mxu0 0.0
    %2777 = vmatprep.subr.mxu0 0.0
    %2778 = vmatpush1.msra.mxu0 0.0
    %2779 = vmatprep.subr.mxu0 0.0
    %2780 = vmatpush1.msra.mxu0 0.0
    %2781 = vmatprep.subr.mxu0 0.0
    %2782 = vmatpush1.msra.mxu0 0.0
    %2783 = vmatprep.subr.mxu0 0.0
    %2784 = vmatpush1.msra.mxu0 0.0
    %2785 = vmatprep.subr.mxu0 0.0
    %2786 = vmatpush1.msra.mxu0 0.0
    %2787 = vmatprep.subr.mxu0 0.0
    %2788 = vmatpush1.msra.mxu0 0.0
    %2789 = vmatprep.subr.mxu0 0.0
    %2790 = vmatpush1.msra.mxu0 0.0
    %2791 = vmatprep.subr.mxu0 0.0
    %2792 = vmatpush1.msra.mxu0 0.0
    %2793 = vmatprep.subr.mxu0 0.0
    %2794 = vmatpush1.msra.mxu0 0.0
    %2795 = vmatprep.subr.mxu0 0.0
    %2796 = vmatpush1.msra.mxu0 0.0
    %2797 = vmatprep.subr.mxu0 0.0
    %2798 = vmatpush1.msra.mxu0 0.0
    %2799 = vmatprep.subr.mxu0 0.0
    %2800 = vmatpush1.msra.mxu0 0.0
    %2801 = vmatprep.subr.mxu0 0.0
    %2802 = vmatpush1.msra.mxu0 0.0
    %2803 = vmatprep.subr.mxu0 0.0
    %2804 = vmatpush1.msra.mxu0 0.0
    %2805 = vmatprep.subr.mxu0 0.0
    %2806 = vmatpush1.msra.mxu0 0.0
    %2807 = vmatprep.subr.mxu0 0.0
    %2808 = vmatpush1.msra.mxu0 0.0
    %2809 = vmatprep.subr.mxu0 0.0
    %2810 = vmatpush1.msra.mxu0 0.0
    %2811 = vmatprep.subr.mxu0 0.0
    %2812 = vmatpush1.msra.mxu0 0.0
    %2813 = vmatprep.subr.mxu0 0.0
    %2814 = vmatpush1.msra.mxu0 0.0
    %2815 = vmatprep.subr.mxu0 0.0
    %2816 = vmatpush1.msra.mxu0 0.0
    %2817 = vmatprep.subr.mxu0 0.0
    %2818 = vmatpush1.msra.mxu0 0.0
    %2819 = vmatprep.mubr.f32.mxu0 0.0
    %2820 = vmatmul.mubr.f32.gmra.mrb[0].mxu0 %v2753
    %v2821 = vpop.f32.mrb[0].mxu0
    %v2822 = vadd.f32 0.0, %v2821
    %v2823 = vpop.f32.mrb[0].mxu0
    %2824 = vdwg.mxu0
    %v2826 = vlaneseq
    %v2827 = vshrl.u32 %v2826, 7
    %v2828 = vsub.s32 0, %v2827
    %v2829 = vrot.slane %v2738, %v2828
    %v2832 = vsel %vm2341, %v2338, 0
    %2834 = vmatprep.subr.mxu0 0.0
    %2835 = vmatpush1.msra.mxu0 %v2822
    %2836 = vmatprep.subr.mxu0 0.0
    %2837 = vmatpush1.msra.mxu0 0.0
    %2838 = vmatprep.subr.mxu0 0.0
    %2839 = vmatpush1.msra.mxu0 0.0
    %2840 = vmatprep.subr.mxu0 0.0
    %2841 = vmatpush1.msra.mxu0 0.0
    %2842 = vmatprep.subr.mxu0 0.0
    %2843 = vmatpush1.msra.mxu0 0.0
    %2844 = vmatprep.subr.mxu0 0.0
    %2845 = vmatpush1.msra.mxu0 0.0
    %2846 = vmatprep.subr.mxu0 0.0
    %2847 = vmatpush1.msra.mxu0 0.0
    %2848 = vmatprep.subr.mxu0 0.0
    %2849 = vmatpush1.msra.mxu0 0.0
    %2850 = vmatprep.subr.mxu0 0.0
    %2851 = vmatpush1.msra.mxu0 0.0
    %2852 = vmatprep.subr.mxu0 0.0
    %2853 = vmatpush1.msra.mxu0 0.0
    %2854 = vmatprep.subr.mxu0 0.0
    %2855 = vmatpush1.msra.mxu0 0.0
    %2856 = vmatprep.subr.mxu0 0.0
    %2857 = vmatpush1.msra.mxu0 0.0
    %2858 = vmatprep.subr.mxu0 0.0
    %2859 = vmatpush1.msra.mxu0 0.0
    %2860 = vmatprep.subr.mxu0 0.0
    %2861 = vmatpush1.msra.mxu0 0.0
    %2862 = vmatprep.subr.mxu0 0.0
    %2863 = vmatpush1.msra.mxu0 0.0
    %2864 = vmatprep.subr.mxu0 0.0
    %2865 = vmatpush1.msra.mxu0 0.0
    %2866 = vmatprep.subr.mxu0 0.0
    %2867 = vmatpush1.msra.mxu0 0.0
    %2868 = vmatprep.subr.mxu0 0.0
    %2869 = vmatpush1.msra.mxu0 0.0
    %2870 = vmatprep.subr.mxu0 0.0
    %2871 = vmatpush1.msra.mxu0 0.0
    %2872 = vmatprep.subr.mxu0 0.0
    %2873 = vmatpush1.msra.mxu0 0.0
    %2874 = vmatprep.subr.mxu0 0.0
    %2875 = vmatpush1.msra.mxu0 0.0
    %2876 = vmatprep.subr.mxu0 0.0
    %2877 = vmatpush1.msra.mxu0 0.0
    %2878 = vmatprep.subr.mxu0 0.0
    %2879 = vmatpush1.msra.mxu0 0.0
    %2880 = vmatprep.subr.mxu0 0.0
    %2881 = vmatpush1.msra.mxu0 0.0
    %2882 = vmatprep.subr.mxu0 0.0
    %2883 = vmatpush1.msra.mxu0 0.0
    %2884 = vmatprep.subr.mxu0 0.0
    %2885 = vmatpush1.msra.mxu0 0.0
    %2886 = vmatprep.subr.mxu0 0.0
    %2887 = vmatpush1.msra.mxu0 0.0
    %2888 = vmatprep.subr.mxu0 0.0
    %2889 = vmatpush1.msra.mxu0 0.0
    %2890 = vmatprep.subr.mxu0 0.0
    %2891 = vmatpush1.msra.mxu0 0.0
    %2892 = vmatprep.subr.mxu0 0.0
    %2893 = vmatpush1.msra.mxu0 0.0
    %2894 = vmatprep.subr.mxu0 0.0
    %2895 = vmatpush1.msra.mxu0 0.0
    %2896 = vmatprep.subr.mxu0 0.0
    %2897 = vmatpush1.msra.mxu0 0.0
    %2898 = vmatprep.mubr.f32.mxu0 0.0
    %2899 = vmatmul.mubr.f32.gmra.mrb[0].mxu0 %v2832
    %v2900 = vpop.f32.mrb[0].mxu0
    %v2901 = vadd.f32 %v2829, %v2900
    %v2902 = vpop.f32.mrb[0].mxu0
    %2903 = vdwg.mxu0
    %v2904 = vmul.f32 %v2901, %v2729
    %v2905 = vmax.f32 %v2904, 0.0
    %v2906 = vld [vmem:[%s9] sm:$0xff]
    %v2907 = vld [vmem:[%s9 + $0x8] sm:$0xff]
    %v2908 = vld [vmem:[%s9 + $0x10] sm:$0xff]
    %v2909 = vld [vmem:[%s9 + $0x18] sm:$0xff]
    %v2910 = vld [vmem:[%s10] sm:$0x1]
    %v2912 = vsel %vm435, %v2905, 0
    %2914 = vmatprep.subr.mxu0 0.0
    %2915 = vmatpush1.msra.mxu0 %v2906
    %2916 = vmatprep.subr.mxu0 0.0
    %2917 = vmatpush1.msra.mxu0 %v2907
    %2918 = vmatprep.subr.mxu0 0.0
    %2919 = vmatpush1.msra.mxu0 %v2908
    %2920 = vmatprep.subr.mxu0 0.0
    %2921 = vmatpush1.msra.mxu0 %v2909
    %2922 = vmatprep.subr.mxu0 0.0
    %2923 = vmatpush1.msra.mxu0 0.0
    %2924 = vmatprep.subr.mxu0 0.0
    %2925 = vmatpush1.msra.mxu0 0.0
    %2926 = vmatprep.subr.mxu0 0.0
    %2927 = vmatpush1.msra.mxu0 0.0
    %2928 = vmatprep.subr.mxu0 0.0
    %2929 = vmatpush1.msra.mxu0 0.0
    %2930 = vmatprep.subr.mxu0 0.0
    %2931 = vmatpush1.msra.mxu0 0.0
    %2932 = vmatprep.subr.mxu0 0.0
    %2933 = vmatpush1.msra.mxu0 0.0
    %2934 = vmatprep.subr.mxu0 0.0
    %2935 = vmatpush1.msra.mxu0 0.0
    %2936 = vmatprep.subr.mxu0 0.0
    %2937 = vmatpush1.msra.mxu0 0.0
    %2938 = vmatprep.subr.mxu0 0.0
    %2939 = vmatpush1.msra.mxu0 0.0
    %2940 = vmatprep.subr.mxu0 0.0
    %2941 = vmatpush1.msra.mxu0 0.0
    %2942 = vmatprep.subr.mxu0 0.0
    %2943 = vmatpush1.msra.mxu0 0.0
    %2944 = vmatprep.subr.mxu0 0.0
    %2945 = vmatpush1.msra.mxu0 0.0
    %2946 = vmatprep.subr.mxu0 0.0
    %2947 = vmatpush1.msra.mxu0 0.0
    %2948 = vmatprep.subr.mxu0 0.0
    %2949 = vmatpush1.msra.mxu0 0.0
    %2950 = vmatprep.subr.mxu0 0.0
    %2951 = vmatpush1.msra.mxu0 0.0
    %2952 = vmatprep.subr.mxu0 0.0
    %2953 = vmatpush1.msra.mxu0 0.0
    %2954 = vmatprep.subr.mxu0 0.0
    %2955 = vmatpush1.msra.mxu0 0.0
    %2956 = vmatprep.subr.mxu0 0.0
    %2957 = vmatpush1.msra.mxu0 0.0
    %2958 = vmatprep.subr.mxu0 0.0
    %2959 = vmatpush1.msra.mxu0 0.0
    %2960 = vmatprep.subr.mxu0 0.0
    %2961 = vmatpush1.msra.mxu0 0.0
    %2962 = vmatprep.subr.mxu0 0.0
    %2963 = vmatpush1.msra.mxu0 0.0
    %2964 = vmatprep.subr.mxu0 0.0
    %2965 = vmatpush1.msra.mxu0 0.0
    %2966 = vmatprep.subr.mxu0 0.0
    %2967 = vmatpush1.msra.mxu0 0.0
    %2968 = vmatprep.subr.mxu0 0.0
    %2969 = vmatpush1.msra.mxu0 0.0
    %2970 = vmatprep.subr.mxu0 0.0
    %2971 = vmatpush1.msra.mxu0 0.0
    %2972 = vmatprep.subr.mxu0 0.0
    %2973 = vmatpush1.msra.mxu0 0.0
    %2974 = vmatprep.subr.mxu0 0.0
    %2975 = vmatpush1.msra.mxu0 0.0
    %2976 = vmatprep.subr.mxu0 0.0
    %2977 = vmatpush1.msra.mxu0 0.0
    %2978 = vmatprep.mubr.f32.mxu0 0.0
    %2979 = vmatmul.mubr.f32.gmra.mrb[0].mxu0 %v2912
    %v2980 = vpop.f32.mrb[0].mxu0
    %v2981 = vadd.f32 0.0, %v2980
    %v2982 = vpop.f32.mrb[0].mxu0
    %2983 = vdwg.mxu0
    %v2985 = vlaneseq
    %v2986 = vshrl.u32 %v2985, 7
    %v2987 = vsub.s32 0, %v2986
    %v2988 = vrot.slane %v2910, %v2987
    %2990 = vmatprep.subr.mxu0 0.0
    %2991 = vmatpush1.msra.mxu0 %v2981
    %2992 = vmatprep.subr.mxu0 0.0
    %2993 = vmatpush1.msra.mxu0 0.0
    %2994 = vmatprep.subr.mxu0 0.0
    %2995 = vmatpush1.msra.mxu0 0.0
    %2996 = vmatprep.subr.mxu0 0.0
    %2997 = vmatpush1.msra.mxu0 0.0
    %2998 = vmatprep.subr.mxu0 0.0
    %2999 = vmatpush1.msra.mxu0 0.0
    %3000 = vmatprep.subr.mxu0 0.0
    %3001 = vmatpush1.msra.mxu0 0.0
    %3002 = vmatprep.subr.mxu0 0.0
    %3003 = vmatpush1.msra.mxu0 0.0
    %3004 = vmatprep.subr.mxu0 0.0
    %3005 = vmatpush1.msra.mxu0 0.0
    %3006 = vmatprep.subr.mxu0 0.0
    %3007 = vmatpush1.msra.mxu0 0.0
    %3008 = vmatprep.subr.mxu0 0.0
    %3009 = vmatpush1.msra.mxu0 0.0
    %3010 = vmatprep.subr.mxu0 0.0
    %3011 = vmatpush1.msra.mxu0 0.0
    %3012 = vmatprep.subr.mxu0 0.0
    %3013 = vmatpush1.msra.mxu0 0.0
    %3014 = vmatprep.subr.mxu0 0.0
    %3015 = vmatpush1.msra.mxu0 0.0
    %3016 = vmatprep.subr.mxu0 0.0
    %3017 = vmatpush1.msra.mxu0 0.0
    %3018 = vmatprep.subr.mxu0 0.0
    %3019 = vmatpush1.msra.mxu0 0.0
    %3020 = vmatprep.subr.mxu0 0.0
    %3021 = vmatpush1.msra.mxu0 0.0
    %3022 = vmatprep.subr.mxu0 0.0
    %3023 = vmatpush1.msra.mxu0 0.0
    %3024 = vmatprep.subr.mxu0 0.0
    %3025 = vmatpush1.msra.mxu0 0.0
    %3026 = vmatprep.subr.mxu0 0.0
    %3027 = vmatpush1.msra.mxu0 0.0
    %3028 = vmatprep.subr.mxu0 0.0
    %3029 = vmatpush1.msra.mxu0 0.0
    %3030 = vmatprep.subr.mxu0 0.0
    %3031 = vmatpush1.msra.mxu0 0.0
    %3032 = vmatprep.subr.mxu0 0.0
    %3033 = vmatpush1.msra.mxu0 0.0
    %3034 = vmatprep.subr.mxu0 0.0
    %3035 = vmatpush1.msra.mxu0 0.0
    %3036 = vmatprep.subr.mxu0 0.0
    %3037 = vmatpush1.msra.mxu0 0.0
    %3038 = vmatprep.subr.mxu0 0.0
    %3039 = vmatpush1.msra.mxu0 0.0
    %3040 = vmatprep.subr.mxu0 0.0
    %3041 = vmatpush1.msra.mxu0 0.0
    %3042 = vmatprep.subr.mxu0 0.0
    %3043 = vmatpush1.msra.mxu0 0.0
    %3044 = vmatprep.subr.mxu0 0.0
    %3045 = vmatpush1.msra.mxu0 0.0
    %3046 = vmatprep.subr.mxu0 0.0
    %3047 = vmatpush1.msra.mxu0 0.0
    %3048 = vmatprep.subr.mxu0 0.0
    %3049 = vmatpush1.msra.mxu0 0.0
    %3050 = vmatprep.subr.mxu0 0.0
    %3051 = vmatpush1.msra.mxu0 0.0
    %3052 = vmatprep.subr.mxu0 0.0
    %3053 = vmatpush1.msra.mxu0 0.0
    %3054 = vmatprep.mubr.f32.mxu0 0.0
    %3055 = vmatmul.mubr.f32.gmra.mrb[0].mxu0 %v2832
    %v3056 = vpop.f32.mrb[0].mxu0
    %v3057 = vadd.f32 %v2988, %v3056
    %v3058 = vpop.f32.mrb[0].mxu0
    %3059 = vdwg.mxu0
    %v3060 = vmul.f32 %v3057, %v2729
    %v3061 = vmax.f32 %v3060, 0.0
    %s3062 = scalar_lea.vmem [#allocation4], 8
    %3063 = vst.msk [vmem:[%s3062] sm:$0xff] %vm435, %v3061
    %v3064 = vsel %vm2694, %v2340, 0.0
    %v3065 = vrot.slane %v3064, 4
    %v3066 = vadd.f32 %v3064, %v3065
    %v3067 = vrot.slane %v3066, 2
    %v3068 = vadd.f32 %v3066, %v3067
    %v3069 = vrot.slane %v3068, 1
    %v3070 = vadd.f32 %v3068, %v3069
    %v3071 = vmax.f32 %v3070, 1.0
    %3073 = vset.pattern.permute.xlu0 0
    %3074 = vperm.xlu0 %3073, %v2340
    %v3075 = vpop.permute.xlu0 %3074
    %v3077 = vmul.f32 %v3061, %v3075
    %v3078 = vsel %vm435, %v3077, 0.0
    %v3079 = vrot.slane %v3078, 4
    %v3080 = vadd.f32 %v3078, %v3079
    %v3081 = vrot.slane %v3080, 2
    %v3082 = vadd.f32 %v3080, %v3081
    %v3083 = vrot.slane %v3082, 1
    %v3084 = vadd.f32 %v3082, %v3083
    %3086 = vset.pattern.permute.xlu0 0
    %3087 = vperm.xlu0 %3086, %v3071
    %v3088 = vpop.permute.xlu0 %3087
    %v3090 = vrcp.pop %v3088
    %v3091 = vmul.f32 %v3084, %v3090
    %s3092 = scalar_lea.vmem [#allocation6], 1
    %3093 = vst.msk [vmem:[%s3092] sm:$0x1] %vm2723, %v3091
    // Predicated region
    $region46: #{gcn_forward.1} parent=1 // pred_check
      _
    $region47: #{gcn_forward.1} parent=1 // pred_check_branch
      %3095 = sbr.rel (0) target = $region49
    $region48: #{gcn_forward.1} parent=1 // pred_region
      %s3097 = ssub.s32 256, 256
      %3098 = vsyncadd [#allocation5], %s3097
      %s3099 = sshll.u32 [#allocation4], 4
      %s3100 = int_to_ptr.vmem [resolvable:$true] %s3099
      %3105 = dma.vmem_to_hbm [thread:$0]  %s3100, 256, %s11, [#allocation5], 128, 128, 8
    $region49: #{gcn_forward.1} parent=1 // pred_fallthru
      _
    // Predicated region
    $region50: #{gcn_forward.1} parent=1 // pred_check
      _
    $region51: #{gcn_forward.1} parent=1 // pred_check_branch
      %3107 = sbr.rel (0) target = $region53
    $region52: #{gcn_forward.1} parent=1 // pred_region
      %s3109 = ssub.s32 32, 32
      %3110 = vsyncadd [#allocation7], %s3109
      %s3111 = sshll.u32 [#allocation6], 4
      %s3112 = int_to_ptr.vmem [resolvable:$true] %s3111
      %3117 = dma.vmem_to_hbm [thread:$0]  %s3112, 32, %s12, [#allocation7], 16, 16, 1
    $region53: #{gcn_forward.1} parent=1 // pred_fallthru
      _
    // Predicated region
    $region54: #{gcn_forward.1} parent=1 // pred_check
      _
    $region55: #{gcn_forward.1} parent=1 // pred_check_branch
      %3119 = sbr.rel (0) target = $region57
    $region56: #{gcn_forward.1} parent=1 // pred_region
      %3120 = dma.done [#allocation5], 256
    $region57: #{gcn_forward.1} parent=1 // pred_fallthru
      _
    // Predicated region
    $region58: #{gcn_forward.1} parent=1 // pred_check
      _
    $region59: #{gcn_forward.1} parent=1 // pred_check_branch
      %3122 = sbr.rel (0) target = $region61
    $region60: #{gcn_forward.1} parent=1 // pred_region
      %3123 = dma.done [#allocation7], 32
    $region61: #{gcn_forward.1} parent=1 // pred_fallthru
      _
    %3124 = vsyncpa [#allocation5], 1
    %3125 = vsyncpa [#allocation7], 1

</llo_original>
